<compile_context>
chip_gen: v7x
topology: tpu7x:2x2x1
jax: 0.10.0
libtpu: 0.0.40
codegen_flags: <defaults>
</compile_context>

<pallas_src>
import functools

import numpy as np
import jax
import jax.numpy as jnp
from jax import lax
from jax.experimental import pallas as pl
from jax.experimental.pallas import tpu as pltpu

EPS = 1e-5


def _fused_kernel(x_ref, g1_ref, b1_ref, w1_ref, g2_ref, b2_ref, w2_ref, mk_ref,
                  o_ref, *, pad, taps):
    # Shapes (channel-major / NCHW-native, P = N*H*W):
    #   x_ref : (C_in,  P)        f32
    #   g1/b1 : (C_in,  1)        f32
    #   w1_ref: (C_mid, C_in)     f32   (1x1 conv weight, cast to bf16 here)
    #   g2/b2 : (C_mid, 1)        f32
    #   w2_ref: (C_out, 9*C_mid)  bf16  (3x3 conv weight, tap-major lanes, k = ky*3+kx)
    #   mk_ref: (9, P)            bf16  (trace-time tap-validity masks)
    #   o_ref : (C_out, P)        f32
    x = x_ref[...]
    P = x.shape[1]
    inv_p = 1.0 / float(P)

    # ---- BatchNorm2d(C_in) (training-mode batch stats, two-pass) + ReLU ----
    m1 = jnp.sum(x, axis=1, keepdims=True) * inv_p
    xc = x - m1
    v1 = jnp.sum(xc * xc, axis=1, keepdims=True) * inv_p
    sc1 = g1_ref[...] * lax.rsqrt(v1 + EPS)
    a1 = jnp.maximum(xc * sc1 + b1_ref[...], 0.0).astype(jnp.bfloat16)     # (C_in, P)

    # ---- Conv2d 1x1 (C_in -> C_mid), no bias: one bf16 MXU matmul (M=C_mid) ----
    w1b = w1_ref[...].astype(jnp.bfloat16)
    h = jnp.dot(w1b, a1, preferred_element_type=jnp.float32)               # (C_mid, P) f32

    # ---- BatchNorm2d(C_mid) (two-pass) + ReLU ----
    m2 = jnp.sum(h, axis=1, keepdims=True) * inv_p
    hc = h - m2
    v2 = jnp.sum(hc * hc, axis=1, keepdims=True) * inv_p
    sc2 = g2_ref[...] * lax.rsqrt(v2 + EPS)
    a2 = jnp.maximum(hc * sc2 + b2_ref[...], 0.0).astype(jnp.bfloat16)     # (C_mid, P)

    # ---- Conv2d 3x3, stride 1, pad 1 (C_mid -> C_out), no bias ----
    # im2col along sublanes: 9 lane-shifted + masked bf16 copies of a2 stacked
    # to (9*C_mid, P), then a single MXU matmul with the tap-major weight.
    zl = jnp.zeros((a2.shape[0], pad), jnp.bfloat16)
    ap = jnp.concatenate([zl, a2, zl], axis=1)                             # (C_mid, P+2*pad)
    mk = mk_ref[...]
    pieces = []
    for t, (shift, needs_mask) in enumerate(taps):
        piece = ap[:, pad + shift: pad + shift + P]                        # static lane slice
        if needs_mask:
            piece = piece * mk[t:t + 1, :]                                 # {0,1} bf16, exact
        pieces.append(piece)
    col = jnp.concatenate(pieces, axis=0)                                  # (9*C_mid, P) bf16

    o_ref[...] = jnp.dot(w2_ref[...], col, preferred_element_type=jnp.float32)


@jax.jit
def fused_bn_relu_conv_bn_relu_conv(x_nchw, gamma1, beta1, conv1_w,
                                    gamma2, beta2, conv2_w):
    N, C_in, H, W = x_nchw.shape
    C_mid = conv1_w.shape[0]
    C_out = conv2_w.shape[0]
    HW = H * W
    P = N * HW

    # x stays channel-major (NCHW-native); for N == 1 this reshape is free.
    if N == 1:
        x_cp = x_nchw.reshape(C_in, P).astype(jnp.float32)
    else:
        # TODO(synk): N > 1 needs a genuine relayout to channel-major; module shape is N == 1.
        x_cp = jnp.transpose(x_nchw, (1, 0, 2, 3)).reshape(C_in, P).astype(jnp.float32)

    # 1x1 conv weight: free reshape, raw f32; cast to bf16 inside the kernel.
    w1 = conv1_w.reshape(C_mid, C_in).astype(jnp.float32)
    # 3x3 conv weight: OIHW -> (C_out, ky, kx, C_mid) -> (C_out, 9*C_mid) bf16.
    # TODO(synk): hoist/cache this small relayout out of the per-call path when reused.
    w2r = jnp.transpose(conv2_w, (0, 2, 3, 1)).reshape(C_out, 9 * C_mid).astype(jnp.bfloat16)

    # Trace-time 3x3 tap geometry: flat shifts + validity masks (pure numpy on
    # static shapes -> baked constant, no in-kernel iota / div / mod).
    p = np.arange(P)
    oy = (p % HW) // W
    ox = p % W
    taps = []
    mask_np = np.empty((9, P), np.float32)
    t = 0
    for dy in (-1, 0, 1):
        for dx in (-1, 0, 1):
            valid = ((oy + dy >= 0) & (oy + dy <= H - 1) &
                     (ox + dx >= 0) & (ox + dx <= W - 1))
            mask_np[t] = valid.astype(np.float32)
            taps.append((dy * W + dx, not bool(valid.all())))
            t += 1
    mask = jnp.asarray(mask_np, dtype=jnp.bfloat16)

    cost = pl.CostEstimate(
        flops=int(2 * P * C_in * C_mid + 2 * P * 9 * C_mid * C_out),
        transcendentals=int(C_in + C_mid),
        bytes_accessed=int(x_cp.size * 4 + w1.size * 4 + w2r.size * 2 + mask.size * 2 +
                           2 * (C_in + C_mid) * 4 + P * C_out * 4),
    )

    out_cp = pl.pallas_call(
        functools.partial(_fused_kernel, pad=W + 1, taps=tuple(taps)),
        out_shape=jax.ShapeDtypeStruct((C_out, P), jnp.float32),
        in_specs=[pl.BlockSpec(memory_space=pltpu.MemorySpace.VMEM)] * 8,
        out_specs=pl.BlockSpec(memory_space=pltpu.MemorySpace.VMEM),
        cost_estimate=cost,
    )(x_cp,
      gamma1.reshape(C_in, 1).astype(jnp.float32),
      beta1.reshape(C_in, 1).astype(jnp.float32),
      w1,
      gamma2.reshape(C_mid, 1).astype(jnp.float32),
      beta2.reshape(C_mid, 1).astype(jnp.float32),
      w2r,
      mask)

    # Output is already channel-major: NCHW is a free reshape for N == 1.
    if N == 1:
        return out_cp.reshape(1, C_out, H, W)
    return jnp.transpose(out_cp.reshape(C_out, N, H, W), (1, 0, 2, 3))


def reference_forward(x, g1, b1, w1, g2, b2, w2):
    """Pure-JAX NCHW reference mirroring the PyTorch module (training-mode BN)."""
    def bn_relu(t, g, b):
        m = t.mean(axis=(0, 2, 3), keepdims=True)
        v = ((t - m) ** 2).mean(axis=(0, 2, 3), keepdims=True)
        t = (t - m) / jnp.sqrt(v + EPS) * g.reshape(1, -1, 1, 1) + b.reshape(1, -1, 1, 1)
        return jnp.maximum(t, 0.0)

    a1 = bn_relu(x, g1, b1)
    h = lax.conv_general_dilated(a1, w1, (1, 1), 'VALID',
                                 dimension_numbers=('NCHW', 'OIHW', 'NCHW'))
    a2 = bn_relu(h, g2, b2)
    return lax.conv_general_dilated(a2, w2, (1, 1), ((1, 1), (1, 1)),
                                    dimension_numbers=('NCHW', 'OIHW', 'NCHW'))


if __name__ == "__main__":
    key = jax.random.PRNGKey(0)
    ks = jax.random.split(key, 7)

    # Shapes implied by the module: x412 = [1, 960, 7, 7]
    N, C_in, H, W = 1, 960, 7, 7
    C_mid, C_out = 128, 32

    x = jax.random.normal(ks[0], (N, C_in, H, W), jnp.float32)
    gamma1 = 1.0 + 0.1 * jax.random.normal(ks[1], (C_in,), jnp.float32)
    beta1 = 0.1 * jax.random.normal(ks[2], (C_in,), jnp.float32)
    conv1_w = 0.05 * jax.random.normal(ks[3], (C_mid, C_in, 1, 1), jnp.float32)
    gamma2 = 1.0 + 0.1 * jax.random.normal(ks[4], (C_mid,), jnp.float32)
    beta2 = 0.1 * jax.random.normal(ks[5], (C_mid,), jnp.float32)
    conv2_w = 0.05 * jax.random.normal(ks[6], (C_out, C_mid, 3, 3), jnp.float32)

    out = fused_bn_relu_conv_bn_relu_conv(x, gamma1, beta1, conv1_w,
                                          gamma2, beta2, conv2_w)
    out = jax.block_until_ready(out)

    ref = reference_forward(x, gamma1, beta1, conv1_w, gamma2, beta2, conv2_w)
    assert out.shape == (N, C_out, H, W), out.shape
    # bf16 MXU operands with f32 accumulation: compare relative to output scale.
    err = float(jnp.max(jnp.abs(out - ref)))
    scale = float(jnp.max(jnp.abs(ref)))
    assert err <= 3e-2 * scale, f"max abs err = {err}, scale = {scale}"

    print("KERNEL_OK")
</pallas_src>

<mosaic_0001>
module attributes {stable_mosaic.version = 11 : i64} {
  func.func @_fused_kernel(%arg0: memref<960x49xf32, #tpu.memory_space<vmem>>, %arg1: memref<960x1xf32, #tpu.memory_space<vmem>>, %arg2: memref<960x1xf32, #tpu.memory_space<vmem>>, %arg3: memref<128x960xf32, #tpu.memory_space<vmem>>, %arg4: memref<128x1xf32, #tpu.memory_space<vmem>>, %arg5: memref<128x1xf32, #tpu.memory_space<vmem>>, %arg6: memref<32x1152xbf16, #tpu.memory_space<vmem>>, %arg7: memref<9x49xbf16, #tpu.memory_space<vmem>>, %arg8: memref<32x49xf32, #tpu.memory_space<vmem>>) attributes {dimension_semantics = [], scalar_prefetch = 0 : i64, scratch_operands = 0 : i64, tpu.core_type = #tpu.core_type<tc>} {
    %c0 = arith.constant 0 : index
    %c0_0 = arith.constant 0 : index
    %0 = vector.load %arg0[%c0, %c0_0] : memref<960x49xf32, #tpu.memory_space<vmem>>, vector<960x49xf32>
    %cst = arith.constant dense<0.000000e+00> : vector<960xf32>
    %1 = vector.multi_reduction <add>, %0, %cst [1] : vector<960x49xf32> to vector<960xf32>
    %2 = vector.shape_cast %1 : vector<960xf32> to vector<960x1xf32>
    %cst_1 = arith.constant 0.0204081628 : f32
    %3 = vector.broadcast %cst_1 : f32 to vector<960x1xf32>
    %4 = arith.mulf %2, %3 : vector<960x1xf32>
    %5 = vector.broadcast %4 : vector<960x1xf32> to vector<960x49xf32>
    %6 = arith.subf %0, %5 : vector<960x49xf32>
    %7 = arith.mulf %6, %6 : vector<960x49xf32>
    %cst_2 = arith.constant dense<0.000000e+00> : vector<960xf32>
    %8 = vector.multi_reduction <add>, %7, %cst_2 [1] : vector<960x49xf32> to vector<960xf32>
    %9 = vector.shape_cast %8 : vector<960xf32> to vector<960x1xf32>
    %cst_3 = arith.constant 0.0204081628 : f32
    %10 = vector.broadcast %cst_3 : f32 to vector<960x1xf32>
    %11 = arith.mulf %9, %10 : vector<960x1xf32>
    %c0_4 = arith.constant 0 : index
    %c0_5 = arith.constant 0 : index
    %12 = vector.load %arg1[%c0_4, %c0_5] : memref<960x1xf32, #tpu.memory_space<vmem>>, vector<960x1xf32>
    %cst_6 = arith.constant 9.99999974E-6 : f32
    %13 = vector.broadcast %cst_6 : f32 to vector<960x1xf32>
    %14 = arith.addf %11, %13 : vector<960x1xf32>
    %15 = math.rsqrt %14 : vector<960x1xf32>
    %16 = arith.mulf %12, %15 : vector<960x1xf32>
    %17 = vector.broadcast %16 : vector<960x1xf32> to vector<960x49xf32>
    %18 = arith.mulf %6, %17 : vector<960x49xf32>
    %c0_7 = arith.constant 0 : index
    %c0_8 = arith.constant 0 : index
    %19 = vector.load %arg2[%c0_7, %c0_8] : memref<960x1xf32, #tpu.memory_space<vmem>>, vector<960x1xf32>
    %20 = vector.broadcast %19 : vector<960x1xf32> to vector<960x49xf32>
    %21 = arith.addf %18, %20 : vector<960x49xf32>
    %cst_9 = arith.constant 0.000000e+00 : f32
    %22 = vector.broadcast %cst_9 : f32 to vector<960x49xf32>
    %23 = arith.maximumf %21, %22 : vector<960x49xf32>
    %24 = arith.truncf %23 : vector<960x49xf32> to vector<960x49xbf16>
    %c0_10 = arith.constant 0 : index
    %c0_11 = arith.constant 0 : index
    %25 = vector.load %arg3[%c0_10, %c0_11] : memref<128x960xf32, #tpu.memory_space<vmem>>, vector<128x960xf32>
    %26 = arith.truncf %25 : vector<128x960xf32> to vector<128x960xbf16>
    %cst_12 = arith.constant dense<0.000000e+00> : vector<128x49xf32>
    %27 = tpu.matmul %26, %24, %cst_12 {dimension_numbers = #tpu.dot_dimension_numbers<[1], [0], [0], [1], [0, 0, 1, 1], [], []>} : vector<128x960xbf16>, vector<960x49xbf16>, vector<128x49xf32> -> vector<128x49xf32>
    %cst_13 = arith.constant dense<0.000000e+00> : vector<128xf32>
    %28 = vector.multi_reduction <add>, %27, %cst_13 [1] : vector<128x49xf32> to vector<128xf32>
    %29 = vector.shape_cast %28 : vector<128xf32> to vector<128x1xf32>
    %cst_14 = arith.constant 0.0204081628 : f32
    %30 = vector.broadcast %cst_14 : f32 to vector<128x1xf32>
    %31 = arith.mulf %29, %30 : vector<128x1xf32>
    %32 = vector.broadcast %31 : vector<128x1xf32> to vector<128x49xf32>
    %33 = arith.subf %27, %32 : vector<128x49xf32>
    %34 = arith.mulf %33, %33 : vector<128x49xf32>
    %cst_15 = arith.constant dense<0.000000e+00> : vector<128xf32>
    %35 = vector.multi_reduction <add>, %34, %cst_15 [1] : vector<128x49xf32> to vector<128xf32>
    %36 = vector.shape_cast %35 : vector<128xf32> to vector<128x1xf32>
    %cst_16 = arith.constant 0.0204081628 : f32
    %37 = vector.broadcast %cst_16 : f32 to vector<128x1xf32>
    %38 = arith.mulf %36, %37 : vector<128x1xf32>
    %c0_17 = arith.constant 0 : index
    %c0_18 = arith.constant 0 : index
    %39 = vector.load %arg4[%c0_17, %c0_18] : memref<128x1xf32, #tpu.memory_space<vmem>>, vector<128x1xf32>
    %cst_19 = arith.constant 9.99999974E-6 : f32
    %40 = vector.broadcast %cst_19 : f32 to vector<128x1xf32>
    %41 = arith.addf %38, %40 : vector<128x1xf32>
    %42 = math.rsqrt %41 : vector<128x1xf32>
    %43 = arith.mulf %39, %42 : vector<128x1xf32>
    %44 = vector.broadcast %43 : vector<128x1xf32> to vector<128x49xf32>
    %45 = arith.mulf %33, %44 : vector<128x49xf32>
    %c0_20 = arith.constant 0 : index
    %c0_21 = arith.constant 0 : index
    %46 = vector.load %arg5[%c0_20, %c0_21] : memref<128x1xf32, #tpu.memory_space<vmem>>, vector<128x1xf32>
    %47 = vector.broadcast %46 : vector<128x1xf32> to vector<128x49xf32>
    %48 = arith.addf %45, %47 : vector<128x49xf32>
    %cst_22 = arith.constant 0.000000e+00 : f32
    %49 = vector.broadcast %cst_22 : f32 to vector<128x49xf32>
    %50 = arith.maximumf %48, %49 : vector<128x49xf32>
    %51 = arith.truncf %50 : vector<128x49xf32> to vector<128x49xbf16>
    %cst_23 = arith.constant 0.000000e+00 : bf16
    %52 = vector.broadcast %cst_23 : bf16 to vector<128x8xbf16>
    %53 = tpu.concatenate %52, %51, %52 in 1 : vector<128x8xbf16>, vector<128x49xbf16>, vector<128x8xbf16> -> vector<128x65xbf16>
    %c0_24 = arith.constant 0 : index
    %c0_25 = arith.constant 0 : index
    %54 = vector.load %arg7[%c0_24, %c0_25] : memref<9x49xbf16, #tpu.memory_space<vmem>>, vector<9x49xbf16>
    %55 = vector.extract_strided_slice %53 {offsets = [0, 0], sizes = [128, 49], strides = [1, 1]} : vector<128x65xbf16> to vector<128x49xbf16>
    %56 = vector.extract_strided_slice %54 {offsets = [0, 0], sizes = [1, 49], strides = [1, 1]} : vector<9x49xbf16> to vector<1x49xbf16>
    %57 = vector.broadcast %56 : vector<1x49xbf16> to vector<128x49xbf16>
    %58 = arith.mulf %55, %57 : vector<128x49xbf16>
    %59 = vector.extract_strided_slice %53 {offsets = [0, 1], sizes = [128, 49], strides = [1, 1]} : vector<128x65xbf16> to vector<128x49xbf16>
    %60 = vector.extract_strided_slice %54 {offsets = [1, 0], sizes = [1, 49], strides = [1, 1]} : vector<9x49xbf16> to vector<1x49xbf16>
    %61 = vector.broadcast %60 : vector<1x49xbf16> to vector<128x49xbf16>
    %62 = arith.mulf %59, %61 : vector<128x49xbf16>
    %63 = vector.extract_strided_slice %53 {offsets = [0, 2], sizes = [128, 49], strides = [1, 1]} : vector<128x65xbf16> to vector<128x49xbf16>
    %64 = vector.extract_strided_slice %54 {offsets = [2, 0], sizes = [1, 49], strides = [1, 1]} : vector<9x49xbf16> to vector<1x49xbf16>
    %65 = vector.broadcast %64 : vector<1x49xbf16> to vector<128x49xbf16>
    %66 = arith.mulf %63, %65 : vector<128x49xbf16>
    %67 = vector.extract_strided_slice %53 {offsets = [0, 7], sizes = [128, 49], strides = [1, 1]} : vector<128x65xbf16> to vector<128x49xbf16>
    %68 = vector.extract_strided_slice %54 {offsets = [3, 0], sizes = [1, 49], strides = [1, 1]} : vector<9x49xbf16> to vector<1x49xbf16>
    %69 = vector.broadcast %68 : vector<1x49xbf16> to vector<128x49xbf16>
    %70 = arith.mulf %67, %69 : vector<128x49xbf16>
    %71 = vector.extract_strided_slice %53 {offsets = [0, 8], sizes = [128, 49], strides = [1, 1]} : vector<128x65xbf16> to vector<128x49xbf16>
    %72 = vector.extract_strided_slice %53 {offsets = [0, 9], sizes = [128, 49], strides = [1, 1]} : vector<128x65xbf16> to vector<128x49xbf16>
    %73 = vector.extract_strided_slice %54 {offsets = [5, 0], sizes = [1, 49], strides = [1, 1]} : vector<9x49xbf16> to vector<1x49xbf16>
    %74 = vector.broadcast %73 : vector<1x49xbf16> to vector<128x49xbf16>
    %75 = arith.mulf %72, %74 : vector<128x49xbf16>
    %76 = vector.extract_strided_slice %53 {offsets = [0, 14], sizes = [128, 49], strides = [1, 1]} : vector<128x65xbf16> to vector<128x49xbf16>
    %77 = vector.extract_strided_slice %54 {offsets = [6, 0], sizes = [1, 49], strides = [1, 1]} : vector<9x49xbf16> to vector<1x49xbf16>
    %78 = vector.broadcast %77 : vector<1x49xbf16> to vector<128x49xbf16>
    %79 = arith.mulf %76, %78 : vector<128x49xbf16>
    %80 = vector.extract_strided_slice %53 {offsets = [0, 15], sizes = [128, 49], strides = [1, 1]} : vector<128x65xbf16> to vector<128x49xbf16>
    %81 = vector.extract_strided_slice %54 {offsets = [7, 0], sizes = [1, 49], strides = [1, 1]} : vector<9x49xbf16> to vector<1x49xbf16>
    %82 = vector.broadcast %81 : vector<1x49xbf16> to vector<128x49xbf16>
    %83 = arith.mulf %80, %82 : vector<128x49xbf16>
    %84 = vector.extract_strided_slice %53 {offsets = [0, 16], sizes = [128, 49], strides = [1, 1]} : vector<128x65xbf16> to vector<128x49xbf16>
    %85 = vector.extract_strided_slice %54 {offsets = [8, 0], sizes = [1, 49], strides = [1, 1]} : vector<9x49xbf16> to vector<1x49xbf16>
    %86 = vector.broadcast %85 : vector<1x49xbf16> to vector<128x49xbf16>
    %87 = arith.mulf %84, %86 : vector<128x49xbf16>
    %88 = tpu.concatenate %58, %62, %66, %70, %71, %75, %79, %83, %87 in 0 : vector<128x49xbf16>, vector<128x49xbf16>, vector<128x49xbf16>, vector<128x49xbf16>, vector<128x49xbf16>, vector<128x49xbf16>, vector<128x49xbf16>, vector<128x49xbf16>, vector<128x49xbf16> -> vector<1152x49xbf16>
    %c0_26 = arith.constant 0 : index
    %c0_27 = arith.constant 0 : index
    %89 = vector.load %arg6[%c0_26, %c0_27] : memref<32x1152xbf16, #tpu.memory_space<vmem>>, vector<32x1152xbf16>
    %cst_28 = arith.constant dense<0.000000e+00> : vector<32x49xf32>
    %90 = tpu.matmul %89, %88, %cst_28 {dimension_numbers = #tpu.dot_dimension_numbers<[1], [0], [0], [1], [0, 0, 1, 1], [], []>} : vector<32x1152xbf16>, vector<1152x49xbf16>, vector<32x49xf32> -> vector<32x49xf32>
    %c0_29 = arith.constant 0 : index
    %c0_30 = arith.constant 0 : index
    %91 = vector.load %arg8[%c0_29, %c0_30] : memref<32x49xf32, #tpu.memory_space<vmem>>, vector<32x49xf32>
    tpu.vector_store %arg8[%c0_29, %c0_30], %90 {strides = array<i32>} : memref<32x49xf32, #tpu.memory_space<vmem>>, vector<32x49xf32>,
    return
  }
}

</mosaic_0001>

<llo_original>
// kernel: fused_bn_relu_conv_bn_relu_conv.1
$region0: #{fused_bn_relu_conv_bn_relu_conv.1}
  #allocation0 [shape = 'u32[]', space=smem, size = 0x4, offset = 0x4, fixed_abs, tag = 'smem constant byte address 0x4 - core index']
  #allocation1 [shape = 'u32[144,128]{1,0:T(1,128)}', space=vmem, size = 0x12000, scoped, tag = 'internal scratch']
  %s0 = inlined_call_operand.vmem [shape: f32[960,49], index: 0, kind: input, shape index: {}]
  %s1 = inlined_call_operand.vmem [shape: f32[960,1], index: 1, kind: input, shape index: {}]
  %s2 = inlined_call_operand.vmem [shape: f32[960,1], index: 2, kind: input, shape index: {}]
  %s3 = inlined_call_operand.vmem [shape: f32[128,960], index: 3, kind: input, shape index: {}]
  %s4 = inlined_call_operand.vmem [shape: f32[128,1], index: 4, kind: input, shape index: {}]
  %s5 = inlined_call_operand.vmem [shape: f32[128,1], index: 5, kind: input, shape index: {}]
  %s6 = inlined_call_operand.vmem [shape: bf16[32,1152], index: 6, kind: input, shape index: {}]
  %s7 = inlined_call_operand.vmem [shape: bf16[9,49], index: 7, kind: input, shape index: {}]
  %s8 = inlined_call_operand.vmem [shape: f32[32,49], index: 8, kind: output, shape index: {}]
  %s9 = sld [smem:[#allocation0]]
  $region42: #{fused_bn_relu_conv_bn_relu_conv.1} parent=0
    _
  %s11 = ssub.s32 1, %s9
  %s12 = scalar_select 0, %s11, %s9
  // Predicated region
  $region2: #{fused_bn_relu_conv_bn_relu_conv.1} parent=0 // pred_check
    _
  $region3: #{fused_bn_relu_conv_bn_relu_conv.1} parent=0 // pred_check_branch
    %14 = sbr.rel (0) target = $region5
  $region4: #{fused_bn_relu_conv_bn_relu_conv.1} parent=0 // pred_region
    _
  $region5: #{fused_bn_relu_conv_bn_relu_conv.1} parent=0 // pred_fallthru
    _
  // Predicated region
  $region6: #{fused_bn_relu_conv_bn_relu_conv.1} parent=0 // pred_check
    _
  $region7: #{fused_bn_relu_conv_bn_relu_conv.1} parent=0 // pred_check_branch
    %16 = sbr.rel (0) target = $region9
  $region8: #{fused_bn_relu_conv_bn_relu_conv.1} parent=0 // pred_region
    _
  $region9: #{fused_bn_relu_conv_bn_relu_conv.1} parent=0 // pred_fallthru
    _
  // Predicated region
  $region10: #{fused_bn_relu_conv_bn_relu_conv.1} parent=0 // pred_check
    _
  $region11: #{fused_bn_relu_conv_bn_relu_conv.1} parent=0 // pred_check_branch
    %18 = sbr.rel (0) target = $region13
  $region12: #{fused_bn_relu_conv_bn_relu_conv.1} parent=0 // pred_region
    _
  $region13: #{fused_bn_relu_conv_bn_relu_conv.1} parent=0 // pred_fallthru
    _
  // Predicated region
  $region14: #{fused_bn_relu_conv_bn_relu_conv.1} parent=0 // pred_check
    _
  $region15: #{fused_bn_relu_conv_bn_relu_conv.1} parent=0 // pred_check_branch
    %20 = sbr.rel (0) target = $region17
  $region16: #{fused_bn_relu_conv_bn_relu_conv.1} parent=0 // pred_region
    _
  $region17: #{fused_bn_relu_conv_bn_relu_conv.1} parent=0 // pred_fallthru
    _
  // Predicated region
  $region18: #{fused_bn_relu_conv_bn_relu_conv.1} parent=0 // pred_check
    _
  $region19: #{fused_bn_relu_conv_bn_relu_conv.1} parent=0 // pred_check_branch
    %22 = sbr.rel (0) target = $region21
  $region20: #{fused_bn_relu_conv_bn_relu_conv.1} parent=0 // pred_region
    _
  $region21: #{fused_bn_relu_conv_bn_relu_conv.1} parent=0 // pred_fallthru
    _
  // Predicated region
  $region22: #{fused_bn_relu_conv_bn_relu_conv.1} parent=0 // pred_check
    _
  $region23: #{fused_bn_relu_conv_bn_relu_conv.1} parent=0 // pred_check_branch
    %24 = sbr.rel (0) target = $region25
  $region24: #{fused_bn_relu_conv_bn_relu_conv.1} parent=0 // pred_region
    _
  $region25: #{fused_bn_relu_conv_bn_relu_conv.1} parent=0 // pred_fallthru
    _
  // Predicated region
  $region26: #{fused_bn_relu_conv_bn_relu_conv.1} parent=0 // pred_check
    _
  $region27: #{fused_bn_relu_conv_bn_relu_conv.1} parent=0 // pred_check_branch
    %26 = sbr.rel (0) target = $region29
  $region28: #{fused_bn_relu_conv_bn_relu_conv.1} parent=0 // pred_region
    _
  $region29: #{fused_bn_relu_conv_bn_relu_conv.1} parent=0 // pred_fallthru
    _
  // Predicated region
  $region30: #{fused_bn_relu_conv_bn_relu_conv.1} parent=0 // pred_check
    _
  $region31: #{fused_bn_relu_conv_bn_relu_conv.1} parent=0 // pred_check_branch
    %28 = sbr.rel (0) target = $region33
  $region32: #{fused_bn_relu_conv_bn_relu_conv.1} parent=0 // pred_region
    _
  $region33: #{fused_bn_relu_conv_bn_relu_conv.1} parent=0 // pred_fallthru
    _
  %v30 = vld [vmem:[%s0] sm:$0xff]
  %v31 = vld [vmem:[%s0 + $0x8] sm:$0xff]
  %v32 = vld [vmem:[%s0 + $0x10] sm:$0xff]
  %v33 = vld [vmem:[%s0 + $0x18] sm:$0xff]
  %v34 = vld [vmem:[%s0 + $0x20] sm:$0xff]
  %v35 = vld [vmem:[%s0 + $0x28] sm:$0xff]
  %v36 = vld [vmem:[%s0 + $0x30] sm:$0xff]
  %v37 = vld [vmem:[%s0 + $0x38] sm:$0xff]
  %v38 = vld [vmem:[%s0 + $0x40] sm:$0xff]
  %v39 = vld [vmem:[%s0 + $0x48] sm:$0xff]
  %v40 = vld [vmem:[%s0 + $0x50] sm:$0xff]
  %v41 = vld [vmem:[%s0 + $0x58] sm:$0xff]
  %v42 = vld [vmem:[%s0 + $0x60] sm:$0xff]
  %v43 = vld [vmem:[%s0 + $0x68] sm:$0xff]
  %v44 = vld [vmem:[%s0 + $0x70] sm:$0xff]
  %v45 = vld [vmem:[%s0 + $0x78] sm:$0xff]
  %v46 = vld [vmem:[%s0 + $0x80] sm:$0xff]
  %v47 = vld [vmem:[%s0 + $0x88] sm:$0xff]
  %v48 = vld [vmem:[%s0 + $0x90] sm:$0xff]
  %v49 = vld [vmem:[%s0 + $0x98] sm:$0xff]
  %v50 = vld [vmem:[%s0 + $0xa0] sm:$0xff]
  %v51 = vld [vmem:[%s0 + $0xa8] sm:$0xff]
  %v52 = vld [vmem:[%s0 + $0xb0] sm:$0xff]
  %v53 = vld [vmem:[%s0 + $0xb8] sm:$0xff]
  %v54 = vld [vmem:[%s0 + $0xc0] sm:$0xff]
  %v55 = vld [vmem:[%s0 + $0xc8] sm:$0xff]
  %v56 = vld [vmem:[%s0 + $0xd0] sm:$0xff]
  %v57 = vld [vmem:[%s0 + $0xd8] sm:$0xff]
  %v58 = vld [vmem:[%s0 + $0xe0] sm:$0xff]
  %v59 = vld [vmem:[%s0 + $0xe8] sm:$0xff]
  %v60 = vld [vmem:[%s0 + $0xf0] sm:$0xff]
  %v61 = vld [vmem:[%s0 + $0xf8] sm:$0xff]
  %v62 = vld [vmem:[%s0 + $0x100] sm:$0xff]
  %v63 = vld [vmem:[%s0 + $0x108] sm:$0xff]
  %v64 = vld [vmem:[%s0 + $0x110] sm:$0xff]
  %v65 = vld [vmem:[%s0 + $0x118] sm:$0xff]
  %v66 = vld [vmem:[%s0 + $0x120] sm:$0xff]
  %v67 = vld [vmem:[%s0 + $0x128] sm:$0xff]
  %v68 = vld [vmem:[%s0 + $0x130] sm:$0xff]
  %v69 = vld [vmem:[%s0 + $0x138] sm:$0xff]
  %v70 = vld [vmem:[%s0 + $0x140] sm:$0xff]
  %v71 = vld [vmem:[%s0 + $0x148] sm:$0xff]
  %v72 = vld [vmem:[%s0 + $0x150] sm:$0xff]
  %v73 = vld [vmem:[%s0 + $0x158] sm:$0xff]
  %v74 = vld [vmem:[%s0 + $0x160] sm:$0xff]
  %v75 = vld [vmem:[%s0 + $0x168] sm:$0xff]
  %v76 = vld [vmem:[%s0 + $0x170] sm:$0xff]
  %v77 = vld [vmem:[%s0 + $0x178] sm:$0xff]
  %v78 = vld [vmem:[%s0 + $0x180] sm:$0xff]
  %v79 = vld [vmem:[%s0 + $0x188] sm:$0xff]
  %v80 = vld [vmem:[%s0 + $0x190] sm:$0xff]
  %v81 = vld [vmem:[%s0 + $0x198] sm:$0xff]
  %v82 = vld [vmem:[%s0 + $0x1a0] sm:$0xff]
  %v83 = vld [vmem:[%s0 + $0x1a8] sm:$0xff]
  %v84 = vld [vmem:[%s0 + $0x1b0] sm:$0xff]
  %v85 = vld [vmem:[%s0 + $0x1b8] sm:$0xff]
  %v86 = vld [vmem:[%s0 + $0x1c0] sm:$0xff]
  %v87 = vld [vmem:[%s0 + $0x1c8] sm:$0xff]
  %v88 = vld [vmem:[%s0 + $0x1d0] sm:$0xff]
  %v89 = vld [vmem:[%s0 + $0x1d8] sm:$0xff]
  %v90 = vld [vmem:[%s0 + $0x1e0] sm:$0xff]
  %v91 = vld [vmem:[%s0 + $0x1e8] sm:$0xff]
  %v92 = vld [vmem:[%s0 + $0x1f0] sm:$0xff]
  %v93 = vld [vmem:[%s0 + $0x1f8] sm:$0xff]
  %v94 = vld [vmem:[%s0 + $0x200] sm:$0xff]
  %v95 = vld [vmem:[%s0 + $0x208] sm:$0xff]
  %v96 = vld [vmem:[%s0 + $0x210] sm:$0xff]
  %v97 = vld [vmem:[%s0 + $0x218] sm:$0xff]
  %v98 = vld [vmem:[%s0 + $0x220] sm:$0xff]
  %v99 = vld [vmem:[%s0 + $0x228] sm:$0xff]
  %v100 = vld [vmem:[%s0 + $0x230] sm:$0xff]
  %v101 = vld [vmem:[%s0 + $0x238] sm:$0xff]
  %v102 = vld [vmem:[%s0 + $0x240] sm:$0xff]
  %v103 = vld [vmem:[%s0 + $0x248] sm:$0xff]
  %v104 = vld [vmem:[%s0 + $0x250] sm:$0xff]
  %v105 = vld [vmem:[%s0 + $0x258] sm:$0xff]
  %v106 = vld [vmem:[%s0 + $0x260] sm:$0xff]
  %v107 = vld [vmem:[%s0 + $0x268] sm:$0xff]
  %v108 = vld [vmem:[%s0 + $0x270] sm:$0xff]
  %v109 = vld [vmem:[%s0 + $0x278] sm:$0xff]
  %v110 = vld [vmem:[%s0 + $0x280] sm:$0xff]
  %v111 = vld [vmem:[%s0 + $0x288] sm:$0xff]
  %v112 = vld [vmem:[%s0 + $0x290] sm:$0xff]
  %v113 = vld [vmem:[%s0 + $0x298] sm:$0xff]
  %v114 = vld [vmem:[%s0 + $0x2a0] sm:$0xff]
  %v115 = vld [vmem:[%s0 + $0x2a8] sm:$0xff]
  %v116 = vld [vmem:[%s0 + $0x2b0] sm:$0xff]
  %v117 = vld [vmem:[%s0 + $0x2b8] sm:$0xff]
  %v118 = vld [vmem:[%s0 + $0x2c0] sm:$0xff]
  %v119 = vld [vmem:[%s0 + $0x2c8] sm:$0xff]
  %v120 = vld [vmem:[%s0 + $0x2d0] sm:$0xff]
  %v121 = vld [vmem:[%s0 + $0x2d8] sm:$0xff]
  %v122 = vld [vmem:[%s0 + $0x2e0] sm:$0xff]
  %v123 = vld [vmem:[%s0 + $0x2e8] sm:$0xff]
  %v124 = vld [vmem:[%s0 + $0x2f0] sm:$0xff]
  %v125 = vld [vmem:[%s0 + $0x2f8] sm:$0xff]
  %v126 = vld [vmem:[%s0 + $0x300] sm:$0xff]
  %v127 = vld [vmem:[%s0 + $0x308] sm:$0xff]
  %v128 = vld [vmem:[%s0 + $0x310] sm:$0xff]
  %v129 = vld [vmem:[%s0 + $0x318] sm:$0xff]
  %v130 = vld [vmem:[%s0 + $0x320] sm:$0xff]
  %v131 = vld [vmem:[%s0 + $0x328] sm:$0xff]
  %v132 = vld [vmem:[%s0 + $0x330] sm:$0xff]
  %v133 = vld [vmem:[%s0 + $0x338] sm:$0xff]
  %v134 = vld [vmem:[%s0 + $0x340] sm:$0xff]
  %v135 = vld [vmem:[%s0 + $0x348] sm:$0xff]
  %v136 = vld [vmem:[%s0 + $0x350] sm:$0xff]
  %v137 = vld [vmem:[%s0 + $0x358] sm:$0xff]
  %v138 = vld [vmem:[%s0 + $0x360] sm:$0xff]
  %v139 = vld [vmem:[%s0 + $0x368] sm:$0xff]
  %v140 = vld [vmem:[%s0 + $0x370] sm:$0xff]
  %v141 = vld [vmem:[%s0 + $0x378] sm:$0xff]
  %v142 = vld [vmem:[%s0 + $0x380] sm:$0xff]
  %v143 = vld [vmem:[%s0 + $0x388] sm:$0xff]
  %v144 = vld [vmem:[%s0 + $0x390] sm:$0xff]
  %v145 = vld [vmem:[%s0 + $0x398] sm:$0xff]
  %v146 = vld [vmem:[%s0 + $0x3a0] sm:$0xff]
  %v147 = vld [vmem:[%s0 + $0x3a8] sm:$0xff]
  %v148 = vld [vmem:[%s0 + $0x3b0] sm:$0xff]
  %v149 = vld [vmem:[%s0 + $0x3b8] sm:$0xff]
  %vm150 = vcmask 400384
  %v151 = vsel %vm150, %v30, 0.0
  %152 = vadd.xlane.f32.xlu0 %v151
  %v153 = vpop.xlane.xlu0 %152
  %v154 = vsel %vm150, %v31, 0.0
  %155 = vadd.xlane.f32.xlu0 %v154
  %v156 = vpop.xlane.xlu0 %155
  %v157 = vsel %vm150, %v32, 0.0
  %158 = vadd.xlane.f32.xlu0 %v157
  %v159 = vpop.xlane.xlu0 %158
  %v160 = vsel %vm150, %v33, 0.0
  %161 = vadd.xlane.f32.xlu0 %v160
  %v162 = vpop.xlane.xlu0 %161
  %v163 = vsel %vm150, %v34, 0.0
  %164 = vadd.xlane.f32.xlu0 %v163
  %v165 = vpop.xlane.xlu0 %164
  %v166 = vsel %vm150, %v35, 0.0
  %167 = vadd.xlane.f32.xlu0 %v166
  %v168 = vpop.xlane.xlu0 %167
  %v169 = vsel %vm150, %v36, 0.0
  %170 = vadd.xlane.f32.xlu0 %v169
  %v171 = vpop.xlane.xlu0 %170
  %v172 = vsel %vm150, %v37, 0.0
  %173 = vadd.xlane.f32.xlu0 %v172
  %v174 = vpop.xlane.xlu0 %173
  %v175 = vsel %vm150, %v38, 0.0
  %176 = vadd.xlane.f32.xlu0 %v175
  %v177 = vpop.xlane.xlu0 %176
  %v178 = vsel %vm150, %v39, 0.0
  %179 = vadd.xlane.f32.xlu0 %v178
  %v180 = vpop.xlane.xlu0 %179
  %v181 = vsel %vm150, %v40, 0.0
  %182 = vadd.xlane.f32.xlu0 %v181
  %v183 = vpop.xlane.xlu0 %182
  %v184 = vsel %vm150, %v41, 0.0
  %185 = vadd.xlane.f32.xlu0 %v184
  %v186 = vpop.xlane.xlu0 %185
  %v187 = vsel %vm150, %v42, 0.0
  %188 = vadd.xlane.f32.xlu0 %v187
  %v189 = vpop.xlane.xlu0 %188
  %v190 = vsel %vm150, %v43, 0.0
  %191 = vadd.xlane.f32.xlu0 %v190
  %v192 = vpop.xlane.xlu0 %191
  %v193 = vsel %vm150, %v44, 0.0
  %194 = vadd.xlane.f32.xlu0 %v193
  %v195 = vpop.xlane.xlu0 %194
  %v196 = vsel %vm150, %v45, 0.0
  %197 = vadd.xlane.f32.xlu0 %v196
  %v198 = vpop.xlane.xlu0 %197
  %v199 = vsel %vm150, %v46, 0.0
  %200 = vadd.xlane.f32.xlu0 %v199
  %v201 = vpop.xlane.xlu0 %200
  %v202 = vsel %vm150, %v47, 0.0
  %203 = vadd.xlane.f32.xlu0 %v202
  %v204 = vpop.xlane.xlu0 %203
  %v205 = vsel %vm150, %v48, 0.0
  %206 = vadd.xlane.f32.xlu0 %v205
  %v207 = vpop.xlane.xlu0 %206
  %v208 = vsel %vm150, %v49, 0.0
  %209 = vadd.xlane.f32.xlu0 %v208
  %v210 = vpop.xlane.xlu0 %209
  %v211 = vsel %vm150, %v50, 0.0
  %212 = vadd.xlane.f32.xlu0 %v211
  %v213 = vpop.xlane.xlu0 %212
  %v214 = vsel %vm150, %v51, 0.0
  %215 = vadd.xlane.f32.xlu0 %v214
  %v216 = vpop.xlane.xlu0 %215
  %v217 = vsel %vm150, %v52, 0.0
  %218 = vadd.xlane.f32.xlu0 %v217
  %v219 = vpop.xlane.xlu0 %218
  %v220 = vsel %vm150, %v53, 0.0
  %221 = vadd.xlane.f32.xlu0 %v220
  %v222 = vpop.xlane.xlu0 %221
  %v223 = vsel %vm150, %v54, 0.0
  %224 = vadd.xlane.f32.xlu0 %v223
  %v225 = vpop.xlane.xlu0 %224
  %v226 = vsel %vm150, %v55, 0.0
  %227 = vadd.xlane.f32.xlu0 %v226
  %v228 = vpop.xlane.xlu0 %227
  %v229 = vsel %vm150, %v56, 0.0
  %230 = vadd.xlane.f32.xlu0 %v229
  %v231 = vpop.xlane.xlu0 %230
  %v232 = vsel %vm150, %v57, 0.0
  %233 = vadd.xlane.f32.xlu0 %v232
  %v234 = vpop.xlane.xlu0 %233
  %v235 = vsel %vm150, %v58, 0.0
  %236 = vadd.xlane.f32.xlu0 %v235
  %v237 = vpop.xlane.xlu0 %236
  %v238 = vsel %vm150, %v59, 0.0
  %239 = vadd.xlane.f32.xlu0 %v238
  %v240 = vpop.xlane.xlu0 %239
  %v241 = vsel %vm150, %v60, 0.0
  %242 = vadd.xlane.f32.xlu0 %v241
  %v243 = vpop.xlane.xlu0 %242
  %v244 = vsel %vm150, %v61, 0.0
  %245 = vadd.xlane.f32.xlu0 %v244
  %v246 = vpop.xlane.xlu0 %245
  %v247 = vsel %vm150, %v62, 0.0
  %248 = vadd.xlane.f32.xlu0 %v247
  %v249 = vpop.xlane.xlu0 %248
  %v250 = vsel %vm150, %v63, 0.0
  %251 = vadd.xlane.f32.xlu0 %v250
  %v252 = vpop.xlane.xlu0 %251
  %v253 = vsel %vm150, %v64, 0.0
  %254 = vadd.xlane.f32.xlu0 %v253
  %v255 = vpop.xlane.xlu0 %254
  %v256 = vsel %vm150, %v65, 0.0
  %257 = vadd.xlane.f32.xlu0 %v256
  %v258 = vpop.xlane.xlu0 %257
  %v259 = vsel %vm150, %v66, 0.0
  %260 = vadd.xlane.f32.xlu0 %v259
  %v261 = vpop.xlane.xlu0 %260
  %v262 = vsel %vm150, %v67, 0.0
  %263 = vadd.xlane.f32.xlu0 %v262
  %v264 = vpop.xlane.xlu0 %263
  %v265 = vsel %vm150, %v68, 0.0
  %266 = vadd.xlane.f32.xlu0 %v265
  %v267 = vpop.xlane.xlu0 %266
  %v268 = vsel %vm150, %v69, 0.0
  %269 = vadd.xlane.f32.xlu0 %v268
  %v270 = vpop.xlane.xlu0 %269
  %v271 = vsel %vm150, %v70, 0.0
  %272 = vadd.xlane.f32.xlu0 %v271
  %v273 = vpop.xlane.xlu0 %272
  %v274 = vsel %vm150, %v71, 0.0
  %275 = vadd.xlane.f32.xlu0 %v274
  %v276 = vpop.xlane.xlu0 %275
  %v277 = vsel %vm150, %v72, 0.0
  %278 = vadd.xlane.f32.xlu0 %v277
  %v279 = vpop.xlane.xlu0 %278
  %v280 = vsel %vm150, %v73, 0.0
  %281 = vadd.xlane.f32.xlu0 %v280
  %v282 = vpop.xlane.xlu0 %281
  %v283 = vsel %vm150, %v74, 0.0
  %284 = vadd.xlane.f32.xlu0 %v283
  %v285 = vpop.xlane.xlu0 %284
  %v286 = vsel %vm150, %v75, 0.0
  %287 = vadd.xlane.f32.xlu0 %v286
  %v288 = vpop.xlane.xlu0 %287
  %v289 = vsel %vm150, %v76, 0.0
  %290 = vadd.xlane.f32.xlu0 %v289
  %v291 = vpop.xlane.xlu0 %290
  %v292 = vsel %vm150, %v77, 0.0
  %293 = vadd.xlane.f32.xlu0 %v292
  %v294 = vpop.xlane.xlu0 %293
  %v295 = vsel %vm150, %v78, 0.0
  %296 = vadd.xlane.f32.xlu0 %v295
  %v297 = vpop.xlane.xlu0 %296
  %v298 = vsel %vm150, %v79, 0.0
  %299 = vadd.xlane.f32.xlu0 %v298
  %v300 = vpop.xlane.xlu0 %299
  %v301 = vsel %vm150, %v80, 0.0
  %302 = vadd.xlane.f32.xlu0 %v301
  %v303 = vpop.xlane.xlu0 %302
  %v304 = vsel %vm150, %v81, 0.0
  %305 = vadd.xlane.f32.xlu0 %v304
  %v306 = vpop.xlane.xlu0 %305
  %v307 = vsel %vm150, %v82, 0.0
  %308 = vadd.xlane.f32.xlu0 %v307
  %v309 = vpop.xlane.xlu0 %308
  %v310 = vsel %vm150, %v83, 0.0
  %311 = vadd.xlane.f32.xlu0 %v310
  %v312 = vpop.xlane.xlu0 %311
  %v313 = vsel %vm150, %v84, 0.0
  %314 = vadd.xlane.f32.xlu0 %v313
  %v315 = vpop.xlane.xlu0 %314
  %v316 = vsel %vm150, %v85, 0.0
  %317 = vadd.xlane.f32.xlu0 %v316
  %v318 = vpop.xlane.xlu0 %317
  %v319 = vsel %vm150, %v86, 0.0
  %320 = vadd.xlane.f32.xlu0 %v319
  %v321 = vpop.xlane.xlu0 %320
  %v322 = vsel %vm150, %v87, 0.0
  %323 = vadd.xlane.f32.xlu0 %v322
  %v324 = vpop.xlane.xlu0 %323
  %v325 = vsel %vm150, %v88, 0.0
  %326 = vadd.xlane.f32.xlu0 %v325
  %v327 = vpop.xlane.xlu0 %326
  %v328 = vsel %vm150, %v89, 0.0
  %329 = vadd.xlane.f32.xlu0 %v328
  %v330 = vpop.xlane.xlu0 %329
  %v331 = vsel %vm150, %v90, 0.0
  %332 = vadd.xlane.f32.xlu0 %v331
  %v333 = vpop.xlane.xlu0 %332
  %v334 = vsel %vm150, %v91, 0.0
  %335 = vadd.xlane.f32.xlu0 %v334
  %v336 = vpop.xlane.xlu0 %335
  %v337 = vsel %vm150, %v92, 0.0
  %338 = vadd.xlane.f32.xlu0 %v337
  %v339 = vpop.xlane.xlu0 %338
  %v340 = vsel %vm150, %v93, 0.0
  %341 = vadd.xlane.f32.xlu0 %v340
  %v342 = vpop.xlane.xlu0 %341
  %v343 = vsel %vm150, %v94, 0.0
  %344 = vadd.xlane.f32.xlu0 %v343
  %v345 = vpop.xlane.xlu0 %344
  %v346 = vsel %vm150, %v95, 0.0
  %347 = vadd.xlane.f32.xlu0 %v346
  %v348 = vpop.xlane.xlu0 %347
  %v349 = vsel %vm150, %v96, 0.0
  %350 = vadd.xlane.f32.xlu0 %v349
  %v351 = vpop.xlane.xlu0 %350
  %v352 = vsel %vm150, %v97, 0.0
  %353 = vadd.xlane.f32.xlu0 %v352
  %v354 = vpop.xlane.xlu0 %353
  %v355 = vsel %vm150, %v98, 0.0
  %356 = vadd.xlane.f32.xlu0 %v355
  %v357 = vpop.xlane.xlu0 %356
  %v358 = vsel %vm150, %v99, 0.0
  %359 = vadd.xlane.f32.xlu0 %v358
  %v360 = vpop.xlane.xlu0 %359
  %v361 = vsel %vm150, %v100, 0.0
  %362 = vadd.xlane.f32.xlu0 %v361
  %v363 = vpop.xlane.xlu0 %362
  %v364 = vsel %vm150, %v101, 0.0
  %365 = vadd.xlane.f32.xlu0 %v364
  %v366 = vpop.xlane.xlu0 %365
  %v367 = vsel %vm150, %v102, 0.0
  %368 = vadd.xlane.f32.xlu0 %v367
  %v369 = vpop.xlane.xlu0 %368
  %v370 = vsel %vm150, %v103, 0.0
  %371 = vadd.xlane.f32.xlu0 %v370
  %v372 = vpop.xlane.xlu0 %371
  %v373 = vsel %vm150, %v104, 0.0
  %374 = vadd.xlane.f32.xlu0 %v373
  %v375 = vpop.xlane.xlu0 %374
  %v376 = vsel %vm150, %v105, 0.0
  %377 = vadd.xlane.f32.xlu0 %v376
  %v378 = vpop.xlane.xlu0 %377
  %v379 = vsel %vm150, %v106, 0.0
  %380 = vadd.xlane.f32.xlu0 %v379
  %v381 = vpop.xlane.xlu0 %380
  %v382 = vsel %vm150, %v107, 0.0
  %383 = vadd.xlane.f32.xlu0 %v382
  %v384 = vpop.xlane.xlu0 %383
  %v385 = vsel %vm150, %v108, 0.0
  %386 = vadd.xlane.f32.xlu0 %v385
  %v387 = vpop.xlane.xlu0 %386
  %v388 = vsel %vm150, %v109, 0.0
  %389 = vadd.xlane.f32.xlu0 %v388
  %v390 = vpop.xlane.xlu0 %389
  %v391 = vsel %vm150, %v110, 0.0
  %392 = vadd.xlane.f32.xlu0 %v391
  %v393 = vpop.xlane.xlu0 %392
  %v394 = vsel %vm150, %v111, 0.0
  %395 = vadd.xlane.f32.xlu0 %v394
  %v396 = vpop.xlane.xlu0 %395
  %v397 = vsel %vm150, %v112, 0.0
  %398 = vadd.xlane.f32.xlu0 %v397
  %v399 = vpop.xlane.xlu0 %398
  %v400 = vsel %vm150, %v113, 0.0
  %401 = vadd.xlane.f32.xlu0 %v400
  %v402 = vpop.xlane.xlu0 %401
  %v403 = vsel %vm150, %v114, 0.0
  %404 = vadd.xlane.f32.xlu0 %v403
  %v405 = vpop.xlane.xlu0 %404
  %v406 = vsel %vm150, %v115, 0.0
  %407 = vadd.xlane.f32.xlu0 %v406
  %v408 = vpop.xlane.xlu0 %407
  %v409 = vsel %vm150, %v116, 0.0
  %410 = vadd.xlane.f32.xlu0 %v409
  %v411 = vpop.xlane.xlu0 %410
  %v412 = vsel %vm150, %v117, 0.0
  %413 = vadd.xlane.f32.xlu0 %v412
  %v414 = vpop.xlane.xlu0 %413
  %v415 = vsel %vm150, %v118, 0.0
  %416 = vadd.xlane.f32.xlu0 %v415
  %v417 = vpop.xlane.xlu0 %416
  %v418 = vsel %vm150, %v119, 0.0
  %419 = vadd.xlane.f32.xlu0 %v418
  %v420 = vpop.xlane.xlu0 %419
  %v421 = vsel %vm150, %v120, 0.0
  %422 = vadd.xlane.f32.xlu0 %v421
  %v423 = vpop.xlane.xlu0 %422
  %v424 = vsel %vm150, %v121, 0.0
  %425 = vadd.xlane.f32.xlu0 %v424
  %v426 = vpop.xlane.xlu0 %425
  %v427 = vsel %vm150, %v122, 0.0
  %428 = vadd.xlane.f32.xlu0 %v427
  %v429 = vpop.xlane.xlu0 %428
  %v430 = vsel %vm150, %v123, 0.0
  %431 = vadd.xlane.f32.xlu0 %v430
  %v432 = vpop.xlane.xlu0 %431
  %v433 = vsel %vm150, %v124, 0.0
  %434 = vadd.xlane.f32.xlu0 %v433
  %v435 = vpop.xlane.xlu0 %434
  %v436 = vsel %vm150, %v125, 0.0
  %437 = vadd.xlane.f32.xlu0 %v436
  %v438 = vpop.xlane.xlu0 %437
  %v439 = vsel %vm150, %v126, 0.0
  %440 = vadd.xlane.f32.xlu0 %v439
  %v441 = vpop.xlane.xlu0 %440
  %v442 = vsel %vm150, %v127, 0.0
  %443 = vadd.xlane.f32.xlu0 %v442
  %v444 = vpop.xlane.xlu0 %443
  %v445 = vsel %vm150, %v128, 0.0
  %446 = vadd.xlane.f32.xlu0 %v445
  %v447 = vpop.xlane.xlu0 %446
  %v448 = vsel %vm150, %v129, 0.0
  %449 = vadd.xlane.f32.xlu0 %v448
  %v450 = vpop.xlane.xlu0 %449
  %v451 = vsel %vm150, %v130, 0.0
  %452 = vadd.xlane.f32.xlu0 %v451
  %v453 = vpop.xlane.xlu0 %452
  %v454 = vsel %vm150, %v131, 0.0
  %455 = vadd.xlane.f32.xlu0 %v454
  %v456 = vpop.xlane.xlu0 %455
  %v457 = vsel %vm150, %v132, 0.0
  %458 = vadd.xlane.f32.xlu0 %v457
  %v459 = vpop.xlane.xlu0 %458
  %v460 = vsel %vm150, %v133, 0.0
  %461 = vadd.xlane.f32.xlu0 %v460
  %v462 = vpop.xlane.xlu0 %461
  %v463 = vsel %vm150, %v134, 0.0
  %464 = vadd.xlane.f32.xlu0 %v463
  %v465 = vpop.xlane.xlu0 %464
  %v466 = vsel %vm150, %v135, 0.0
  %467 = vadd.xlane.f32.xlu0 %v466
  %v468 = vpop.xlane.xlu0 %467
  %v469 = vsel %vm150, %v136, 0.0
  %470 = vadd.xlane.f32.xlu0 %v469
  %v471 = vpop.xlane.xlu0 %470
  %v472 = vsel %vm150, %v137, 0.0
  %473 = vadd.xlane.f32.xlu0 %v472
  %v474 = vpop.xlane.xlu0 %473
  %v475 = vsel %vm150, %v138, 0.0
  %476 = vadd.xlane.f32.xlu0 %v475
  %v477 = vpop.xlane.xlu0 %476
  %v478 = vsel %vm150, %v139, 0.0
  %479 = vadd.xlane.f32.xlu0 %v478
  %v480 = vpop.xlane.xlu0 %479
  %v481 = vsel %vm150, %v140, 0.0
  %482 = vadd.xlane.f32.xlu0 %v481
  %v483 = vpop.xlane.xlu0 %482
  %v484 = vsel %vm150, %v141, 0.0
  %485 = vadd.xlane.f32.xlu0 %v484
  %v486 = vpop.xlane.xlu0 %485
  %v487 = vsel %vm150, %v142, 0.0
  %488 = vadd.xlane.f32.xlu0 %v487
  %v489 = vpop.xlane.xlu0 %488
  %v490 = vsel %vm150, %v143, 0.0
  %491 = vadd.xlane.f32.xlu0 %v490
  %v492 = vpop.xlane.xlu0 %491
  %v493 = vsel %vm150, %v144, 0.0
  %494 = vadd.xlane.f32.xlu0 %v493
  %v495 = vpop.xlane.xlu0 %494
  %v496 = vsel %vm150, %v145, 0.0
  %497 = vadd.xlane.f32.xlu0 %v496
  %v498 = vpop.xlane.xlu0 %497
  %v499 = vsel %vm150, %v146, 0.0
  %500 = vadd.xlane.f32.xlu0 %v499
  %v501 = vpop.xlane.xlu0 %500
  %v502 = vsel %vm150, %v147, 0.0
  %503 = vadd.xlane.f32.xlu0 %v502
  %v504 = vpop.xlane.xlu0 %503
  %v505 = vsel %vm150, %v148, 0.0
  %506 = vadd.xlane.f32.xlu0 %v505
  %v507 = vpop.xlane.xlu0 %506
  %v508 = vsel %vm150, %v149, 0.0
  %509 = vadd.xlane.f32.xlu0 %v508
  %v510 = vpop.xlane.xlu0 %509
  %v511 = vmul.f32 %v153, 0.020408163
  %v512 = vmul.f32 %v156, 0.020408163
  %v513 = vmul.f32 %v159, 0.020408163
  %v514 = vmul.f32 %v162, 0.020408163
  %v515 = vmul.f32 %v165, 0.020408163
  %v516 = vmul.f32 %v168, 0.020408163
  %v517 = vmul.f32 %v171, 0.020408163
  %v518 = vmul.f32 %v174, 0.020408163
  %v519 = vmul.f32 %v177, 0.020408163
  %v520 = vmul.f32 %v180, 0.020408163
  %v521 = vmul.f32 %v183, 0.020408163
  %v522 = vmul.f32 %v186, 0.020408163
  %v523 = vmul.f32 %v189, 0.020408163
  %v524 = vmul.f32 %v192, 0.020408163
  %v525 = vmul.f32 %v195, 0.020408163
  %v526 = vmul.f32 %v198, 0.020408163
  %v527 = vmul.f32 %v201, 0.020408163
  %v528 = vmul.f32 %v204, 0.020408163
  %v529 = vmul.f32 %v207, 0.020408163
  %v530 = vmul.f32 %v210, 0.020408163
  %v531 = vmul.f32 %v213, 0.020408163
  %v532 = vmul.f32 %v216, 0.020408163
  %v533 = vmul.f32 %v219, 0.020408163
  %v534 = vmul.f32 %v222, 0.020408163
  %v535 = vmul.f32 %v225, 0.020408163
  %v536 = vmul.f32 %v228, 0.020408163
  %v537 = vmul.f32 %v231, 0.020408163
  %v538 = vmul.f32 %v234, 0.020408163
  %v539 = vmul.f32 %v237, 0.020408163
  %v540 = vmul.f32 %v240, 0.020408163
  %v541 = vmul.f32 %v243, 0.020408163
  %v542 = vmul.f32 %v246, 0.020408163
  %v543 = vmul.f32 %v249, 0.020408163
  %v544 = vmul.f32 %v252, 0.020408163
  %v545 = vmul.f32 %v255, 0.020408163
  %v546 = vmul.f32 %v258, 0.020408163
  %v547 = vmul.f32 %v261, 0.020408163
  %v548 = vmul.f32 %v264, 0.020408163
  %v549 = vmul.f32 %v267, 0.020408163
  %v550 = vmul.f32 %v270, 0.020408163
  %v551 = vmul.f32 %v273, 0.020408163
  %v552 = vmul.f32 %v276, 0.020408163
  %v553 = vmul.f32 %v279, 0.020408163
  %v554 = vmul.f32 %v282, 0.020408163
  %v555 = vmul.f32 %v285, 0.020408163
  %v556 = vmul.f32 %v288, 0.020408163
  %v557 = vmul.f32 %v291, 0.020408163
  %v558 = vmul.f32 %v294, 0.020408163
  %v559 = vmul.f32 %v297, 0.020408163
  %v560 = vmul.f32 %v300, 0.020408163
  %v561 = vmul.f32 %v303, 0.020408163
  %v562 = vmul.f32 %v306, 0.020408163
  %v563 = vmul.f32 %v309, 0.020408163
  %v564 = vmul.f32 %v312, 0.020408163
  %v565 = vmul.f32 %v315, 0.020408163
  %v566 = vmul.f32 %v318, 0.020408163
  %v567 = vmul.f32 %v321, 0.020408163
  %v568 = vmul.f32 %v324, 0.020408163
  %v569 = vmul.f32 %v327, 0.020408163
  %v570 = vmul.f32 %v330, 0.020408163
  %v571 = vmul.f32 %v333, 0.020408163
  %v572 = vmul.f32 %v336, 0.020408163
  %v573 = vmul.f32 %v339, 0.020408163
  %v574 = vmul.f32 %v342, 0.020408163
  %v575 = vmul.f32 %v345, 0.020408163
  %v576 = vmul.f32 %v348, 0.020408163
  %v577 = vmul.f32 %v351, 0.020408163
  %v578 = vmul.f32 %v354, 0.020408163
  %v579 = vmul.f32 %v357, 0.020408163
  %v580 = vmul.f32 %v360, 0.020408163
  %v581 = vmul.f32 %v363, 0.020408163
  %v582 = vmul.f32 %v366, 0.020408163
  %v583 = vmul.f32 %v369, 0.020408163
  %v584 = vmul.f32 %v372, 0.020408163
  %v585 = vmul.f32 %v375, 0.020408163
  %v586 = vmul.f32 %v378, 0.020408163
  %v587 = vmul.f32 %v381, 0.020408163
  %v588 = vmul.f32 %v384, 0.020408163
  %v589 = vmul.f32 %v387, 0.020408163
  %v590 = vmul.f32 %v390, 0.020408163
  %v591 = vmul.f32 %v393, 0.020408163
  %v592 = vmul.f32 %v396, 0.020408163
  %v593 = vmul.f32 %v399, 0.020408163
  %v594 = vmul.f32 %v402, 0.020408163
  %v595 = vmul.f32 %v405, 0.020408163
  %v596 = vmul.f32 %v408, 0.020408163
  %v597 = vmul.f32 %v411, 0.020408163
  %v598 = vmul.f32 %v414, 0.020408163
  %v599 = vmul.f32 %v417, 0.020408163
  %v600 = vmul.f32 %v420, 0.020408163
  %v601 = vmul.f32 %v423, 0.020408163
  %v602 = vmul.f32 %v426, 0.020408163
  %v603 = vmul.f32 %v429, 0.020408163
  %v604 = vmul.f32 %v432, 0.020408163
  %v605 = vmul.f32 %v435, 0.020408163
  %v606 = vmul.f32 %v438, 0.020408163
  %v607 = vmul.f32 %v441, 0.020408163
  %v608 = vmul.f32 %v444, 0.020408163
  %v609 = vmul.f32 %v447, 0.020408163
  %v610 = vmul.f32 %v450, 0.020408163
  %v611 = vmul.f32 %v453, 0.020408163
  %v612 = vmul.f32 %v456, 0.020408163
  %v613 = vmul.f32 %v459, 0.020408163
  %v614 = vmul.f32 %v462, 0.020408163
  %v615 = vmul.f32 %v465, 0.020408163
  %v616 = vmul.f32 %v468, 0.020408163
  %v617 = vmul.f32 %v471, 0.020408163
  %v618 = vmul.f32 %v474, 0.020408163
  %v619 = vmul.f32 %v477, 0.020408163
  %v620 = vmul.f32 %v480, 0.020408163
  %v621 = vmul.f32 %v483, 0.020408163
  %v622 = vmul.f32 %v486, 0.020408163
  %v623 = vmul.f32 %v489, 0.020408163
  %v624 = vmul.f32 %v492, 0.020408163
  %v625 = vmul.f32 %v495, 0.020408163
  %v626 = vmul.f32 %v498, 0.020408163
  %v627 = vmul.f32 %v501, 0.020408163
  %v628 = vmul.f32 %v504, 0.020408163
  %v629 = vmul.f32 %v507, 0.020408163
  %v630 = vmul.f32 %v510, 0.020408163
  %v631 = vsub.f32 %v30, %v511
  %v632 = vsub.f32 %v31, %v512
  %v633 = vsub.f32 %v32, %v513
  %v634 = vsub.f32 %v33, %v514
  %v635 = vsub.f32 %v34, %v515
  %v636 = vsub.f32 %v35, %v516
  %v637 = vsub.f32 %v36, %v517
  %v638 = vsub.f32 %v37, %v518
  %v639 = vsub.f32 %v38, %v519
  %v640 = vsub.f32 %v39, %v520
  %v641 = vsub.f32 %v40, %v521
  %v642 = vsub.f32 %v41, %v522
  %v643 = vsub.f32 %v42, %v523
  %v644 = vsub.f32 %v43, %v524
  %v645 = vsub.f32 %v44, %v525
  %v646 = vsub.f32 %v45, %v526
  %v647 = vsub.f32 %v46, %v527
  %v648 = vsub.f32 %v47, %v528
  %v649 = vsub.f32 %v48, %v529
  %v650 = vsub.f32 %v49, %v530
  %v651 = vsub.f32 %v50, %v531
  %v652 = vsub.f32 %v51, %v532
  %v653 = vsub.f32 %v52, %v533
  %v654 = vsub.f32 %v53, %v534
  %v655 = vsub.f32 %v54, %v535
  %v656 = vsub.f32 %v55, %v536
  %v657 = vsub.f32 %v56, %v537
  %v658 = vsub.f32 %v57, %v538
  %v659 = vsub.f32 %v58, %v539
  %v660 = vsub.f32 %v59, %v540
  %v661 = vsub.f32 %v60, %v541
  %v662 = vsub.f32 %v61, %v542
  %v663 = vsub.f32 %v62, %v543
  %v664 = vsub.f32 %v63, %v544
  %v665 = vsub.f32 %v64, %v545
  %v666 = vsub.f32 %v65, %v546
  %v667 = vsub.f32 %v66, %v547
  %v668 = vsub.f32 %v67, %v548
  %v669 = vsub.f32 %v68, %v549
  %v670 = vsub.f32 %v69, %v550
  %v671 = vsub.f32 %v70, %v551
  %v672 = vsub.f32 %v71, %v552
  %v673 = vsub.f32 %v72, %v553
  %v674 = vsub.f32 %v73, %v554
  %v675 = vsub.f32 %v74, %v555
  %v676 = vsub.f32 %v75, %v556
  %v677 = vsub.f32 %v76, %v557
  %v678 = vsub.f32 %v77, %v558
  %v679 = vsub.f32 %v78, %v559
  %v680 = vsub.f32 %v79, %v560
  %v681 = vsub.f32 %v80, %v561
  %v682 = vsub.f32 %v81, %v562
  %v683 = vsub.f32 %v82, %v563
  %v684 = vsub.f32 %v83, %v564
  %v685 = vsub.f32 %v84, %v565
  %v686 = vsub.f32 %v85, %v566
  %v687 = vsub.f32 %v86, %v567
  %v688 = vsub.f32 %v87, %v568
  %v689 = vsub.f32 %v88, %v569
  %v690 = vsub.f32 %v89, %v570
  %v691 = vsub.f32 %v90, %v571
  %v692 = vsub.f32 %v91, %v572
  %v693 = vsub.f32 %v92, %v573
  %v694 = vsub.f32 %v93, %v574
  %v695 = vsub.f32 %v94, %v575
  %v696 = vsub.f32 %v95, %v576
  %v697 = vsub.f32 %v96, %v577
  %v698 = vsub.f32 %v97, %v578
  %v699 = vsub.f32 %v98, %v579
  %v700 = vsub.f32 %v99, %v580
  %v701 = vsub.f32 %v100, %v581
  %v702 = vsub.f32 %v101, %v582
  %v703 = vsub.f32 %v102, %v583
  %v704 = vsub.f32 %v103, %v584
  %v705 = vsub.f32 %v104, %v585
  %v706 = vsub.f32 %v105, %v586
  %v707 = vsub.f32 %v106, %v587
  %v708 = vsub.f32 %v107, %v588
  %v709 = vsub.f32 %v108, %v589
  %v710 = vsub.f32 %v109, %v590
  %v711 = vsub.f32 %v110, %v591
  %v712 = vsub.f32 %v111, %v592
  %v713 = vsub.f32 %v112, %v593
  %v714 = vsub.f32 %v113, %v594
  %v715 = vsub.f32 %v114, %v595
  %v716 = vsub.f32 %v115, %v596
  %v717 = vsub.f32 %v116, %v597
  %v718 = vsub.f32 %v117, %v598
  %v719 = vsub.f32 %v118, %v599
  %v720 = vsub.f32 %v119, %v600
  %v721 = vsub.f32 %v120, %v601
  %v722 = vsub.f32 %v121, %v602
  %v723 = vsub.f32 %v122, %v603
  %v724 = vsub.f32 %v123, %v604
  %v725 = vsub.f32 %v124, %v605
  %v726 = vsub.f32 %v125, %v606
  %v727 = vsub.f32 %v126, %v607
  %v728 = vsub.f32 %v127, %v608
  %v729 = vsub.f32 %v128, %v609
  %v730 = vsub.f32 %v129, %v610
  %v731 = vsub.f32 %v130, %v611
  %v732 = vsub.f32 %v131, %v612
  %v733 = vsub.f32 %v132, %v613
  %v734 = vsub.f32 %v133, %v614
  %v735 = vsub.f32 %v134, %v615
  %v736 = vsub.f32 %v135, %v616
  %v737 = vsub.f32 %v136, %v617
  %v738 = vsub.f32 %v137, %v618
  %v739 = vsub.f32 %v138, %v619
  %v740 = vsub.f32 %v139, %v620
  %v741 = vsub.f32 %v140, %v621
  %v742 = vsub.f32 %v141, %v622
  %v743 = vsub.f32 %v142, %v623
  %v744 = vsub.f32 %v143, %v624
  %v745 = vsub.f32 %v144, %v625
  %v746 = vsub.f32 %v145, %v626
  %v747 = vsub.f32 %v146, %v627
  %v748 = vsub.f32 %v147, %v628
  %v749 = vsub.f32 %v148, %v629
  %v750 = vsub.f32 %v149, %v630
  %v751 = vmul.f32 %v631, %v631
  %v752 = vmul.f32 %v632, %v632
  %v753 = vmul.f32 %v633, %v633
  %v754 = vmul.f32 %v634, %v634
  %v755 = vmul.f32 %v635, %v635
  %v756 = vmul.f32 %v636, %v636
  %v757 = vmul.f32 %v637, %v637
  %v758 = vmul.f32 %v638, %v638
  %v759 = vmul.f32 %v639, %v639
  %v760 = vmul.f32 %v640, %v640
  %v761 = vmul.f32 %v641, %v641
  %v762 = vmul.f32 %v642, %v642
  %v763 = vmul.f32 %v643, %v643
  %v764 = vmul.f32 %v644, %v644
  %v765 = vmul.f32 %v645, %v645
  %v766 = vmul.f32 %v646, %v646
  %v767 = vmul.f32 %v647, %v647
  %v768 = vmul.f32 %v648, %v648
  %v769 = vmul.f32 %v649, %v649
  %v770 = vmul.f32 %v650, %v650
  %v771 = vmul.f32 %v651, %v651
  %v772 = vmul.f32 %v652, %v652
  %v773 = vmul.f32 %v653, %v653
  %v774 = vmul.f32 %v654, %v654
  %v775 = vmul.f32 %v655, %v655
  %v776 = vmul.f32 %v656, %v656
  %v777 = vmul.f32 %v657, %v657
  %v778 = vmul.f32 %v658, %v658
  %v779 = vmul.f32 %v659, %v659
  %v780 = vmul.f32 %v660, %v660
  %v781 = vmul.f32 %v661, %v661
  %v782 = vmul.f32 %v662, %v662
  %v783 = vmul.f32 %v663, %v663
  %v784 = vmul.f32 %v664, %v664
  %v785 = vmul.f32 %v665, %v665
  %v786 = vmul.f32 %v666, %v666
  %v787 = vmul.f32 %v667, %v667
  %v788 = vmul.f32 %v668, %v668
  %v789 = vmul.f32 %v669, %v669
  %v790 = vmul.f32 %v670, %v670
  %v791 = vmul.f32 %v671, %v671
  %v792 = vmul.f32 %v672, %v672
  %v793 = vmul.f32 %v673, %v673
  %v794 = vmul.f32 %v674, %v674
  %v795 = vmul.f32 %v675, %v675
  %v796 = vmul.f32 %v676, %v676
  %v797 = vmul.f32 %v677, %v677
  %v798 = vmul.f32 %v678, %v678
  %v799 = vmul.f32 %v679, %v679
  %v800 = vmul.f32 %v680, %v680
  %v801 = vmul.f32 %v681, %v681
  %v802 = vmul.f32 %v682, %v682
  %v803 = vmul.f32 %v683, %v683
  %v804 = vmul.f32 %v684, %v684
  %v805 = vmul.f32 %v685, %v685
  %v806 = vmul.f32 %v686, %v686
  %v807 = vmul.f32 %v687, %v687
  %v808 = vmul.f32 %v688, %v688
  %v809 = vmul.f32 %v689, %v689
  %v810 = vmul.f32 %v690, %v690
  %v811 = vmul.f32 %v691, %v691
  %v812 = vmul.f32 %v692, %v692
  %v813 = vmul.f32 %v693, %v693
  %v814 = vmul.f32 %v694, %v694
  %v815 = vmul.f32 %v695, %v695
  %v816 = vmul.f32 %v696, %v696
  %v817 = vmul.f32 %v697, %v697
  %v818 = vmul.f32 %v698, %v698
  %v819 = vmul.f32 %v699, %v699
  %v820 = vmul.f32 %v700, %v700
  %v821 = vmul.f32 %v701, %v701
  %v822 = vmul.f32 %v702, %v702
  %v823 = vmul.f32 %v703, %v703
  %v824 = vmul.f32 %v704, %v704
  %v825 = vmul.f32 %v705, %v705
  %v826 = vmul.f32 %v706, %v706
  %v827 = vmul.f32 %v707, %v707
  %v828 = vmul.f32 %v708, %v708
  %v829 = vmul.f32 %v709, %v709
  %v830 = vmul.f32 %v710, %v710
  %v831 = vmul.f32 %v711, %v711
  %v832 = vmul.f32 %v712, %v712
  %v833 = vmul.f32 %v713, %v713
  %v834 = vmul.f32 %v714, %v714
  %v835 = vmul.f32 %v715, %v715
  %v836 = vmul.f32 %v716, %v716
  %v837 = vmul.f32 %v717, %v717
  %v838 = vmul.f32 %v718, %v718
  %v839 = vmul.f32 %v719, %v719
  %v840 = vmul.f32 %v720, %v720
  %v841 = vmul.f32 %v721, %v721
  %v842 = vmul.f32 %v722, %v722
  %v843 = vmul.f32 %v723, %v723
  %v844 = vmul.f32 %v724, %v724
  %v845 = vmul.f32 %v725, %v725
  %v846 = vmul.f32 %v726, %v726
  %v847 = vmul.f32 %v727, %v727
  %v848 = vmul.f32 %v728, %v728
  %v849 = vmul.f32 %v729, %v729
  %v850 = vmul.f32 %v730, %v730
  %v851 = vmul.f32 %v731, %v731
  %v852 = vmul.f32 %v732, %v732
  %v853 = vmul.f32 %v733, %v733
  %v854 = vmul.f32 %v734, %v734
  %v855 = vmul.f32 %v735, %v735
  %v856 = vmul.f32 %v736, %v736
  %v857 = vmul.f32 %v737, %v737
  %v858 = vmul.f32 %v738, %v738
  %v859 = vmul.f32 %v739, %v739
  %v860 = vmul.f32 %v740, %v740
  %v861 = vmul.f32 %v741, %v741
  %v862 = vmul.f32 %v742, %v742
  %v863 = vmul.f32 %v743, %v743
  %v864 = vmul.f32 %v744, %v744
  %v865 = vmul.f32 %v745, %v745
  %v866 = vmul.f32 %v746, %v746
  %v867 = vmul.f32 %v747, %v747
  %v868 = vmul.f32 %v748, %v748
  %v869 = vmul.f32 %v749, %v749
  %v870 = vmul.f32 %v750, %v750
  %v871 = vsel %vm150, %v751, 0.0
  %872 = vadd.xlane.f32.xlu0 %v871
  %v873 = vpop.xlane.xlu0 %872
  %v874 = vsel %vm150, %v752, 0.0
  %875 = vadd.xlane.f32.xlu0 %v874
  %v876 = vpop.xlane.xlu0 %875
  %v877 = vsel %vm150, %v753, 0.0
  %878 = vadd.xlane.f32.xlu0 %v877
  %v879 = vpop.xlane.xlu0 %878
  %v880 = vsel %vm150, %v754, 0.0
  %881 = vadd.xlane.f32.xlu0 %v880
  %v882 = vpop.xlane.xlu0 %881
  %v883 = vsel %vm150, %v755, 0.0
  %884 = vadd.xlane.f32.xlu0 %v883
  %v885 = vpop.xlane.xlu0 %884
  %v886 = vsel %vm150, %v756, 0.0
  %887 = vadd.xlane.f32.xlu0 %v886
  %v888 = vpop.xlane.xlu0 %887
  %v889 = vsel %vm150, %v757, 0.0
  %890 = vadd.xlane.f32.xlu0 %v889
  %v891 = vpop.xlane.xlu0 %890
  %v892 = vsel %vm150, %v758, 0.0
  %893 = vadd.xlane.f32.xlu0 %v892
  %v894 = vpop.xlane.xlu0 %893
  %v895 = vsel %vm150, %v759, 0.0
  %896 = vadd.xlane.f32.xlu0 %v895
  %v897 = vpop.xlane.xlu0 %896
  %v898 = vsel %vm150, %v760, 0.0
  %899 = vadd.xlane.f32.xlu0 %v898
  %v900 = vpop.xlane.xlu0 %899
  %v901 = vsel %vm150, %v761, 0.0
  %902 = vadd.xlane.f32.xlu0 %v901
  %v903 = vpop.xlane.xlu0 %902
  %v904 = vsel %vm150, %v762, 0.0
  %905 = vadd.xlane.f32.xlu0 %v904
  %v906 = vpop.xlane.xlu0 %905
  %v907 = vsel %vm150, %v763, 0.0
  %908 = vadd.xlane.f32.xlu0 %v907
  %v909 = vpop.xlane.xlu0 %908
  %v910 = vsel %vm150, %v764, 0.0
  %911 = vadd.xlane.f32.xlu0 %v910
  %v912 = vpop.xlane.xlu0 %911
  %v913 = vsel %vm150, %v765, 0.0
  %914 = vadd.xlane.f32.xlu0 %v913
  %v915 = vpop.xlane.xlu0 %914
  %v916 = vsel %vm150, %v766, 0.0
  %917 = vadd.xlane.f32.xlu0 %v916
  %v918 = vpop.xlane.xlu0 %917
  %v919 = vsel %vm150, %v767, 0.0
  %920 = vadd.xlane.f32.xlu0 %v919
  %v921 = vpop.xlane.xlu0 %920
  %v922 = vsel %vm150, %v768, 0.0
  %923 = vadd.xlane.f32.xlu0 %v922
  %v924 = vpop.xlane.xlu0 %923
  %v925 = vsel %vm150, %v769, 0.0
  %926 = vadd.xlane.f32.xlu0 %v925
  %v927 = vpop.xlane.xlu0 %926
  %v928 = vsel %vm150, %v770, 0.0
  %929 = vadd.xlane.f32.xlu0 %v928
  %v930 = vpop.xlane.xlu0 %929
  %v931 = vsel %vm150, %v771, 0.0
  %932 = vadd.xlane.f32.xlu0 %v931
  %v933 = vpop.xlane.xlu0 %932
  %v934 = vsel %vm150, %v772, 0.0
  %935 = vadd.xlane.f32.xlu0 %v934
  %v936 = vpop.xlane.xlu0 %935
  %v937 = vsel %vm150, %v773, 0.0
  %938 = vadd.xlane.f32.xlu0 %v937
  %v939 = vpop.xlane.xlu0 %938
  %v940 = vsel %vm150, %v774, 0.0
  %941 = vadd.xlane.f32.xlu0 %v940
  %v942 = vpop.xlane.xlu0 %941
  %v943 = vsel %vm150, %v775, 0.0
  %944 = vadd.xlane.f32.xlu0 %v943
  %v945 = vpop.xlane.xlu0 %944
  %v946 = vsel %vm150, %v776, 0.0
  %947 = vadd.xlane.f32.xlu0 %v946
  %v948 = vpop.xlane.xlu0 %947
  %v949 = vsel %vm150, %v777, 0.0
  %950 = vadd.xlane.f32.xlu0 %v949
  %v951 = vpop.xlane.xlu0 %950
  %v952 = vsel %vm150, %v778, 0.0
  %953 = vadd.xlane.f32.xlu0 %v952
  %v954 = vpop.xlane.xlu0 %953
  %v955 = vsel %vm150, %v779, 0.0
  %956 = vadd.xlane.f32.xlu0 %v955
  %v957 = vpop.xlane.xlu0 %956
  %v958 = vsel %vm150, %v780, 0.0
  %959 = vadd.xlane.f32.xlu0 %v958
  %v960 = vpop.xlane.xlu0 %959
  %v961 = vsel %vm150, %v781, 0.0
  %962 = vadd.xlane.f32.xlu0 %v961
  %v963 = vpop.xlane.xlu0 %962
  %v964 = vsel %vm150, %v782, 0.0
  %965 = vadd.xlane.f32.xlu0 %v964
  %v966 = vpop.xlane.xlu0 %965
  %v967 = vsel %vm150, %v783, 0.0
  %968 = vadd.xlane.f32.xlu0 %v967
  %v969 = vpop.xlane.xlu0 %968
  %v970 = vsel %vm150, %v784, 0.0
  %971 = vadd.xlane.f32.xlu0 %v970
  %v972 = vpop.xlane.xlu0 %971
  %v973 = vsel %vm150, %v785, 0.0
  %974 = vadd.xlane.f32.xlu0 %v973
  %v975 = vpop.xlane.xlu0 %974
  %v976 = vsel %vm150, %v786, 0.0
  %977 = vadd.xlane.f32.xlu0 %v976
  %v978 = vpop.xlane.xlu0 %977
  %v979 = vsel %vm150, %v787, 0.0
  %980 = vadd.xlane.f32.xlu0 %v979
  %v981 = vpop.xlane.xlu0 %980
  %v982 = vsel %vm150, %v788, 0.0
  %983 = vadd.xlane.f32.xlu0 %v982
  %v984 = vpop.xlane.xlu0 %983
  %v985 = vsel %vm150, %v789, 0.0
  %986 = vadd.xlane.f32.xlu0 %v985
  %v987 = vpop.xlane.xlu0 %986
  %v988 = vsel %vm150, %v790, 0.0
  %989 = vadd.xlane.f32.xlu0 %v988
  %v990 = vpop.xlane.xlu0 %989
  %v991 = vsel %vm150, %v791, 0.0
  %992 = vadd.xlane.f32.xlu0 %v991
  %v993 = vpop.xlane.xlu0 %992
  %v994 = vsel %vm150, %v792, 0.0
  %995 = vadd.xlane.f32.xlu0 %v994
  %v996 = vpop.xlane.xlu0 %995
  %v997 = vsel %vm150, %v793, 0.0
  %998 = vadd.xlane.f32.xlu0 %v997
  %v999 = vpop.xlane.xlu0 %998
  %v1000 = vsel %vm150, %v794, 0.0
  %1001 = vadd.xlane.f32.xlu0 %v1000
  %v1002 = vpop.xlane.xlu0 %1001
  %v1003 = vsel %vm150, %v795, 0.0
  %1004 = vadd.xlane.f32.xlu0 %v1003
  %v1005 = vpop.xlane.xlu0 %1004
  %v1006 = vsel %vm150, %v796, 0.0
  %1007 = vadd.xlane.f32.xlu0 %v1006
  %v1008 = vpop.xlane.xlu0 %1007
  %v1009 = vsel %vm150, %v797, 0.0
  %1010 = vadd.xlane.f32.xlu0 %v1009
  %v1011 = vpop.xlane.xlu0 %1010
  %v1012 = vsel %vm150, %v798, 0.0
  %1013 = vadd.xlane.f32.xlu0 %v1012
  %v1014 = vpop.xlane.xlu0 %1013
  %v1015 = vsel %vm150, %v799, 0.0
  %1016 = vadd.xlane.f32.xlu0 %v1015
  %v1017 = vpop.xlane.xlu0 %1016
  %v1018 = vsel %vm150, %v800, 0.0
  %1019 = vadd.xlane.f32.xlu0 %v1018
  %v1020 = vpop.xlane.xlu0 %1019
  %v1021 = vsel %vm150, %v801, 0.0
  %1022 = vadd.xlane.f32.xlu0 %v1021
  %v1023 = vpop.xlane.xlu0 %1022
  %v1024 = vsel %vm150, %v802, 0.0
  %1025 = vadd.xlane.f32.xlu0 %v1024
  %v1026 = vpop.xlane.xlu0 %1025
  %v1027 = vsel %vm150, %v803, 0.0
  %1028 = vadd.xlane.f32.xlu0 %v1027
  %v1029 = vpop.xlane.xlu0 %1028
  %v1030 = vsel %vm150, %v804, 0.0
  %1031 = vadd.xlane.f32.xlu0 %v1030
  %v1032 = vpop.xlane.xlu0 %1031
  %v1033 = vsel %vm150, %v805, 0.0
  %1034 = vadd.xlane.f32.xlu0 %v1033
  %v1035 = vpop.xlane.xlu0 %1034
  %v1036 = vsel %vm150, %v806, 0.0
  %1037 = vadd.xlane.f32.xlu0 %v1036
  %v1038 = vpop.xlane.xlu0 %1037
  %v1039 = vsel %vm150, %v807, 0.0
  %1040 = vadd.xlane.f32.xlu0 %v1039
  %v1041 = vpop.xlane.xlu0 %1040
  %v1042 = vsel %vm150, %v808, 0.0
  %1043 = vadd.xlane.f32.xlu0 %v1042
  %v1044 = vpop.xlane.xlu0 %1043
  %v1045 = vsel %vm150, %v809, 0.0
  %1046 = vadd.xlane.f32.xlu0 %v1045
  %v1047 = vpop.xlane.xlu0 %1046
  %v1048 = vsel %vm150, %v810, 0.0
  %1049 = vadd.xlane.f32.xlu0 %v1048
  %v1050 = vpop.xlane.xlu0 %1049
  %v1051 = vsel %vm150, %v811, 0.0
  %1052 = vadd.xlane.f32.xlu0 %v1051
  %v1053 = vpop.xlane.xlu0 %1052
  %v1054 = vsel %vm150, %v812, 0.0
  %1055 = vadd.xlane.f32.xlu0 %v1054
  %v1056 = vpop.xlane.xlu0 %1055
  %v1057 = vsel %vm150, %v813, 0.0
  %1058 = vadd.xlane.f32.xlu0 %v1057
  %v1059 = vpop.xlane.xlu0 %1058
  %v1060 = vsel %vm150, %v814, 0.0
  %1061 = vadd.xlane.f32.xlu0 %v1060
  %v1062 = vpop.xlane.xlu0 %1061
  %v1063 = vsel %vm150, %v815, 0.0
  %1064 = vadd.xlane.f32.xlu0 %v1063
  %v1065 = vpop.xlane.xlu0 %1064
  %v1066 = vsel %vm150, %v816, 0.0
  %1067 = vadd.xlane.f32.xlu0 %v1066
  %v1068 = vpop.xlane.xlu0 %1067
  %v1069 = vsel %vm150, %v817, 0.0
  %1070 = vadd.xlane.f32.xlu0 %v1069
  %v1071 = vpop.xlane.xlu0 %1070
  %v1072 = vsel %vm150, %v818, 0.0
  %1073 = vadd.xlane.f32.xlu0 %v1072
  %v1074 = vpop.xlane.xlu0 %1073
  %v1075 = vsel %vm150, %v819, 0.0
  %1076 = vadd.xlane.f32.xlu0 %v1075
  %v1077 = vpop.xlane.xlu0 %1076
  %v1078 = vsel %vm150, %v820, 0.0
  %1079 = vadd.xlane.f32.xlu0 %v1078
  %v1080 = vpop.xlane.xlu0 %1079
  %v1081 = vsel %vm150, %v821, 0.0
  %1082 = vadd.xlane.f32.xlu0 %v1081
  %v1083 = vpop.xlane.xlu0 %1082
  %v1084 = vsel %vm150, %v822, 0.0
  %1085 = vadd.xlane.f32.xlu0 %v1084
  %v1086 = vpop.xlane.xlu0 %1085
  %v1087 = vsel %vm150, %v823, 0.0
  %1088 = vadd.xlane.f32.xlu0 %v1087
  %v1089 = vpop.xlane.xlu0 %1088
  %v1090 = vsel %vm150, %v824, 0.0
  %1091 = vadd.xlane.f32.xlu0 %v1090
  %v1092 = vpop.xlane.xlu0 %1091
  %v1093 = vsel %vm150, %v825, 0.0
  %1094 = vadd.xlane.f32.xlu0 %v1093
  %v1095 = vpop.xlane.xlu0 %1094
  %v1096 = vsel %vm150, %v826, 0.0
  %1097 = vadd.xlane.f32.xlu0 %v1096
  %v1098 = vpop.xlane.xlu0 %1097
  %v1099 = vsel %vm150, %v827, 0.0
  %1100 = vadd.xlane.f32.xlu0 %v1099
  %v1101 = vpop.xlane.xlu0 %1100
  %v1102 = vsel %vm150, %v828, 0.0
  %1103 = vadd.xlane.f32.xlu0 %v1102
  %v1104 = vpop.xlane.xlu0 %1103
  %v1105 = vsel %vm150, %v829, 0.0
  %1106 = vadd.xlane.f32.xlu0 %v1105
  %v1107 = vpop.xlane.xlu0 %1106
  %v1108 = vsel %vm150, %v830, 0.0
  %1109 = vadd.xlane.f32.xlu0 %v1108
  %v1110 = vpop.xlane.xlu0 %1109
  %v1111 = vsel %vm150, %v831, 0.0
  %1112 = vadd.xlane.f32.xlu0 %v1111
  %v1113 = vpop.xlane.xlu0 %1112
  %v1114 = vsel %vm150, %v832, 0.0
  %1115 = vadd.xlane.f32.xlu0 %v1114
  %v1116 = vpop.xlane.xlu0 %1115
  %v1117 = vsel %vm150, %v833, 0.0
  %1118 = vadd.xlane.f32.xlu0 %v1117
  %v1119 = vpop.xlane.xlu0 %1118
  %v1120 = vsel %vm150, %v834, 0.0
  %1121 = vadd.xlane.f32.xlu0 %v1120
  %v1122 = vpop.xlane.xlu0 %1121
  %v1123 = vsel %vm150, %v835, 0.0
  %1124 = vadd.xlane.f32.xlu0 %v1123
  %v1125 = vpop.xlane.xlu0 %1124
  %v1126 = vsel %vm150, %v836, 0.0
  %1127 = vadd.xlane.f32.xlu0 %v1126
  %v1128 = vpop.xlane.xlu0 %1127
  %v1129 = vsel %vm150, %v837, 0.0
  %1130 = vadd.xlane.f32.xlu0 %v1129
  %v1131 = vpop.xlane.xlu0 %1130
  %v1132 = vsel %vm150, %v838, 0.0
  %1133 = vadd.xlane.f32.xlu0 %v1132
  %v1134 = vpop.xlane.xlu0 %1133
  %v1135 = vsel %vm150, %v839, 0.0
  %1136 = vadd.xlane.f32.xlu0 %v1135
  %v1137 = vpop.xlane.xlu0 %1136
  %v1138 = vsel %vm150, %v840, 0.0
  %1139 = vadd.xlane.f32.xlu0 %v1138
  %v1140 = vpop.xlane.xlu0 %1139
  %v1141 = vsel %vm150, %v841, 0.0
  %1142 = vadd.xlane.f32.xlu0 %v1141
  %v1143 = vpop.xlane.xlu0 %1142
  %v1144 = vsel %vm150, %v842, 0.0
  %1145 = vadd.xlane.f32.xlu0 %v1144
  %v1146 = vpop.xlane.xlu0 %1145
  %v1147 = vsel %vm150, %v843, 0.0
  %1148 = vadd.xlane.f32.xlu0 %v1147
  %v1149 = vpop.xlane.xlu0 %1148
  %v1150 = vsel %vm150, %v844, 0.0
  %1151 = vadd.xlane.f32.xlu0 %v1150
  %v1152 = vpop.xlane.xlu0 %1151
  %v1153 = vsel %vm150, %v845, 0.0
  %1154 = vadd.xlane.f32.xlu0 %v1153
  %v1155 = vpop.xlane.xlu0 %1154
  %v1156 = vsel %vm150, %v846, 0.0
  %1157 = vadd.xlane.f32.xlu0 %v1156
  %v1158 = vpop.xlane.xlu0 %1157
  %v1159 = vsel %vm150, %v847, 0.0
  %1160 = vadd.xlane.f32.xlu0 %v1159
  %v1161 = vpop.xlane.xlu0 %1160
  %v1162 = vsel %vm150, %v848, 0.0
  %1163 = vadd.xlane.f32.xlu0 %v1162
  %v1164 = vpop.xlane.xlu0 %1163
  %v1165 = vsel %vm150, %v849, 0.0
  %1166 = vadd.xlane.f32.xlu0 %v1165
  %v1167 = vpop.xlane.xlu0 %1166
  %v1168 = vsel %vm150, %v850, 0.0
  %1169 = vadd.xlane.f32.xlu0 %v1168
  %v1170 = vpop.xlane.xlu0 %1169
  %v1171 = vsel %vm150, %v851, 0.0
  %1172 = vadd.xlane.f32.xlu0 %v1171
  %v1173 = vpop.xlane.xlu0 %1172
  %v1174 = vsel %vm150, %v852, 0.0
  %1175 = vadd.xlane.f32.xlu0 %v1174
  %v1176 = vpop.xlane.xlu0 %1175
  %v1177 = vsel %vm150, %v853, 0.0
  %1178 = vadd.xlane.f32.xlu0 %v1177
  %v1179 = vpop.xlane.xlu0 %1178
  %v1180 = vsel %vm150, %v854, 0.0
  %1181 = vadd.xlane.f32.xlu0 %v1180
  %v1182 = vpop.xlane.xlu0 %1181
  %v1183 = vsel %vm150, %v855, 0.0
  %1184 = vadd.xlane.f32.xlu0 %v1183
  %v1185 = vpop.xlane.xlu0 %1184
  %v1186 = vsel %vm150, %v856, 0.0
  %1187 = vadd.xlane.f32.xlu0 %v1186
  %v1188 = vpop.xlane.xlu0 %1187
  %v1189 = vsel %vm150, %v857, 0.0
  %1190 = vadd.xlane.f32.xlu0 %v1189
  %v1191 = vpop.xlane.xlu0 %1190
  %v1192 = vsel %vm150, %v858, 0.0
  %1193 = vadd.xlane.f32.xlu0 %v1192
  %v1194 = vpop.xlane.xlu0 %1193
  %v1195 = vsel %vm150, %v859, 0.0
  %1196 = vadd.xlane.f32.xlu0 %v1195
  %v1197 = vpop.xlane.xlu0 %1196
  %v1198 = vsel %vm150, %v860, 0.0
  %1199 = vadd.xlane.f32.xlu0 %v1198
  %v1200 = vpop.xlane.xlu0 %1199
  %v1201 = vsel %vm150, %v861, 0.0
  %1202 = vadd.xlane.f32.xlu0 %v1201
  %v1203 = vpop.xlane.xlu0 %1202
  %v1204 = vsel %vm150, %v862, 0.0
  %1205 = vadd.xlane.f32.xlu0 %v1204
  %v1206 = vpop.xlane.xlu0 %1205
  %v1207 = vsel %vm150, %v863, 0.0
  %1208 = vadd.xlane.f32.xlu0 %v1207
  %v1209 = vpop.xlane.xlu0 %1208
  %v1210 = vsel %vm150, %v864, 0.0
  %1211 = vadd.xlane.f32.xlu0 %v1210
  %v1212 = vpop.xlane.xlu0 %1211
  %v1213 = vsel %vm150, %v865, 0.0
  %1214 = vadd.xlane.f32.xlu0 %v1213
  %v1215 = vpop.xlane.xlu0 %1214
  %v1216 = vsel %vm150, %v866, 0.0
  %1217 = vadd.xlane.f32.xlu0 %v1216
  %v1218 = vpop.xlane.xlu0 %1217
  %v1219 = vsel %vm150, %v867, 0.0
  %1220 = vadd.xlane.f32.xlu0 %v1219
  %v1221 = vpop.xlane.xlu0 %1220
  %v1222 = vsel %vm150, %v868, 0.0
  %1223 = vadd.xlane.f32.xlu0 %v1222
  %v1224 = vpop.xlane.xlu0 %1223
  %v1225 = vsel %vm150, %v869, 0.0
  %1226 = vadd.xlane.f32.xlu0 %v1225
  %v1227 = vpop.xlane.xlu0 %1226
  %v1228 = vsel %vm150, %v870, 0.0
  %1229 = vadd.xlane.f32.xlu0 %v1228
  %v1230 = vpop.xlane.xlu0 %1229
  %v1231 = vmul.f32 %v873, 0.020408163
  %v1232 = vmul.f32 %v876, 0.020408163
  %v1233 = vmul.f32 %v879, 0.020408163
  %v1234 = vmul.f32 %v882, 0.020408163
  %v1235 = vmul.f32 %v885, 0.020408163
  %v1236 = vmul.f32 %v888, 0.020408163
  %v1237 = vmul.f32 %v891, 0.020408163
  %v1238 = vmul.f32 %v894, 0.020408163
  %v1239 = vmul.f32 %v897, 0.020408163
  %v1240 = vmul.f32 %v900, 0.020408163
  %v1241 = vmul.f32 %v903, 0.020408163
  %v1242 = vmul.f32 %v906, 0.020408163
  %v1243 = vmul.f32 %v909, 0.020408163
  %v1244 = vmul.f32 %v912, 0.020408163
  %v1245 = vmul.f32 %v915, 0.020408163
  %v1246 = vmul.f32 %v918, 0.020408163
  %v1247 = vmul.f32 %v921, 0.020408163
  %v1248 = vmul.f32 %v924, 0.020408163
  %v1249 = vmul.f32 %v927, 0.020408163
  %v1250 = vmul.f32 %v930, 0.020408163
  %v1251 = vmul.f32 %v933, 0.020408163
  %v1252 = vmul.f32 %v936, 0.020408163
  %v1253 = vmul.f32 %v939, 0.020408163
  %v1254 = vmul.f32 %v942, 0.020408163
  %v1255 = vmul.f32 %v945, 0.020408163
  %v1256 = vmul.f32 %v948, 0.020408163
  %v1257 = vmul.f32 %v951, 0.020408163
  %v1258 = vmul.f32 %v954, 0.020408163
  %v1259 = vmul.f32 %v957, 0.020408163
  %v1260 = vmul.f32 %v960, 0.020408163
  %v1261 = vmul.f32 %v963, 0.020408163
  %v1262 = vmul.f32 %v966, 0.020408163
  %v1263 = vmul.f32 %v969, 0.020408163
  %v1264 = vmul.f32 %v972, 0.020408163
  %v1265 = vmul.f32 %v975, 0.020408163
  %v1266 = vmul.f32 %v978, 0.020408163
  %v1267 = vmul.f32 %v981, 0.020408163
  %v1268 = vmul.f32 %v984, 0.020408163
  %v1269 = vmul.f32 %v987, 0.020408163
  %v1270 = vmul.f32 %v990, 0.020408163
  %v1271 = vmul.f32 %v993, 0.020408163
  %v1272 = vmul.f32 %v996, 0.020408163
  %v1273 = vmul.f32 %v999, 0.020408163
  %v1274 = vmul.f32 %v1002, 0.020408163
  %v1275 = vmul.f32 %v1005, 0.020408163
  %v1276 = vmul.f32 %v1008, 0.020408163
  %v1277 = vmul.f32 %v1011, 0.020408163
  %v1278 = vmul.f32 %v1014, 0.020408163
  %v1279 = vmul.f32 %v1017, 0.020408163
  %v1280 = vmul.f32 %v1020, 0.020408163
  %v1281 = vmul.f32 %v1023, 0.020408163
  %v1282 = vmul.f32 %v1026, 0.020408163
  %v1283 = vmul.f32 %v1029, 0.020408163
  %v1284 = vmul.f32 %v1032, 0.020408163
  %v1285 = vmul.f32 %v1035, 0.020408163
  %v1286 = vmul.f32 %v1038, 0.020408163
  %v1287 = vmul.f32 %v1041, 0.020408163
  %v1288 = vmul.f32 %v1044, 0.020408163
  %v1289 = vmul.f32 %v1047, 0.020408163
  %v1290 = vmul.f32 %v1050, 0.020408163
  %v1291 = vmul.f32 %v1053, 0.020408163
  %v1292 = vmul.f32 %v1056, 0.020408163
  %v1293 = vmul.f32 %v1059, 0.020408163
  %v1294 = vmul.f32 %v1062, 0.020408163
  %v1295 = vmul.f32 %v1065, 0.020408163
  %v1296 = vmul.f32 %v1068, 0.020408163
  %v1297 = vmul.f32 %v1071, 0.020408163
  %v1298 = vmul.f32 %v1074, 0.020408163
  %v1299 = vmul.f32 %v1077, 0.020408163
  %v1300 = vmul.f32 %v1080, 0.020408163
  %v1301 = vmul.f32 %v1083, 0.020408163
  %v1302 = vmul.f32 %v1086, 0.020408163
  %v1303 = vmul.f32 %v1089, 0.020408163
  %v1304 = vmul.f32 %v1092, 0.020408163
  %v1305 = vmul.f32 %v1095, 0.020408163
  %v1306 = vmul.f32 %v1098, 0.020408163
  %v1307 = vmul.f32 %v1101, 0.020408163
  %v1308 = vmul.f32 %v1104, 0.020408163
  %v1309 = vmul.f32 %v1107, 0.020408163
  %v1310 = vmul.f32 %v1110, 0.020408163
  %v1311 = vmul.f32 %v1113, 0.020408163
  %v1312 = vmul.f32 %v1116, 0.020408163
  %v1313 = vmul.f32 %v1119, 0.020408163
  %v1314 = vmul.f32 %v1122, 0.020408163
  %v1315 = vmul.f32 %v1125, 0.020408163
  %v1316 = vmul.f32 %v1128, 0.020408163
  %v1317 = vmul.f32 %v1131, 0.020408163
  %v1318 = vmul.f32 %v1134, 0.020408163
  %v1319 = vmul.f32 %v1137, 0.020408163
  %v1320 = vmul.f32 %v1140, 0.020408163
  %v1321 = vmul.f32 %v1143, 0.020408163
  %v1322 = vmul.f32 %v1146, 0.020408163
  %v1323 = vmul.f32 %v1149, 0.020408163
  %v1324 = vmul.f32 %v1152, 0.020408163
  %v1325 = vmul.f32 %v1155, 0.020408163
  %v1326 = vmul.f32 %v1158, 0.020408163
  %v1327 = vmul.f32 %v1161, 0.020408163
  %v1328 = vmul.f32 %v1164, 0.020408163
  %v1329 = vmul.f32 %v1167, 0.020408163
  %v1330 = vmul.f32 %v1170, 0.020408163
  %v1331 = vmul.f32 %v1173, 0.020408163
  %v1332 = vmul.f32 %v1176, 0.020408163
  %v1333 = vmul.f32 %v1179, 0.020408163
  %v1334 = vmul.f32 %v1182, 0.020408163
  %v1335 = vmul.f32 %v1185, 0.020408163
  %v1336 = vmul.f32 %v1188, 0.020408163
  %v1337 = vmul.f32 %v1191, 0.020408163
  %v1338 = vmul.f32 %v1194, 0.020408163
  %v1339 = vmul.f32 %v1197, 0.020408163
  %v1340 = vmul.f32 %v1200, 0.020408163
  %v1341 = vmul.f32 %v1203, 0.020408163
  %v1342 = vmul.f32 %v1206, 0.020408163
  %v1343 = vmul.f32 %v1209, 0.020408163
  %v1344 = vmul.f32 %v1212, 0.020408163
  %v1345 = vmul.f32 %v1215, 0.020408163
  %v1346 = vmul.f32 %v1218, 0.020408163
  %v1347 = vmul.f32 %v1221, 0.020408163
  %v1348 = vmul.f32 %v1224, 0.020408163
  %v1349 = vmul.f32 %v1227, 0.020408163
  %v1350 = vmul.f32 %v1230, 0.020408163
  %v1351 = vld [vmem:[%s1] sm:$0xff]
  %v1352 = vld [vmem:[%s1 + $0x8] sm:$0xff]
  %v1353 = vld [vmem:[%s1 + $0x10] sm:$0xff]
  %v1354 = vld [vmem:[%s1 + $0x18] sm:$0xff]
  %v1355 = vld [vmem:[%s1 + $0x20] sm:$0xff]
  %v1356 = vld [vmem:[%s1 + $0x28] sm:$0xff]
  %v1357 = vld [vmem:[%s1 + $0x30] sm:$0xff]
  %v1358 = vld [vmem:[%s1 + $0x38] sm:$0xff]
  %v1359 = vld [vmem:[%s1 + $0x40] sm:$0xff]
  %v1360 = vld [vmem:[%s1 + $0x48] sm:$0xff]
  %v1361 = vld [vmem:[%s1 + $0x50] sm:$0xff]
  %v1362 = vld [vmem:[%s1 + $0x58] sm:$0xff]
  %v1363 = vld [vmem:[%s1 + $0x60] sm:$0xff]
  %v1364 = vld [vmem:[%s1 + $0x68] sm:$0xff]
  %v1365 = vld [vmem:[%s1 + $0x70] sm:$0xff]
  %v1366 = vld [vmem:[%s1 + $0x78] sm:$0xff]
  %v1367 = vld [vmem:[%s1 + $0x80] sm:$0xff]
  %v1368 = vld [vmem:[%s1 + $0x88] sm:$0xff]
  %v1369 = vld [vmem:[%s1 + $0x90] sm:$0xff]
  %v1370 = vld [vmem:[%s1 + $0x98] sm:$0xff]
  %v1371 = vld [vmem:[%s1 + $0xa0] sm:$0xff]
  %v1372 = vld [vmem:[%s1 + $0xa8] sm:$0xff]
  %v1373 = vld [vmem:[%s1 + $0xb0] sm:$0xff]
  %v1374 = vld [vmem:[%s1 + $0xb8] sm:$0xff]
  %v1375 = vld [vmem:[%s1 + $0xc0] sm:$0xff]
  %v1376 = vld [vmem:[%s1 + $0xc8] sm:$0xff]
  %v1377 = vld [vmem:[%s1 + $0xd0] sm:$0xff]
  %v1378 = vld [vmem:[%s1 + $0xd8] sm:$0xff]
  %v1379 = vld [vmem:[%s1 + $0xe0] sm:$0xff]
  %v1380 = vld [vmem:[%s1 + $0xe8] sm:$0xff]
  %v1381 = vld [vmem:[%s1 + $0xf0] sm:$0xff]
  %v1382 = vld [vmem:[%s1 + $0xf8] sm:$0xff]
  %v1383 = vld [vmem:[%s1 + $0x100] sm:$0xff]
  %v1384 = vld [vmem:[%s1 + $0x108] sm:$0xff]
  %v1385 = vld [vmem:[%s1 + $0x110] sm:$0xff]
  %v1386 = vld [vmem:[%s1 + $0x118] sm:$0xff]
  %v1387 = vld [vmem:[%s1 + $0x120] sm:$0xff]
  %v1388 = vld [vmem:[%s1 + $0x128] sm:$0xff]
  %v1389 = vld [vmem:[%s1 + $0x130] sm:$0xff]
  %v1390 = vld [vmem:[%s1 + $0x138] sm:$0xff]
  %v1391 = vld [vmem:[%s1 + $0x140] sm:$0xff]
  %v1392 = vld [vmem:[%s1 + $0x148] sm:$0xff]
  %v1393 = vld [vmem:[%s1 + $0x150] sm:$0xff]
  %v1394 = vld [vmem:[%s1 + $0x158] sm:$0xff]
  %v1395 = vld [vmem:[%s1 + $0x160] sm:$0xff]
  %v1396 = vld [vmem:[%s1 + $0x168] sm:$0xff]
  %v1397 = vld [vmem:[%s1 + $0x170] sm:$0xff]
  %v1398 = vld [vmem:[%s1 + $0x178] sm:$0xff]
  %v1399 = vld [vmem:[%s1 + $0x180] sm:$0xff]
  %v1400 = vld [vmem:[%s1 + $0x188] sm:$0xff]
  %v1401 = vld [vmem:[%s1 + $0x190] sm:$0xff]
  %v1402 = vld [vmem:[%s1 + $0x198] sm:$0xff]
  %v1403 = vld [vmem:[%s1 + $0x1a0] sm:$0xff]
  %v1404 = vld [vmem:[%s1 + $0x1a8] sm:$0xff]
  %v1405 = vld [vmem:[%s1 + $0x1b0] sm:$0xff]
  %v1406 = vld [vmem:[%s1 + $0x1b8] sm:$0xff]
  %v1407 = vld [vmem:[%s1 + $0x1c0] sm:$0xff]
  %v1408 = vld [vmem:[%s1 + $0x1c8] sm:$0xff]
  %v1409 = vld [vmem:[%s1 + $0x1d0] sm:$0xff]
  %v1410 = vld [vmem:[%s1 + $0x1d8] sm:$0xff]
  %v1411 = vld [vmem:[%s1 + $0x1e0] sm:$0xff]
  %v1412 = vld [vmem:[%s1 + $0x1e8] sm:$0xff]
  %v1413 = vld [vmem:[%s1 + $0x1f0] sm:$0xff]
  %v1414 = vld [vmem:[%s1 + $0x1f8] sm:$0xff]
  %v1415 = vld [vmem:[%s1 + $0x200] sm:$0xff]
  %v1416 = vld [vmem:[%s1 + $0x208] sm:$0xff]
  %v1417 = vld [vmem:[%s1 + $0x210] sm:$0xff]
  %v1418 = vld [vmem:[%s1 + $0x218] sm:$0xff]
  %v1419 = vld [vmem:[%s1 + $0x220] sm:$0xff]
  %v1420 = vld [vmem:[%s1 + $0x228] sm:$0xff]
  %v1421 = vld [vmem:[%s1 + $0x230] sm:$0xff]
  %v1422 = vld [vmem:[%s1 + $0x238] sm:$0xff]
  %v1423 = vld [vmem:[%s1 + $0x240] sm:$0xff]
  %v1424 = vld [vmem:[%s1 + $0x248] sm:$0xff]
  %v1425 = vld [vmem:[%s1 + $0x250] sm:$0xff]
  %v1426 = vld [vmem:[%s1 + $0x258] sm:$0xff]
  %v1427 = vld [vmem:[%s1 + $0x260] sm:$0xff]
  %v1428 = vld [vmem:[%s1 + $0x268] sm:$0xff]
  %v1429 = vld [vmem:[%s1 + $0x270] sm:$0xff]
  %v1430 = vld [vmem:[%s1 + $0x278] sm:$0xff]
  %v1431 = vld [vmem:[%s1 + $0x280] sm:$0xff]
  %v1432 = vld [vmem:[%s1 + $0x288] sm:$0xff]
  %v1433 = vld [vmem:[%s1 + $0x290] sm:$0xff]
  %v1434 = vld [vmem:[%s1 + $0x298] sm:$0xff]
  %v1435 = vld [vmem:[%s1 + $0x2a0] sm:$0xff]
  %v1436 = vld [vmem:[%s1 + $0x2a8] sm:$0xff]
  %v1437 = vld [vmem:[%s1 + $0x2b0] sm:$0xff]
  %v1438 = vld [vmem:[%s1 + $0x2b8] sm:$0xff]
  %v1439 = vld [vmem:[%s1 + $0x2c0] sm:$0xff]
  %v1440 = vld [vmem:[%s1 + $0x2c8] sm:$0xff]
  %v1441 = vld [vmem:[%s1 + $0x2d0] sm:$0xff]
  %v1442 = vld [vmem:[%s1 + $0x2d8] sm:$0xff]
  %v1443 = vld [vmem:[%s1 + $0x2e0] sm:$0xff]
  %v1444 = vld [vmem:[%s1 + $0x2e8] sm:$0xff]
  %v1445 = vld [vmem:[%s1 + $0x2f0] sm:$0xff]
  %v1446 = vld [vmem:[%s1 + $0x2f8] sm:$0xff]
  %v1447 = vld [vmem:[%s1 + $0x300] sm:$0xff]
  %v1448 = vld [vmem:[%s1 + $0x308] sm:$0xff]
  %v1449 = vld [vmem:[%s1 + $0x310] sm:$0xff]
  %v1450 = vld [vmem:[%s1 + $0x318] sm:$0xff]
  %v1451 = vld [vmem:[%s1 + $0x320] sm:$0xff]
  %v1452 = vld [vmem:[%s1 + $0x328] sm:$0xff]
  %v1453 = vld [vmem:[%s1 + $0x330] sm:$0xff]
  %v1454 = vld [vmem:[%s1 + $0x338] sm:$0xff]
  %v1455 = vld [vmem:[%s1 + $0x340] sm:$0xff]
  %v1456 = vld [vmem:[%s1 + $0x348] sm:$0xff]
  %v1457 = vld [vmem:[%s1 + $0x350] sm:$0xff]
  %v1458 = vld [vmem:[%s1 + $0x358] sm:$0xff]
  %v1459 = vld [vmem:[%s1 + $0x360] sm:$0xff]
  %v1460 = vld [vmem:[%s1 + $0x368] sm:$0xff]
  %v1461 = vld [vmem:[%s1 + $0x370] sm:$0xff]
  %v1462 = vld [vmem:[%s1 + $0x378] sm:$0xff]
  %v1463 = vld [vmem:[%s1 + $0x380] sm:$0xff]
  %v1464 = vld [vmem:[%s1 + $0x388] sm:$0xff]
  %v1465 = vld [vmem:[%s1 + $0x390] sm:$0xff]
  %v1466 = vld [vmem:[%s1 + $0x398] sm:$0xff]
  %v1467 = vld [vmem:[%s1 + $0x3a0] sm:$0xff]
  %v1468 = vld [vmem:[%s1 + $0x3a8] sm:$0xff]
  %v1469 = vld [vmem:[%s1 + $0x3b0] sm:$0xff]
  %v1470 = vld [vmem:[%s1 + $0x3b8] sm:$0xff]
  %v1471 = vadd.f32 %v1231, 1e-05
  %v1472 = vadd.f32 %v1232, 1e-05
  %v1473 = vadd.f32 %v1233, 1e-05
  %v1474 = vadd.f32 %v1234, 1e-05
  %v1475 = vadd.f32 %v1235, 1e-05
  %v1476 = vadd.f32 %v1236, 1e-05
  %v1477 = vadd.f32 %v1237, 1e-05
  %v1478 = vadd.f32 %v1238, 1e-05
  %v1479 = vadd.f32 %v1239, 1e-05
  %v1480 = vadd.f32 %v1240, 1e-05
  %v1481 = vadd.f32 %v1241, 1e-05
  %v1482 = vadd.f32 %v1242, 1e-05
  %v1483 = vadd.f32 %v1243, 1e-05
  %v1484 = vadd.f32 %v1244, 1e-05
  %v1485 = vadd.f32 %v1245, 1e-05
  %v1486 = vadd.f32 %v1246, 1e-05
  %v1487 = vadd.f32 %v1247, 1e-05
  %v1488 = vadd.f32 %v1248, 1e-05
  %v1489 = vadd.f32 %v1249, 1e-05
  %v1490 = vadd.f32 %v1250, 1e-05
  %v1491 = vadd.f32 %v1251, 1e-05
  %v1492 = vadd.f32 %v1252, 1e-05
  %v1493 = vadd.f32 %v1253, 1e-05
  %v1494 = vadd.f32 %v1254, 1e-05
  %v1495 = vadd.f32 %v1255, 1e-05
  %v1496 = vadd.f32 %v1256, 1e-05
  %v1497 = vadd.f32 %v1257, 1e-05
  %v1498 = vadd.f32 %v1258, 1e-05
  %v1499 = vadd.f32 %v1259, 1e-05
  %v1500 = vadd.f32 %v1260, 1e-05
  %v1501 = vadd.f32 %v1261, 1e-05
  %v1502 = vadd.f32 %v1262, 1e-05
  %v1503 = vadd.f32 %v1263, 1e-05
  %v1504 = vadd.f32 %v1264, 1e-05
  %v1505 = vadd.f32 %v1265, 1e-05
  %v1506 = vadd.f32 %v1266, 1e-05
  %v1507 = vadd.f32 %v1267, 1e-05
  %v1508 = vadd.f32 %v1268, 1e-05
  %v1509 = vadd.f32 %v1269, 1e-05
  %v1510 = vadd.f32 %v1270, 1e-05
  %v1511 = vadd.f32 %v1271, 1e-05
  %v1512 = vadd.f32 %v1272, 1e-05
  %v1513 = vadd.f32 %v1273, 1e-05
  %v1514 = vadd.f32 %v1274, 1e-05
  %v1515 = vadd.f32 %v1275, 1e-05
  %v1516 = vadd.f32 %v1276, 1e-05
  %v1517 = vadd.f32 %v1277, 1e-05
  %v1518 = vadd.f32 %v1278, 1e-05
  %v1519 = vadd.f32 %v1279, 1e-05
  %v1520 = vadd.f32 %v1280, 1e-05
  %v1521 = vadd.f32 %v1281, 1e-05
  %v1522 = vadd.f32 %v1282, 1e-05
  %v1523 = vadd.f32 %v1283, 1e-05
  %v1524 = vadd.f32 %v1284, 1e-05
  %v1525 = vadd.f32 %v1285, 1e-05
  %v1526 = vadd.f32 %v1286, 1e-05
  %v1527 = vadd.f32 %v1287, 1e-05
  %v1528 = vadd.f32 %v1288, 1e-05
  %v1529 = vadd.f32 %v1289, 1e-05
  %v1530 = vadd.f32 %v1290, 1e-05
  %v1531 = vadd.f32 %v1291, 1e-05
  %v1532 = vadd.f32 %v1292, 1e-05
  %v1533 = vadd.f32 %v1293, 1e-05
  %v1534 = vadd.f32 %v1294, 1e-05
  %v1535 = vadd.f32 %v1295, 1e-05
  %v1536 = vadd.f32 %v1296, 1e-05
  %v1537 = vadd.f32 %v1297, 1e-05
  %v1538 = vadd.f32 %v1298, 1e-05
  %v1539 = vadd.f32 %v1299, 1e-05
  %v1540 = vadd.f32 %v1300, 1e-05
  %v1541 = vadd.f32 %v1301, 1e-05
  %v1542 = vadd.f32 %v1302, 1e-05
  %v1543 = vadd.f32 %v1303, 1e-05
  %v1544 = vadd.f32 %v1304, 1e-05
  %v1545 = vadd.f32 %v1305, 1e-05
  %v1546 = vadd.f32 %v1306, 1e-05
  %v1547 = vadd.f32 %v1307, 1e-05
  %v1548 = vadd.f32 %v1308, 1e-05
  %v1549 = vadd.f32 %v1309, 1e-05
  %v1550 = vadd.f32 %v1310, 1e-05
  %v1551 = vadd.f32 %v1311, 1e-05
  %v1552 = vadd.f32 %v1312, 1e-05
  %v1553 = vadd.f32 %v1313, 1e-05
  %v1554 = vadd.f32 %v1314, 1e-05
  %v1555 = vadd.f32 %v1315, 1e-05
  %v1556 = vadd.f32 %v1316, 1e-05
  %v1557 = vadd.f32 %v1317, 1e-05
  %v1558 = vadd.f32 %v1318, 1e-05
  %v1559 = vadd.f32 %v1319, 1e-05
  %v1560 = vadd.f32 %v1320, 1e-05
  %v1561 = vadd.f32 %v1321, 1e-05
  %v1562 = vadd.f32 %v1322, 1e-05
  %v1563 = vadd.f32 %v1323, 1e-05
  %v1564 = vadd.f32 %v1324, 1e-05
  %v1565 = vadd.f32 %v1325, 1e-05
  %v1566 = vadd.f32 %v1326, 1e-05
  %v1567 = vadd.f32 %v1327, 1e-05
  %v1568 = vadd.f32 %v1328, 1e-05
  %v1569 = vadd.f32 %v1329, 1e-05
  %v1570 = vadd.f32 %v1330, 1e-05
  %v1571 = vadd.f32 %v1331, 1e-05
  %v1572 = vadd.f32 %v1332, 1e-05
  %v1573 = vadd.f32 %v1333, 1e-05
  %v1574 = vadd.f32 %v1334, 1e-05
  %v1575 = vadd.f32 %v1335, 1e-05
  %v1576 = vadd.f32 %v1336, 1e-05
  %v1577 = vadd.f32 %v1337, 1e-05
  %v1578 = vadd.f32 %v1338, 1e-05
  %v1579 = vadd.f32 %v1339, 1e-05
  %v1580 = vadd.f32 %v1340, 1e-05
  %v1581 = vadd.f32 %v1341, 1e-05
  %v1582 = vadd.f32 %v1342, 1e-05
  %v1583 = vadd.f32 %v1343, 1e-05
  %v1584 = vadd.f32 %v1344, 1e-05
  %v1585 = vadd.f32 %v1345, 1e-05
  %v1586 = vadd.f32 %v1346, 1e-05
  %v1587 = vadd.f32 %v1347, 1e-05
  %v1588 = vadd.f32 %v1348, 1e-05
  %v1589 = vadd.f32 %v1349, 1e-05
  %v1590 = vadd.f32 %v1350, 1e-05
  %v1591 = vrsqrt.pop %v1471
  %v1592 = vrsqrt.pop %v1472
  %v1593 = vrsqrt.pop %v1473
  %v1594 = vrsqrt.pop %v1474
  %v1595 = vrsqrt.pop %v1475
  %v1596 = vrsqrt.pop %v1476
  %v1597 = vrsqrt.pop %v1477
  %v1598 = vrsqrt.pop %v1478
  %v1599 = vrsqrt.pop %v1479
  %v1600 = vrsqrt.pop %v1480
  %v1601 = vrsqrt.pop %v1481
  %v1602 = vrsqrt.pop %v1482
  %v1603 = vrsqrt.pop %v1483
  %v1604 = vrsqrt.pop %v1484
  %v1605 = vrsqrt.pop %v1485
  %v1606 = vrsqrt.pop %v1486
  %v1607 = vrsqrt.pop %v1487
  %v1608 = vrsqrt.pop %v1488
  %v1609 = vrsqrt.pop %v1489
  %v1610 = vrsqrt.pop %v1490
  %v1611 = vrsqrt.pop %v1491
  %v1612 = vrsqrt.pop %v1492
  %v1613 = vrsqrt.pop %v1493
  %v1614 = vrsqrt.pop %v1494
  %v1615 = vrsqrt.pop %v1495
  %v1616 = vrsqrt.pop %v1496
  %v1617 = vrsqrt.pop %v1497
  %v1618 = vrsqrt.pop %v1498
  %v1619 = vrsqrt.pop %v1499
  %v1620 = vrsqrt.pop %v1500
  %v1621 = vrsqrt.pop %v1501
  %v1622 = vrsqrt.pop %v1502
  %v1623 = vrsqrt.pop %v1503
  %v1624 = vrsqrt.pop %v1504
  %v1625 = vrsqrt.pop %v1505
  %v1626 = vrsqrt.pop %v1506
  %v1627 = vrsqrt.pop %v1507
  %v1628 = vrsqrt.pop %v1508
  %v1629 = vrsqrt.pop %v1509
  %v1630 = vrsqrt.pop %v1510
  %v1631 = vrsqrt.pop %v1511
  %v1632 = vrsqrt.pop %v1512
  %v1633 = vrsqrt.pop %v1513
  %v1634 = vrsqrt.pop %v1514
  %v1635 = vrsqrt.pop %v1515
  %v1636 = vrsqrt.pop %v1516
  %v1637 = vrsqrt.pop %v1517
  %v1638 = vrsqrt.pop %v1518
  %v1639 = vrsqrt.pop %v1519
  %v1640 = vrsqrt.pop %v1520
  %v1641 = vrsqrt.pop %v1521
  %v1642 = vrsqrt.pop %v1522
  %v1643 = vrsqrt.pop %v1523
  %v1644 = vrsqrt.pop %v1524
  %v1645 = vrsqrt.pop %v1525
  %v1646 = vrsqrt.pop %v1526
  %v1647 = vrsqrt.pop %v1527
  %v1648 = vrsqrt.pop %v1528
  %v1649 = vrsqrt.pop %v1529
  %v1650 = vrsqrt.pop %v1530
  %v1651 = vrsqrt.pop %v1531
  %v1652 = vrsqrt.pop %v1532
  %v1653 = vrsqrt.pop %v1533
  %v1654 = vrsqrt.pop %v1534
  %v1655 = vrsqrt.pop %v1535
  %v1656 = vrsqrt.pop %v1536
  %v1657 = vrsqrt.pop %v1537
  %v1658 = vrsqrt.pop %v1538
  %v1659 = vrsqrt.pop %v1539
  %v1660 = vrsqrt.pop %v1540
  %v1661 = vrsqrt.pop %v1541
  %v1662 = vrsqrt.pop %v1542
  %v1663 = vrsqrt.pop %v1543
  %v1664 = vrsqrt.pop %v1544
  %v1665 = vrsqrt.pop %v1545
  %v1666 = vrsqrt.pop %v1546
  %v1667 = vrsqrt.pop %v1547
  %v1668 = vrsqrt.pop %v1548
  %v1669 = vrsqrt.pop %v1549
  %v1670 = vrsqrt.pop %v1550
  %v1671 = vrsqrt.pop %v1551
  %v1672 = vrsqrt.pop %v1552
  %v1673 = vrsqrt.pop %v1553
  %v1674 = vrsqrt.pop %v1554
  %v1675 = vrsqrt.pop %v1555
  %v1676 = vrsqrt.pop %v1556
  %v1677 = vrsqrt.pop %v1557
  %v1678 = vrsqrt.pop %v1558
  %v1679 = vrsqrt.pop %v1559
  %v1680 = vrsqrt.pop %v1560
  %v1681 = vrsqrt.pop %v1561
  %v1682 = vrsqrt.pop %v1562
  %v1683 = vrsqrt.pop %v1563
  %v1684 = vrsqrt.pop %v1564
  %v1685 = vrsqrt.pop %v1565
  %v1686 = vrsqrt.pop %v1566
  %v1687 = vrsqrt.pop %v1567
  %v1688 = vrsqrt.pop %v1568
  %v1689 = vrsqrt.pop %v1569
  %v1690 = vrsqrt.pop %v1570
  %v1691 = vrsqrt.pop %v1571
  %v1692 = vrsqrt.pop %v1572
  %v1693 = vrsqrt.pop %v1573
  %v1694 = vrsqrt.pop %v1574
  %v1695 = vrsqrt.pop %v1575
  %v1696 = vrsqrt.pop %v1576
  %v1697 = vrsqrt.pop %v1577
  %v1698 = vrsqrt.pop %v1578
  %v1699 = vrsqrt.pop %v1579
  %v1700 = vrsqrt.pop %v1580
  %v1701 = vrsqrt.pop %v1581
  %v1702 = vrsqrt.pop %v1582
  %v1703 = vrsqrt.pop %v1583
  %v1704 = vrsqrt.pop %v1584
  %v1705 = vrsqrt.pop %v1585
  %v1706 = vrsqrt.pop %v1586
  %v1707 = vrsqrt.pop %v1587
  %v1708 = vrsqrt.pop %v1588
  %v1709 = vrsqrt.pop %v1589
  %v1710 = vrsqrt.pop %v1590
  %v1711 = vmul.f32 %v1351, %v1591
  %v1712 = vmul.f32 %v1352, %v1592
  %v1713 = vmul.f32 %v1353, %v1593
  %v1714 = vmul.f32 %v1354, %v1594
  %v1715 = vmul.f32 %v1355, %v1595
  %v1716 = vmul.f32 %v1356, %v1596
  %v1717 = vmul.f32 %v1357, %v1597
  %v1718 = vmul.f32 %v1358, %v1598
  %v1719 = vmul.f32 %v1359, %v1599
  %v1720 = vmul.f32 %v1360, %v1600
  %v1721 = vmul.f32 %v1361, %v1601
  %v1722 = vmul.f32 %v1362, %v1602
  %v1723 = vmul.f32 %v1363, %v1603
  %v1724 = vmul.f32 %v1364, %v1604
  %v1725 = vmul.f32 %v1365, %v1605
  %v1726 = vmul.f32 %v1366, %v1606
  %v1727 = vmul.f32 %v1367, %v1607
  %v1728 = vmul.f32 %v1368, %v1608
  %v1729 = vmul.f32 %v1369, %v1609
  %v1730 = vmul.f32 %v1370, %v1610
  %v1731 = vmul.f32 %v1371, %v1611
  %v1732 = vmul.f32 %v1372, %v1612
  %v1733 = vmul.f32 %v1373, %v1613
  %v1734 = vmul.f32 %v1374, %v1614
  %v1735 = vmul.f32 %v1375, %v1615
  %v1736 = vmul.f32 %v1376, %v1616
  %v1737 = vmul.f32 %v1377, %v1617
  %v1738 = vmul.f32 %v1378, %v1618
  %v1739 = vmul.f32 %v1379, %v1619
  %v1740 = vmul.f32 %v1380, %v1620
  %v1741 = vmul.f32 %v1381, %v1621
  %v1742 = vmul.f32 %v1382, %v1622
  %v1743 = vmul.f32 %v1383, %v1623
  %v1744 = vmul.f32 %v1384, %v1624
  %v1745 = vmul.f32 %v1385, %v1625
  %v1746 = vmul.f32 %v1386, %v1626
  %v1747 = vmul.f32 %v1387, %v1627
  %v1748 = vmul.f32 %v1388, %v1628
  %v1749 = vmul.f32 %v1389, %v1629
  %v1750 = vmul.f32 %v1390, %v1630
  %v1751 = vmul.f32 %v1391, %v1631
  %v1752 = vmul.f32 %v1392, %v1632
  %v1753 = vmul.f32 %v1393, %v1633
  %v1754 = vmul.f32 %v1394, %v1634
  %v1755 = vmul.f32 %v1395, %v1635
  %v1756 = vmul.f32 %v1396, %v1636
  %v1757 = vmul.f32 %v1397, %v1637
  %v1758 = vmul.f32 %v1398, %v1638
  %v1759 = vmul.f32 %v1399, %v1639
  %v1760 = vmul.f32 %v1400, %v1640
  %v1761 = vmul.f32 %v1401, %v1641
  %v1762 = vmul.f32 %v1402, %v1642
  %v1763 = vmul.f32 %v1403, %v1643
  %v1764 = vmul.f32 %v1404, %v1644
  %v1765 = vmul.f32 %v1405, %v1645
  %v1766 = vmul.f32 %v1406, %v1646
  %v1767 = vmul.f32 %v1407, %v1647
  %v1768 = vmul.f32 %v1408, %v1648
  %v1769 = vmul.f32 %v1409, %v1649
  %v1770 = vmul.f32 %v1410, %v1650
  %v1771 = vmul.f32 %v1411, %v1651
  %v1772 = vmul.f32 %v1412, %v1652
  %v1773 = vmul.f32 %v1413, %v1653
  %v1774 = vmul.f32 %v1414, %v1654
  %v1775 = vmul.f32 %v1415, %v1655
  %v1776 = vmul.f32 %v1416, %v1656
  %v1777 = vmul.f32 %v1417, %v1657
  %v1778 = vmul.f32 %v1418, %v1658
  %v1779 = vmul.f32 %v1419, %v1659
  %v1780 = vmul.f32 %v1420, %v1660
  %v1781 = vmul.f32 %v1421, %v1661
  %v1782 = vmul.f32 %v1422, %v1662
  %v1783 = vmul.f32 %v1423, %v1663
  %v1784 = vmul.f32 %v1424, %v1664
  %v1785 = vmul.f32 %v1425, %v1665
  %v1786 = vmul.f32 %v1426, %v1666
  %v1787 = vmul.f32 %v1427, %v1667
  %v1788 = vmul.f32 %v1428, %v1668
  %v1789 = vmul.f32 %v1429, %v1669
  %v1790 = vmul.f32 %v1430, %v1670
  %v1791 = vmul.f32 %v1431, %v1671
  %v1792 = vmul.f32 %v1432, %v1672
  %v1793 = vmul.f32 %v1433, %v1673
  %v1794 = vmul.f32 %v1434, %v1674
  %v1795 = vmul.f32 %v1435, %v1675
  %v1796 = vmul.f32 %v1436, %v1676
  %v1797 = vmul.f32 %v1437, %v1677
  %v1798 = vmul.f32 %v1438, %v1678
  %v1799 = vmul.f32 %v1439, %v1679
  %v1800 = vmul.f32 %v1440, %v1680
  %v1801 = vmul.f32 %v1441, %v1681
  %v1802 = vmul.f32 %v1442, %v1682
  %v1803 = vmul.f32 %v1443, %v1683
  %v1804 = vmul.f32 %v1444, %v1684
  %v1805 = vmul.f32 %v1445, %v1685
  %v1806 = vmul.f32 %v1446, %v1686
  %v1807 = vmul.f32 %v1447, %v1687
  %v1808 = vmul.f32 %v1448, %v1688
  %v1809 = vmul.f32 %v1449, %v1689
  %v1810 = vmul.f32 %v1450, %v1690
  %v1811 = vmul.f32 %v1451, %v1691
  %v1812 = vmul.f32 %v1452, %v1692
  %v1813 = vmul.f32 %v1453, %v1693
  %v1814 = vmul.f32 %v1454, %v1694
  %v1815 = vmul.f32 %v1455, %v1695
  %v1816 = vmul.f32 %v1456, %v1696
  %v1817 = vmul.f32 %v1457, %v1697
  %v1818 = vmul.f32 %v1458, %v1698
  %v1819 = vmul.f32 %v1459, %v1699
  %v1820 = vmul.f32 %v1460, %v1700
  %v1821 = vmul.f32 %v1461, %v1701
  %v1822 = vmul.f32 %v1462, %v1702
  %v1823 = vmul.f32 %v1463, %v1703
  %v1824 = vmul.f32 %v1464, %v1704
  %v1825 = vmul.f32 %v1465, %v1705
  %v1826 = vmul.f32 %v1466, %v1706
  %v1827 = vmul.f32 %v1467, %v1707
  %v1828 = vmul.f32 %v1468, %v1708
  %v1829 = vmul.f32 %v1469, %v1709
  %v1830 = vmul.f32 %v1470, %v1710
  %1832 = vset.pattern.permute.xlu0 0
  %1833 = vperm.xlu0 %1832, %v1711
  %v1834 = vpop.permute.xlu0 %1833
  %1837 = vset.pattern.permute.xlu0 0
  %1838 = vperm.xlu0 %1837, %v1712
  %v1839 = vpop.permute.xlu0 %1838
  %1842 = vset.pattern.permute.xlu0 0
  %1843 = vperm.xlu0 %1842, %v1713
  %v1844 = vpop.permute.xlu0 %1843
  %1847 = vset.pattern.permute.xlu0 0
  %1848 = vperm.xlu0 %1847, %v1714
  %v1849 = vpop.permute.xlu0 %1848
  %1852 = vset.pattern.permute.xlu0 0
  %1853 = vperm.xlu0 %1852, %v1715
  %v1854 = vpop.permute.xlu0 %1853
  %1857 = vset.pattern.permute.xlu0 0
  %1858 = vperm.xlu0 %1857, %v1716
  %v1859 = vpop.permute.xlu0 %1858
  %1862 = vset.pattern.permute.xlu0 0
  %1863 = vperm.xlu0 %1862, %v1717
  %v1864 = vpop.permute.xlu0 %1863
  %1867 = vset.pattern.permute.xlu0 0
  %1868 = vperm.xlu0 %1867, %v1718
  %v1869 = vpop.permute.xlu0 %1868
  %1872 = vset.pattern.permute.xlu0 0
  %1873 = vperm.xlu0 %1872, %v1719
  %v1874 = vpop.permute.xlu0 %1873
  %1877 = vset.pattern.permute.xlu0 0
  %1878 = vperm.xlu0 %1877, %v1720
  %v1879 = vpop.permute.xlu0 %1878
  %1882 = vset.pattern.permute.xlu0 0
  %1883 = vperm.xlu0 %1882, %v1721
  %v1884 = vpop.permute.xlu0 %1883
  %1887 = vset.pattern.permute.xlu0 0
  %1888 = vperm.xlu0 %1887, %v1722
  %v1889 = vpop.permute.xlu0 %1888
  %1892 = vset.pattern.permute.xlu0 0
  %1893 = vperm.xlu0 %1892, %v1723
  %v1894 = vpop.permute.xlu0 %1893
  %1897 = vset.pattern.permute.xlu0 0
  %1898 = vperm.xlu0 %1897, %v1724
  %v1899 = vpop.permute.xlu0 %1898
  %1902 = vset.pattern.permute.xlu0 0
  %1903 = vperm.xlu0 %1902, %v1725
  %v1904 = vpop.permute.xlu0 %1903
  %1907 = vset.pattern.permute.xlu0 0
  %1908 = vperm.xlu0 %1907, %v1726
  %v1909 = vpop.permute.xlu0 %1908
  %1912 = vset.pattern.permute.xlu0 0
  %1913 = vperm.xlu0 %1912, %v1727
  %v1914 = vpop.permute.xlu0 %1913
  %1917 = vset.pattern.permute.xlu0 0
  %1918 = vperm.xlu0 %1917, %v1728
  %v1919 = vpop.permute.xlu0 %1918
  %1922 = vset.pattern.permute.xlu0 0
  %1923 = vperm.xlu0 %1922, %v1729
  %v1924 = vpop.permute.xlu0 %1923
  %1927 = vset.pattern.permute.xlu0 0
  %1928 = vperm.xlu0 %1927, %v1730
  %v1929 = vpop.permute.xlu0 %1928
  %1932 = vset.pattern.permute.xlu0 0
  %1933 = vperm.xlu0 %1932, %v1731
  %v1934 = vpop.permute.xlu0 %1933
  %1937 = vset.pattern.permute.xlu0 0
  %1938 = vperm.xlu0 %1937, %v1732
  %v1939 = vpop.permute.xlu0 %1938
  %1942 = vset.pattern.permute.xlu0 0
  %1943 = vperm.xlu0 %1942, %v1733
  %v1944 = vpop.permute.xlu0 %1943
  %1947 = vset.pattern.permute.xlu0 0
  %1948 = vperm.xlu0 %1947, %v1734
  %v1949 = vpop.permute.xlu0 %1948
  %1952 = vset.pattern.permute.xlu0 0
  %1953 = vperm.xlu0 %1952, %v1735
  %v1954 = vpop.permute.xlu0 %1953
  %1957 = vset.pattern.permute.xlu0 0
  %1958 = vperm.xlu0 %1957, %v1736
  %v1959 = vpop.permute.xlu0 %1958
  %1962 = vset.pattern.permute.xlu0 0
  %1963 = vperm.xlu0 %1962, %v1737
  %v1964 = vpop.permute.xlu0 %1963
  %1967 = vset.pattern.permute.xlu0 0
  %1968 = vperm.xlu0 %1967, %v1738
  %v1969 = vpop.permute.xlu0 %1968
  %1972 = vset.pattern.permute.xlu0 0
  %1973 = vperm.xlu0 %1972, %v1739
  %v1974 = vpop.permute.xlu0 %1973
  %1977 = vset.pattern.permute.xlu0 0
  %1978 = vperm.xlu0 %1977, %v1740
  %v1979 = vpop.permute.xlu0 %1978
  %1982 = vset.pattern.permute.xlu0 0
  %1983 = vperm.xlu0 %1982, %v1741
  %v1984 = vpop.permute.xlu0 %1983
  %1987 = vset.pattern.permute.xlu0 0
  %1988 = vperm.xlu0 %1987, %v1742
  %v1989 = vpop.permute.xlu0 %1988
  %1992 = vset.pattern.permute.xlu0 0
  %1993 = vperm.xlu0 %1992, %v1743
  %v1994 = vpop.permute.xlu0 %1993
  %1997 = vset.pattern.permute.xlu0 0
  %1998 = vperm.xlu0 %1997, %v1744
  %v1999 = vpop.permute.xlu0 %1998
  %2002 = vset.pattern.permute.xlu0 0
  %2003 = vperm.xlu0 %2002, %v1745
  %v2004 = vpop.permute.xlu0 %2003
  %2007 = vset.pattern.permute.xlu0 0
  %2008 = vperm.xlu0 %2007, %v1746
  %v2009 = vpop.permute.xlu0 %2008
  %2012 = vset.pattern.permute.xlu0 0
  %2013 = vperm.xlu0 %2012, %v1747
  %v2014 = vpop.permute.xlu0 %2013
  %2017 = vset.pattern.permute.xlu0 0
  %2018 = vperm.xlu0 %2017, %v1748
  %v2019 = vpop.permute.xlu0 %2018
  %2022 = vset.pattern.permute.xlu0 0
  %2023 = vperm.xlu0 %2022, %v1749
  %v2024 = vpop.permute.xlu0 %2023
  %2027 = vset.pattern.permute.xlu0 0
  %2028 = vperm.xlu0 %2027, %v1750
  %v2029 = vpop.permute.xlu0 %2028
  %2032 = vset.pattern.permute.xlu0 0
  %2033 = vperm.xlu0 %2032, %v1751
  %v2034 = vpop.permute.xlu0 %2033
  %2037 = vset.pattern.permute.xlu0 0
  %2038 = vperm.xlu0 %2037, %v1752
  %v2039 = vpop.permute.xlu0 %2038
  %2042 = vset.pattern.permute.xlu0 0
  %2043 = vperm.xlu0 %2042, %v1753
  %v2044 = vpop.permute.xlu0 %2043
  %2047 = vset.pattern.permute.xlu0 0
  %2048 = vperm.xlu0 %2047, %v1754
  %v2049 = vpop.permute.xlu0 %2048
  %2052 = vset.pattern.permute.xlu0 0
  %2053 = vperm.xlu0 %2052, %v1755
  %v2054 = vpop.permute.xlu0 %2053
  %2057 = vset.pattern.permute.xlu0 0
  %2058 = vperm.xlu0 %2057, %v1756
  %v2059 = vpop.permute.xlu0 %2058
  %2062 = vset.pattern.permute.xlu0 0
  %2063 = vperm.xlu0 %2062, %v1757
  %v2064 = vpop.permute.xlu0 %2063
  %2067 = vset.pattern.permute.xlu0 0
  %2068 = vperm.xlu0 %2067, %v1758
  %v2069 = vpop.permute.xlu0 %2068
  %2072 = vset.pattern.permute.xlu0 0
  %2073 = vperm.xlu0 %2072, %v1759
  %v2074 = vpop.permute.xlu0 %2073
  %2077 = vset.pattern.permute.xlu0 0
  %2078 = vperm.xlu0 %2077, %v1760
  %v2079 = vpop.permute.xlu0 %2078
  %2082 = vset.pattern.permute.xlu0 0
  %2083 = vperm.xlu0 %2082, %v1761
  %v2084 = vpop.permute.xlu0 %2083
  %2087 = vset.pattern.permute.xlu0 0
  %2088 = vperm.xlu0 %2087, %v1762
  %v2089 = vpop.permute.xlu0 %2088
  %2092 = vset.pattern.permute.xlu0 0
  %2093 = vperm.xlu0 %2092, %v1763
  %v2094 = vpop.permute.xlu0 %2093
  %2097 = vset.pattern.permute.xlu0 0
  %2098 = vperm.xlu0 %2097, %v1764
  %v2099 = vpop.permute.xlu0 %2098
  %2102 = vset.pattern.permute.xlu0 0
  %2103 = vperm.xlu0 %2102, %v1765
  %v2104 = vpop.permute.xlu0 %2103
  %2107 = vset.pattern.permute.xlu0 0
  %2108 = vperm.xlu0 %2107, %v1766
  %v2109 = vpop.permute.xlu0 %2108
  %2112 = vset.pattern.permute.xlu0 0
  %2113 = vperm.xlu0 %2112, %v1767
  %v2114 = vpop.permute.xlu0 %2113
  %2117 = vset.pattern.permute.xlu0 0
  %2118 = vperm.xlu0 %2117, %v1768
  %v2119 = vpop.permute.xlu0 %2118
  %2122 = vset.pattern.permute.xlu0 0
  %2123 = vperm.xlu0 %2122, %v1769
  %v2124 = vpop.permute.xlu0 %2123
  %2127 = vset.pattern.permute.xlu0 0
  %2128 = vperm.xlu0 %2127, %v1770
  %v2129 = vpop.permute.xlu0 %2128
  %2132 = vset.pattern.permute.xlu0 0
  %2133 = vperm.xlu0 %2132, %v1771
  %v2134 = vpop.permute.xlu0 %2133
  %2137 = vset.pattern.permute.xlu0 0
  %2138 = vperm.xlu0 %2137, %v1772
  %v2139 = vpop.permute.xlu0 %2138
  %2142 = vset.pattern.permute.xlu0 0
  %2143 = vperm.xlu0 %2142, %v1773
  %v2144 = vpop.permute.xlu0 %2143
  %2147 = vset.pattern.permute.xlu0 0
  %2148 = vperm.xlu0 %2147, %v1774
  %v2149 = vpop.permute.xlu0 %2148
  %2152 = vset.pattern.permute.xlu0 0
  %2153 = vperm.xlu0 %2152, %v1775
  %v2154 = vpop.permute.xlu0 %2153
  %2157 = vset.pattern.permute.xlu0 0
  %2158 = vperm.xlu0 %2157, %v1776
  %v2159 = vpop.permute.xlu0 %2158
  %2162 = vset.pattern.permute.xlu0 0
  %2163 = vperm.xlu0 %2162, %v1777
  %v2164 = vpop.permute.xlu0 %2163
  %2167 = vset.pattern.permute.xlu0 0
  %2168 = vperm.xlu0 %2167, %v1778
  %v2169 = vpop.permute.xlu0 %2168
  %2172 = vset.pattern.permute.xlu0 0
  %2173 = vperm.xlu0 %2172, %v1779
  %v2174 = vpop.permute.xlu0 %2173
  %2177 = vset.pattern.permute.xlu0 0
  %2178 = vperm.xlu0 %2177, %v1780
  %v2179 = vpop.permute.xlu0 %2178
  %2182 = vset.pattern.permute.xlu0 0
  %2183 = vperm.xlu0 %2182, %v1781
  %v2184 = vpop.permute.xlu0 %2183
  %2187 = vset.pattern.permute.xlu0 0
  %2188 = vperm.xlu0 %2187, %v1782
  %v2189 = vpop.permute.xlu0 %2188
  %2192 = vset.pattern.permute.xlu0 0
  %2193 = vperm.xlu0 %2192, %v1783
  %v2194 = vpop.permute.xlu0 %2193
  %2197 = vset.pattern.permute.xlu0 0
  %2198 = vperm.xlu0 %2197, %v1784
  %v2199 = vpop.permute.xlu0 %2198
  %2202 = vset.pattern.permute.xlu0 0
  %2203 = vperm.xlu0 %2202, %v1785
  %v2204 = vpop.permute.xlu0 %2203
  %2207 = vset.pattern.permute.xlu0 0
  %2208 = vperm.xlu0 %2207, %v1786
  %v2209 = vpop.permute.xlu0 %2208
  %2212 = vset.pattern.permute.xlu0 0
  %2213 = vperm.xlu0 %2212, %v1787
  %v2214 = vpop.permute.xlu0 %2213
  %2217 = vset.pattern.permute.xlu0 0
  %2218 = vperm.xlu0 %2217, %v1788
  %v2219 = vpop.permute.xlu0 %2218
  %2222 = vset.pattern.permute.xlu0 0
  %2223 = vperm.xlu0 %2222, %v1789
  %v2224 = vpop.permute.xlu0 %2223
  %2227 = vset.pattern.permute.xlu0 0
  %2228 = vperm.xlu0 %2227, %v1790
  %v2229 = vpop.permute.xlu0 %2228
  %2232 = vset.pattern.permute.xlu0 0
  %2233 = vperm.xlu0 %2232, %v1791
  %v2234 = vpop.permute.xlu0 %2233
  %2237 = vset.pattern.permute.xlu0 0
  %2238 = vperm.xlu0 %2237, %v1792
  %v2239 = vpop.permute.xlu0 %2238
  %2242 = vset.pattern.permute.xlu0 0
  %2243 = vperm.xlu0 %2242, %v1793
  %v2244 = vpop.permute.xlu0 %2243
  %2247 = vset.pattern.permute.xlu0 0
  %2248 = vperm.xlu0 %2247, %v1794
  %v2249 = vpop.permute.xlu0 %2248
  %2252 = vset.pattern.permute.xlu0 0
  %2253 = vperm.xlu0 %2252, %v1795
  %v2254 = vpop.permute.xlu0 %2253
  %2257 = vset.pattern.permute.xlu0 0
  %2258 = vperm.xlu0 %2257, %v1796
  %v2259 = vpop.permute.xlu0 %2258
  %2262 = vset.pattern.permute.xlu0 0
  %2263 = vperm.xlu0 %2262, %v1797
  %v2264 = vpop.permute.xlu0 %2263
  %2267 = vset.pattern.permute.xlu0 0
  %2268 = vperm.xlu0 %2267, %v1798
  %v2269 = vpop.permute.xlu0 %2268
  %2272 = vset.pattern.permute.xlu0 0
  %2273 = vperm.xlu0 %2272, %v1799
  %v2274 = vpop.permute.xlu0 %2273
  %2277 = vset.pattern.permute.xlu0 0
  %2278 = vperm.xlu0 %2277, %v1800
  %v2279 = vpop.permute.xlu0 %2278
  %2282 = vset.pattern.permute.xlu0 0
  %2283 = vperm.xlu0 %2282, %v1801
  %v2284 = vpop.permute.xlu0 %2283
  %2287 = vset.pattern.permute.xlu0 0
  %2288 = vperm.xlu0 %2287, %v1802
  %v2289 = vpop.permute.xlu0 %2288
  %2292 = vset.pattern.permute.xlu0 0
  %2293 = vperm.xlu0 %2292, %v1803
  %v2294 = vpop.permute.xlu0 %2293
  %2297 = vset.pattern.permute.xlu0 0
  %2298 = vperm.xlu0 %2297, %v1804
  %v2299 = vpop.permute.xlu0 %2298
  %2302 = vset.pattern.permute.xlu0 0
  %2303 = vperm.xlu0 %2302, %v1805
  %v2304 = vpop.permute.xlu0 %2303
  %2307 = vset.pattern.permute.xlu0 0
  %2308 = vperm.xlu0 %2307, %v1806
  %v2309 = vpop.permute.xlu0 %2308
  %2312 = vset.pattern.permute.xlu0 0
  %2313 = vperm.xlu0 %2312, %v1807
  %v2314 = vpop.permute.xlu0 %2313
  %2317 = vset.pattern.permute.xlu0 0
  %2318 = vperm.xlu0 %2317, %v1808
  %v2319 = vpop.permute.xlu0 %2318
  %2322 = vset.pattern.permute.xlu0 0
  %2323 = vperm.xlu0 %2322, %v1809
  %v2324 = vpop.permute.xlu0 %2323
  %2327 = vset.pattern.permute.xlu0 0
  %2328 = vperm.xlu0 %2327, %v1810
  %v2329 = vpop.permute.xlu0 %2328
  %2332 = vset.pattern.permute.xlu0 0
  %2333 = vperm.xlu0 %2332, %v1811
  %v2334 = vpop.permute.xlu0 %2333
  %2337 = vset.pattern.permute.xlu0 0
  %2338 = vperm.xlu0 %2337, %v1812
  %v2339 = vpop.permute.xlu0 %2338
  %2342 = vset.pattern.permute.xlu0 0
  %2343 = vperm.xlu0 %2342, %v1813
  %v2344 = vpop.permute.xlu0 %2343
  %2347 = vset.pattern.permute.xlu0 0
  %2348 = vperm.xlu0 %2347, %v1814
  %v2349 = vpop.permute.xlu0 %2348
  %2352 = vset.pattern.permute.xlu0 0
  %2353 = vperm.xlu0 %2352, %v1815
  %v2354 = vpop.permute.xlu0 %2353
  %2357 = vset.pattern.permute.xlu0 0
  %2358 = vperm.xlu0 %2357, %v1816
  %v2359 = vpop.permute.xlu0 %2358
  %2362 = vset.pattern.permute.xlu0 0
  %2363 = vperm.xlu0 %2362, %v1817
  %v2364 = vpop.permute.xlu0 %2363
  %2367 = vset.pattern.permute.xlu0 0
  %2368 = vperm.xlu0 %2367, %v1818
  %v2369 = vpop.permute.xlu0 %2368
  %2372 = vset.pattern.permute.xlu0 0
  %2373 = vperm.xlu0 %2372, %v1819
  %v2374 = vpop.permute.xlu0 %2373
  %2377 = vset.pattern.permute.xlu0 0
  %2378 = vperm.xlu0 %2377, %v1820
  %v2379 = vpop.permute.xlu0 %2378
  %2382 = vset.pattern.permute.xlu0 0
  %2383 = vperm.xlu0 %2382, %v1821
  %v2384 = vpop.permute.xlu0 %2383
  %2387 = vset.pattern.permute.xlu0 0
  %2388 = vperm.xlu0 %2387, %v1822
  %v2389 = vpop.permute.xlu0 %2388
  %2392 = vset.pattern.permute.xlu0 0
  %2393 = vperm.xlu0 %2392, %v1823
  %v2394 = vpop.permute.xlu0 %2393
  %2397 = vset.pattern.permute.xlu0 0
  %2398 = vperm.xlu0 %2397, %v1824
  %v2399 = vpop.permute.xlu0 %2398
  %2402 = vset.pattern.permute.xlu0 0
  %2403 = vperm.xlu0 %2402, %v1825
  %v2404 = vpop.permute.xlu0 %2403
  %2407 = vset.pattern.permute.xlu0 0
  %2408 = vperm.xlu0 %2407, %v1826
  %v2409 = vpop.permute.xlu0 %2408
  %2412 = vset.pattern.permute.xlu0 0
  %2413 = vperm.xlu0 %2412, %v1827
  %v2414 = vpop.permute.xlu0 %2413
  %2417 = vset.pattern.permute.xlu0 0
  %2418 = vperm.xlu0 %2417, %v1828
  %v2419 = vpop.permute.xlu0 %2418
  %2422 = vset.pattern.permute.xlu0 0
  %2423 = vperm.xlu0 %2422, %v1829
  %v2424 = vpop.permute.xlu0 %2423
  %2427 = vset.pattern.permute.xlu0 0
  %2428 = vperm.xlu0 %2427, %v1830
  %v2429 = vpop.permute.xlu0 %2428
  %v2431 = vmul.f32 %v631, %v1834
  %v2432 = vmul.f32 %v632, %v1839
  %v2433 = vmul.f32 %v633, %v1844
  %v2434 = vmul.f32 %v634, %v1849
  %v2435 = vmul.f32 %v635, %v1854
  %v2436 = vmul.f32 %v636, %v1859
  %v2437 = vmul.f32 %v637, %v1864
  %v2438 = vmul.f32 %v638, %v1869
  %v2439 = vmul.f32 %v639, %v1874
  %v2440 = vmul.f32 %v640, %v1879
  %v2441 = vmul.f32 %v641, %v1884
  %v2442 = vmul.f32 %v642, %v1889
  %v2443 = vmul.f32 %v643, %v1894
  %v2444 = vmul.f32 %v644, %v1899
  %v2445 = vmul.f32 %v645, %v1904
  %v2446 = vmul.f32 %v646, %v1909
  %v2447 = vmul.f32 %v647, %v1914
  %v2448 = vmul.f32 %v648, %v1919
  %v2449 = vmul.f32 %v649, %v1924
  %v2450 = vmul.f32 %v650, %v1929
  %v2451 = vmul.f32 %v651, %v1934
  %v2452 = vmul.f32 %v652, %v1939
  %v2453 = vmul.f32 %v653, %v1944
  %v2454 = vmul.f32 %v654, %v1949
  %v2455 = vmul.f32 %v655, %v1954
  %v2456 = vmul.f32 %v656, %v1959
  %v2457 = vmul.f32 %v657, %v1964
  %v2458 = vmul.f32 %v658, %v1969
  %v2459 = vmul.f32 %v659, %v1974
  %v2460 = vmul.f32 %v660, %v1979
  %v2461 = vmul.f32 %v661, %v1984
  %v2462 = vmul.f32 %v662, %v1989
  %v2463 = vmul.f32 %v663, %v1994
  %v2464 = vmul.f32 %v664, %v1999
  %v2465 = vmul.f32 %v665, %v2004
  %v2466 = vmul.f32 %v666, %v2009
  %v2467 = vmul.f32 %v667, %v2014
  %v2468 = vmul.f32 %v668, %v2019
  %v2469 = vmul.f32 %v669, %v2024
  %v2470 = vmul.f32 %v670, %v2029
  %v2471 = vmul.f32 %v671, %v2034
  %v2472 = vmul.f32 %v672, %v2039
  %v2473 = vmul.f32 %v673, %v2044
  %v2474 = vmul.f32 %v674, %v2049
  %v2475 = vmul.f32 %v675, %v2054
  %v2476 = vmul.f32 %v676, %v2059
  %v2477 = vmul.f32 %v677, %v2064
  %v2478 = vmul.f32 %v678, %v2069
  %v2479 = vmul.f32 %v679, %v2074
  %v2480 = vmul.f32 %v680, %v2079
  %v2481 = vmul.f32 %v681, %v2084
  %v2482 = vmul.f32 %v682, %v2089
  %v2483 = vmul.f32 %v683, %v2094
  %v2484 = vmul.f32 %v684, %v2099
  %v2485 = vmul.f32 %v685, %v2104
  %v2486 = vmul.f32 %v686, %v2109
  %v2487 = vmul.f32 %v687, %v2114
  %v2488 = vmul.f32 %v688, %v2119
  %v2489 = vmul.f32 %v689, %v2124
  %v2490 = vmul.f32 %v690, %v2129
  %v2491 = vmul.f32 %v691, %v2134
  %v2492 = vmul.f32 %v692, %v2139
  %v2493 = vmul.f32 %v693, %v2144
  %v2494 = vmul.f32 %v694, %v2149
  %v2495 = vmul.f32 %v695, %v2154
  %v2496 = vmul.f32 %v696, %v2159
  %v2497 = vmul.f32 %v697, %v2164
  %v2498 = vmul.f32 %v698, %v2169
  %v2499 = vmul.f32 %v699, %v2174
  %v2500 = vmul.f32 %v700, %v2179
  %v2501 = vmul.f32 %v701, %v2184
  %v2502 = vmul.f32 %v702, %v2189
  %v2503 = vmul.f32 %v703, %v2194
  %v2504 = vmul.f32 %v704, %v2199
  %v2505 = vmul.f32 %v705, %v2204
  %v2506 = vmul.f32 %v706, %v2209
  %v2507 = vmul.f32 %v707, %v2214
  %v2508 = vmul.f32 %v708, %v2219
  %v2509 = vmul.f32 %v709, %v2224
  %v2510 = vmul.f32 %v710, %v2229
  %v2511 = vmul.f32 %v711, %v2234
  %v2512 = vmul.f32 %v712, %v2239
  %v2513 = vmul.f32 %v713, %v2244
  %v2514 = vmul.f32 %v714, %v2249
  %v2515 = vmul.f32 %v715, %v2254
  %v2516 = vmul.f32 %v716, %v2259
  %v2517 = vmul.f32 %v717, %v2264
  %v2518 = vmul.f32 %v718, %v2269
  %v2519 = vmul.f32 %v719, %v2274
  %v2520 = vmul.f32 %v720, %v2279
  %v2521 = vmul.f32 %v721, %v2284
  %v2522 = vmul.f32 %v722, %v2289
  %v2523 = vmul.f32 %v723, %v2294
  %v2524 = vmul.f32 %v724, %v2299
  %v2525 = vmul.f32 %v725, %v2304
  %v2526 = vmul.f32 %v726, %v2309
  %v2527 = vmul.f32 %v727, %v2314
  %v2528 = vmul.f32 %v728, %v2319
  %v2529 = vmul.f32 %v729, %v2324
  %v2530 = vmul.f32 %v730, %v2329
  %v2531 = vmul.f32 %v731, %v2334
  %v2532 = vmul.f32 %v732, %v2339
  %v2533 = vmul.f32 %v733, %v2344
  %v2534 = vmul.f32 %v734, %v2349
  %v2535 = vmul.f32 %v735, %v2354
  %v2536 = vmul.f32 %v736, %v2359
  %v2537 = vmul.f32 %v737, %v2364
  %v2538 = vmul.f32 %v738, %v2369
  %v2539 = vmul.f32 %v739, %v2374
  %v2540 = vmul.f32 %v740, %v2379
  %v2541 = vmul.f32 %v741, %v2384
  %v2542 = vmul.f32 %v742, %v2389
  %v2543 = vmul.f32 %v743, %v2394
  %v2544 = vmul.f32 %v744, %v2399
  %v2545 = vmul.f32 %v745, %v2404
  %v2546 = vmul.f32 %v746, %v2409
  %v2547 = vmul.f32 %v747, %v2414
  %v2548 = vmul.f32 %v748, %v2419
  %v2549 = vmul.f32 %v749, %v2424
  %v2550 = vmul.f32 %v750, %v2429
  %v2551 = vld [vmem:[%s2] sm:$0xff]
  %v2552 = vld [vmem:[%s2 + $0x8] sm:$0xff]
  %v2553 = vld [vmem:[%s2 + $0x10] sm:$0xff]
  %v2554 = vld [vmem:[%s2 + $0x18] sm:$0xff]
  %v2555 = vld [vmem:[%s2 + $0x20] sm:$0xff]
  %v2556 = vld [vmem:[%s2 + $0x28] sm:$0xff]
  %v2557 = vld [vmem:[%s2 + $0x30] sm:$0xff]
  %v2558 = vld [vmem:[%s2 + $0x38] sm:$0xff]
  %v2559 = vld [vmem:[%s2 + $0x40] sm:$0xff]
  %v2560 = vld [vmem:[%s2 + $0x48] sm:$0xff]
  %v2561 = vld [vmem:[%s2 + $0x50] sm:$0xff]
  %v2562 = vld [vmem:[%s2 + $0x58] sm:$0xff]
  %v2563 = vld [vmem:[%s2 + $0x60] sm:$0xff]
  %v2564 = vld [vmem:[%s2 + $0x68] sm:$0xff]
  %v2565 = vld [vmem:[%s2 + $0x70] sm:$0xff]
  %v2566 = vld [vmem:[%s2 + $0x78] sm:$0xff]
  %v2567 = vld [vmem:[%s2 + $0x80] sm:$0xff]
  %v2568 = vld [vmem:[%s2 + $0x88] sm:$0xff]
  %v2569 = vld [vmem:[%s2 + $0x90] sm:$0xff]
  %v2570 = vld [vmem:[%s2 + $0x98] sm:$0xff]
  %v2571 = vld [vmem:[%s2 + $0xa0] sm:$0xff]
  %v2572 = vld [vmem:[%s2 + $0xa8] sm:$0xff]
  %v2573 = vld [vmem:[%s2 + $0xb0] sm:$0xff]
  %v2574 = vld [vmem:[%s2 + $0xb8] sm:$0xff]
  %v2575 = vld [vmem:[%s2 + $0xc0] sm:$0xff]
  %v2576 = vld [vmem:[%s2 + $0xc8] sm:$0xff]
  %v2577 = vld [vmem:[%s2 + $0xd0] sm:$0xff]
  %v2578 = vld [vmem:[%s2 + $0xd8] sm:$0xff]
  %v2579 = vld [vmem:[%s2 + $0xe0] sm:$0xff]
  %v2580 = vld [vmem:[%s2 + $0xe8] sm:$0xff]
  %v2581 = vld [vmem:[%s2 + $0xf0] sm:$0xff]
  %v2582 = vld [vmem:[%s2 + $0xf8] sm:$0xff]
  %v2583 = vld [vmem:[%s2 + $0x100] sm:$0xff]
  %v2584 = vld [vmem:[%s2 + $0x108] sm:$0xff]
  %v2585 = vld [vmem:[%s2 + $0x110] sm:$0xff]
  %v2586 = vld [vmem:[%s2 + $0x118] sm:$0xff]
  %v2587 = vld [vmem:[%s2 + $0x120] sm:$0xff]
  %v2588 = vld [vmem:[%s2 + $0x128] sm:$0xff]
  %v2589 = vld [vmem:[%s2 + $0x130] sm:$0xff]
  %v2590 = vld [vmem:[%s2 + $0x138] sm:$0xff]
  %v2591 = vld [vmem:[%s2 + $0x140] sm:$0xff]
  %v2592 = vld [vmem:[%s2 + $0x148] sm:$0xff]
  %v2593 = vld [vmem:[%s2 + $0x150] sm:$0xff]
  %v2594 = vld [vmem:[%s2 + $0x158] sm:$0xff]
  %v2595 = vld [vmem:[%s2 + $0x160] sm:$0xff]
  %v2596 = vld [vmem:[%s2 + $0x168] sm:$0xff]
  %v2597 = vld [vmem:[%s2 + $0x170] sm:$0xff]
  %v2598 = vld [vmem:[%s2 + $0x178] sm:$0xff]
  %v2599 = vld [vmem:[%s2 + $0x180] sm:$0xff]
  %v2600 = vld [vmem:[%s2 + $0x188] sm:$0xff]
  %v2601 = vld [vmem:[%s2 + $0x190] sm:$0xff]
  %v2602 = vld [vmem:[%s2 + $0x198] sm:$0xff]
  %v2603 = vld [vmem:[%s2 + $0x1a0] sm:$0xff]
  %v2604 = vld [vmem:[%s2 + $0x1a8] sm:$0xff]
  %v2605 = vld [vmem:[%s2 + $0x1b0] sm:$0xff]
  %v2606 = vld [vmem:[%s2 + $0x1b8] sm:$0xff]
  %v2607 = vld [vmem:[%s2 + $0x1c0] sm:$0xff]
  %v2608 = vld [vmem:[%s2 + $0x1c8] sm:$0xff]
  %v2609 = vld [vmem:[%s2 + $0x1d0] sm:$0xff]
  %v2610 = vld [vmem:[%s2 + $0x1d8] sm:$0xff]
  %v2611 = vld [vmem:[%s2 + $0x1e0] sm:$0xff]
  %v2612 = vld [vmem:[%s2 + $0x1e8] sm:$0xff]
  %v2613 = vld [vmem:[%s2 + $0x1f0] sm:$0xff]
  %v2614 = vld [vmem:[%s2 + $0x1f8] sm:$0xff]
  %v2615 = vld [vmem:[%s2 + $0x200] sm:$0xff]
  %v2616 = vld [vmem:[%s2 + $0x208] sm:$0xff]
  %v2617 = vld [vmem:[%s2 + $0x210] sm:$0xff]
  %v2618 = vld [vmem:[%s2 + $0x218] sm:$0xff]
  %v2619 = vld [vmem:[%s2 + $0x220] sm:$0xff]
  %v2620 = vld [vmem:[%s2 + $0x228] sm:$0xff]
  %v2621 = vld [vmem:[%s2 + $0x230] sm:$0xff]
  %v2622 = vld [vmem:[%s2 + $0x238] sm:$0xff]
  %v2623 = vld [vmem:[%s2 + $0x240] sm:$0xff]
  %v2624 = vld [vmem:[%s2 + $0x248] sm:$0xff]
  %v2625 = vld [vmem:[%s2 + $0x250] sm:$0xff]
  %v2626 = vld [vmem:[%s2 + $0x258] sm:$0xff]
  %v2627 = vld [vmem:[%s2 + $0x260] sm:$0xff]
  %v2628 = vld [vmem:[%s2 + $0x268] sm:$0xff]
  %v2629 = vld [vmem:[%s2 + $0x270] sm:$0xff]
  %v2630 = vld [vmem:[%s2 + $0x278] sm:$0xff]
  %v2631 = vld [vmem:[%s2 + $0x280] sm:$0xff]
  %v2632 = vld [vmem:[%s2 + $0x288] sm:$0xff]
  %v2633 = vld [vmem:[%s2 + $0x290] sm:$0xff]
  %v2634 = vld [vmem:[%s2 + $0x298] sm:$0xff]
  %v2635 = vld [vmem:[%s2 + $0x2a0] sm:$0xff]
  %v2636 = vld [vmem:[%s2 + $0x2a8] sm:$0xff]
  %v2637 = vld [vmem:[%s2 + $0x2b0] sm:$0xff]
  %v2638 = vld [vmem:[%s2 + $0x2b8] sm:$0xff]
  %v2639 = vld [vmem:[%s2 + $0x2c0] sm:$0xff]
  %v2640 = vld [vmem:[%s2 + $0x2c8] sm:$0xff]
  %v2641 = vld [vmem:[%s2 + $0x2d0] sm:$0xff]
  %v2642 = vld [vmem:[%s2 + $0x2d8] sm:$0xff]
  %v2643 = vld [vmem:[%s2 + $0x2e0] sm:$0xff]
  %v2644 = vld [vmem:[%s2 + $0x2e8] sm:$0xff]
  %v2645 = vld [vmem:[%s2 + $0x2f0] sm:$0xff]
  %v2646 = vld [vmem:[%s2 + $0x2f8] sm:$0xff]
  %v2647 = vld [vmem:[%s2 + $0x300] sm:$0xff]
  %v2648 = vld [vmem:[%s2 + $0x308] sm:$0xff]
  %v2649 = vld [vmem:[%s2 + $0x310] sm:$0xff]
  %v2650 = vld [vmem:[%s2 + $0x318] sm:$0xff]
  %v2651 = vld [vmem:[%s2 + $0x320] sm:$0xff]
  %v2652 = vld [vmem:[%s2 + $0x328] sm:$0xff]
  %v2653 = vld [vmem:[%s2 + $0x330] sm:$0xff]
  %v2654 = vld [vmem:[%s2 + $0x338] sm:$0xff]
  %v2655 = vld [vmem:[%s2 + $0x340] sm:$0xff]
  %v2656 = vld [vmem:[%s2 + $0x348] sm:$0xff]
  %v2657 = vld [vmem:[%s2 + $0x350] sm:$0xff]
  %v2658 = vld [vmem:[%s2 + $0x358] sm:$0xff]
  %v2659 = vld [vmem:[%s2 + $0x360] sm:$0xff]
  %v2660 = vld [vmem:[%s2 + $0x368] sm:$0xff]
  %v2661 = vld [vmem:[%s2 + $0x370] sm:$0xff]
  %v2662 = vld [vmem:[%s2 + $0x378] sm:$0xff]
  %v2663 = vld [vmem:[%s2 + $0x380] sm:$0xff]
  %v2664 = vld [vmem:[%s2 + $0x388] sm:$0xff]
  %v2665 = vld [vmem:[%s2 + $0x390] sm:$0xff]
  %v2666 = vld [vmem:[%s2 + $0x398] sm:$0xff]
  %v2667 = vld [vmem:[%s2 + $0x3a0] sm:$0xff]
  %v2668 = vld [vmem:[%s2 + $0x3a8] sm:$0xff]
  %v2669 = vld [vmem:[%s2 + $0x3b0] sm:$0xff]
  %v2670 = vld [vmem:[%s2 + $0x3b8] sm:$0xff]
  %2672 = vset.pattern.permute.xlu0 0
  %2673 = vperm.xlu0 %2672, %v2551
  %v2674 = vpop.permute.xlu0 %2673
  %2677 = vset.pattern.permute.xlu0 0
  %2678 = vperm.xlu0 %2677, %v2552
  %v2679 = vpop.permute.xlu0 %2678
  %2682 = vset.pattern.permute.xlu0 0
  %2683 = vperm.xlu0 %2682, %v2553
  %v2684 = vpop.permute.xlu0 %2683
  %2687 = vset.pattern.permute.xlu0 0
  %2688 = vperm.xlu0 %2687, %v2554
  %v2689 = vpop.permute.xlu0 %2688
  %2692 = vset.pattern.permute.xlu0 0
  %2693 = vperm.xlu0 %2692, %v2555
  %v2694 = vpop.permute.xlu0 %2693
  %2697 = vset.pattern.permute.xlu0 0
  %2698 = vperm.xlu0 %2697, %v2556
  %v2699 = vpop.permute.xlu0 %2698
  %2702 = vset.pattern.permute.xlu0 0
  %2703 = vperm.xlu0 %2702, %v2557
  %v2704 = vpop.permute.xlu0 %2703
  %2707 = vset.pattern.permute.xlu0 0
  %2708 = vperm.xlu0 %2707, %v2558
  %v2709 = vpop.permute.xlu0 %2708
  %2712 = vset.pattern.permute.xlu0 0
  %2713 = vperm.xlu0 %2712, %v2559
  %v2714 = vpop.permute.xlu0 %2713
  %2717 = vset.pattern.permute.xlu0 0
  %2718 = vperm.xlu0 %2717, %v2560
  %v2719 = vpop.permute.xlu0 %2718
  %2722 = vset.pattern.permute.xlu0 0
  %2723 = vperm.xlu0 %2722, %v2561
  %v2724 = vpop.permute.xlu0 %2723
  %2727 = vset.pattern.permute.xlu0 0
  %2728 = vperm.xlu0 %2727, %v2562
  %v2729 = vpop.permute.xlu0 %2728
  %2732 = vset.pattern.permute.xlu0 0
  %2733 = vperm.xlu0 %2732, %v2563
  %v2734 = vpop.permute.xlu0 %2733
  %2737 = vset.pattern.permute.xlu0 0
  %2738 = vperm.xlu0 %2737, %v2564
  %v2739 = vpop.permute.xlu0 %2738
  %2742 = vset.pattern.permute.xlu0 0
  %2743 = vperm.xlu0 %2742, %v2565
  %v2744 = vpop.permute.xlu0 %2743
  %2747 = vset.pattern.permute.xlu0 0
  %2748 = vperm.xlu0 %2747, %v2566
  %v2749 = vpop.permute.xlu0 %2748
  %2752 = vset.pattern.permute.xlu0 0
  %2753 = vperm.xlu0 %2752, %v2567
  %v2754 = vpop.permute.xlu0 %2753
  %2757 = vset.pattern.permute.xlu0 0
  %2758 = vperm.xlu0 %2757, %v2568
  %v2759 = vpop.permute.xlu0 %2758
  %2762 = vset.pattern.permute.xlu0 0
  %2763 = vperm.xlu0 %2762, %v2569
  %v2764 = vpop.permute.xlu0 %2763
  %2767 = vset.pattern.permute.xlu0 0
  %2768 = vperm.xlu0 %2767, %v2570
  %v2769 = vpop.permute.xlu0 %2768
  %2772 = vset.pattern.permute.xlu0 0
  %2773 = vperm.xlu0 %2772, %v2571
  %v2774 = vpop.permute.xlu0 %2773
  %2777 = vset.pattern.permute.xlu0 0
  %2778 = vperm.xlu0 %2777, %v2572
  %v2779 = vpop.permute.xlu0 %2778
  %2782 = vset.pattern.permute.xlu0 0
  %2783 = vperm.xlu0 %2782, %v2573
  %v2784 = vpop.permute.xlu0 %2783
  %2787 = vset.pattern.permute.xlu0 0
  %2788 = vperm.xlu0 %2787, %v2574
  %v2789 = vpop.permute.xlu0 %2788
  %2792 = vset.pattern.permute.xlu0 0
  %2793 = vperm.xlu0 %2792, %v2575
  %v2794 = vpop.permute.xlu0 %2793
  %2797 = vset.pattern.permute.xlu0 0
  %2798 = vperm.xlu0 %2797, %v2576
  %v2799 = vpop.permute.xlu0 %2798
  %2802 = vset.pattern.permute.xlu0 0
  %2803 = vperm.xlu0 %2802, %v2577
  %v2804 = vpop.permute.xlu0 %2803
  %2807 = vset.pattern.permute.xlu0 0
  %2808 = vperm.xlu0 %2807, %v2578
  %v2809 = vpop.permute.xlu0 %2808
  %2812 = vset.pattern.permute.xlu0 0
  %2813 = vperm.xlu0 %2812, %v2579
  %v2814 = vpop.permute.xlu0 %2813
  %2817 = vset.pattern.permute.xlu0 0
  %2818 = vperm.xlu0 %2817, %v2580
  %v2819 = vpop.permute.xlu0 %2818
  %2822 = vset.pattern.permute.xlu0 0
  %2823 = vperm.xlu0 %2822, %v2581
  %v2824 = vpop.permute.xlu0 %2823
  %2827 = vset.pattern.permute.xlu0 0
  %2828 = vperm.xlu0 %2827, %v2582
  %v2829 = vpop.permute.xlu0 %2828
  %2832 = vset.pattern.permute.xlu0 0
  %2833 = vperm.xlu0 %2832, %v2583
  %v2834 = vpop.permute.xlu0 %2833
  %2837 = vset.pattern.permute.xlu0 0
  %2838 = vperm.xlu0 %2837, %v2584
  %v2839 = vpop.permute.xlu0 %2838
  %2842 = vset.pattern.permute.xlu0 0
  %2843 = vperm.xlu0 %2842, %v2585
  %v2844 = vpop.permute.xlu0 %2843
  %2847 = vset.pattern.permute.xlu0 0
  %2848 = vperm.xlu0 %2847, %v2586
  %v2849 = vpop.permute.xlu0 %2848
  %2852 = vset.pattern.permute.xlu0 0
  %2853 = vperm.xlu0 %2852, %v2587
  %v2854 = vpop.permute.xlu0 %2853
  %2857 = vset.pattern.permute.xlu0 0
  %2858 = vperm.xlu0 %2857, %v2588
  %v2859 = vpop.permute.xlu0 %2858
  %2862 = vset.pattern.permute.xlu0 0
  %2863 = vperm.xlu0 %2862, %v2589
  %v2864 = vpop.permute.xlu0 %2863
  %2867 = vset.pattern.permute.xlu0 0
  %2868 = vperm.xlu0 %2867, %v2590
  %v2869 = vpop.permute.xlu0 %2868
  %2872 = vset.pattern.permute.xlu0 0
  %2873 = vperm.xlu0 %2872, %v2591
  %v2874 = vpop.permute.xlu0 %2873
  %2877 = vset.pattern.permute.xlu0 0
  %2878 = vperm.xlu0 %2877, %v2592
  %v2879 = vpop.permute.xlu0 %2878
  %2882 = vset.pattern.permute.xlu0 0
  %2883 = vperm.xlu0 %2882, %v2593
  %v2884 = vpop.permute.xlu0 %2883
  %2887 = vset.pattern.permute.xlu0 0
  %2888 = vperm.xlu0 %2887, %v2594
  %v2889 = vpop.permute.xlu0 %2888
  %2892 = vset.pattern.permute.xlu0 0
  %2893 = vperm.xlu0 %2892, %v2595
  %v2894 = vpop.permute.xlu0 %2893
  %2897 = vset.pattern.permute.xlu0 0
  %2898 = vperm.xlu0 %2897, %v2596
  %v2899 = vpop.permute.xlu0 %2898
  %2902 = vset.pattern.permute.xlu0 0
  %2903 = vperm.xlu0 %2902, %v2597
  %v2904 = vpop.permute.xlu0 %2903
  %2907 = vset.pattern.permute.xlu0 0
  %2908 = vperm.xlu0 %2907, %v2598
  %v2909 = vpop.permute.xlu0 %2908
  %2912 = vset.pattern.permute.xlu0 0
  %2913 = vperm.xlu0 %2912, %v2599
  %v2914 = vpop.permute.xlu0 %2913
  %2917 = vset.pattern.permute.xlu0 0
  %2918 = vperm.xlu0 %2917, %v2600
  %v2919 = vpop.permute.xlu0 %2918
  %2922 = vset.pattern.permute.xlu0 0
  %2923 = vperm.xlu0 %2922, %v2601
  %v2924 = vpop.permute.xlu0 %2923
  %2927 = vset.pattern.permute.xlu0 0
  %2928 = vperm.xlu0 %2927, %v2602
  %v2929 = vpop.permute.xlu0 %2928
  %2932 = vset.pattern.permute.xlu0 0
  %2933 = vperm.xlu0 %2932, %v2603
  %v2934 = vpop.permute.xlu0 %2933
  %2937 = vset.pattern.permute.xlu0 0
  %2938 = vperm.xlu0 %2937, %v2604
  %v2939 = vpop.permute.xlu0 %2938
  %2942 = vset.pattern.permute.xlu0 0
  %2943 = vperm.xlu0 %2942, %v2605
  %v2944 = vpop.permute.xlu0 %2943
  %2947 = vset.pattern.permute.xlu0 0
  %2948 = vperm.xlu0 %2947, %v2606
  %v2949 = vpop.permute.xlu0 %2948
  %2952 = vset.pattern.permute.xlu0 0
  %2953 = vperm.xlu0 %2952, %v2607
  %v2954 = vpop.permute.xlu0 %2953
  %2957 = vset.pattern.permute.xlu0 0
  %2958 = vperm.xlu0 %2957, %v2608
  %v2959 = vpop.permute.xlu0 %2958
  %2962 = vset.pattern.permute.xlu0 0
  %2963 = vperm.xlu0 %2962, %v2609
  %v2964 = vpop.permute.xlu0 %2963
  %2967 = vset.pattern.permute.xlu0 0
  %2968 = vperm.xlu0 %2967, %v2610
  %v2969 = vpop.permute.xlu0 %2968
  %2972 = vset.pattern.permute.xlu0 0
  %2973 = vperm.xlu0 %2972, %v2611
  %v2974 = vpop.permute.xlu0 %2973
  %2977 = vset.pattern.permute.xlu0 0
  %2978 = vperm.xlu0 %2977, %v2612
  %v2979 = vpop.permute.xlu0 %2978
  %2982 = vset.pattern.permute.xlu0 0
  %2983 = vperm.xlu0 %2982, %v2613
  %v2984 = vpop.permute.xlu0 %2983
  %2987 = vset.pattern.permute.xlu0 0
  %2988 = vperm.xlu0 %2987, %v2614
  %v2989 = vpop.permute.xlu0 %2988
  %2992 = vset.pattern.permute.xlu0 0
  %2993 = vperm.xlu0 %2992, %v2615
  %v2994 = vpop.permute.xlu0 %2993
  %2997 = vset.pattern.permute.xlu0 0
  %2998 = vperm.xlu0 %2997, %v2616
  %v2999 = vpop.permute.xlu0 %2998
  %3002 = vset.pattern.permute.xlu0 0
  %3003 = vperm.xlu0 %3002, %v2617
  %v3004 = vpop.permute.xlu0 %3003
  %3007 = vset.pattern.permute.xlu0 0
  %3008 = vperm.xlu0 %3007, %v2618
  %v3009 = vpop.permute.xlu0 %3008
  %3012 = vset.pattern.permute.xlu0 0
  %3013 = vperm.xlu0 %3012, %v2619
  %v3014 = vpop.permute.xlu0 %3013
  %3017 = vset.pattern.permute.xlu0 0
  %3018 = vperm.xlu0 %3017, %v2620
  %v3019 = vpop.permute.xlu0 %3018
  %3022 = vset.pattern.permute.xlu0 0
  %3023 = vperm.xlu0 %3022, %v2621
  %v3024 = vpop.permute.xlu0 %3023
  %3027 = vset.pattern.permute.xlu0 0
  %3028 = vperm.xlu0 %3027, %v2622
  %v3029 = vpop.permute.xlu0 %3028
  %3032 = vset.pattern.permute.xlu0 0
  %3033 = vperm.xlu0 %3032, %v2623
  %v3034 = vpop.permute.xlu0 %3033
  %3037 = vset.pattern.permute.xlu0 0
  %3038 = vperm.xlu0 %3037, %v2624
  %v3039 = vpop.permute.xlu0 %3038
  %3042 = vset.pattern.permute.xlu0 0
  %3043 = vperm.xlu0 %3042, %v2625
  %v3044 = vpop.permute.xlu0 %3043
  %3047 = vset.pattern.permute.xlu0 0
  %3048 = vperm.xlu0 %3047, %v2626
  %v3049 = vpop.permute.xlu0 %3048
  %3052 = vset.pattern.permute.xlu0 0
  %3053 = vperm.xlu0 %3052, %v2627
  %v3054 = vpop.permute.xlu0 %3053
  %3057 = vset.pattern.permute.xlu0 0
  %3058 = vperm.xlu0 %3057, %v2628
  %v3059 = vpop.permute.xlu0 %3058
  %3062 = vset.pattern.permute.xlu0 0
  %3063 = vperm.xlu0 %3062, %v2629
  %v3064 = vpop.permute.xlu0 %3063
  %3067 = vset.pattern.permute.xlu0 0
  %3068 = vperm.xlu0 %3067, %v2630
  %v3069 = vpop.permute.xlu0 %3068
  %3072 = vset.pattern.permute.xlu0 0
  %3073 = vperm.xlu0 %3072, %v2631
  %v3074 = vpop.permute.xlu0 %3073
  %3077 = vset.pattern.permute.xlu0 0
  %3078 = vperm.xlu0 %3077, %v2632
  %v3079 = vpop.permute.xlu0 %3078
  %3082 = vset.pattern.permute.xlu0 0
  %3083 = vperm.xlu0 %3082, %v2633
  %v3084 = vpop.permute.xlu0 %3083
  %3087 = vset.pattern.permute.xlu0 0
  %3088 = vperm.xlu0 %3087, %v2634
  %v3089 = vpop.permute.xlu0 %3088
  %3092 = vset.pattern.permute.xlu0 0
  %3093 = vperm.xlu0 %3092, %v2635
  %v3094 = vpop.permute.xlu0 %3093
  %3097 = vset.pattern.permute.xlu0 0
  %3098 = vperm.xlu0 %3097, %v2636
  %v3099 = vpop.permute.xlu0 %3098
  %3102 = vset.pattern.permute.xlu0 0
  %3103 = vperm.xlu0 %3102, %v2637
  %v3104 = vpop.permute.xlu0 %3103
  %3107 = vset.pattern.permute.xlu0 0
  %3108 = vperm.xlu0 %3107, %v2638
  %v3109 = vpop.permute.xlu0 %3108
  %3112 = vset.pattern.permute.xlu0 0
  %3113 = vperm.xlu0 %3112, %v2639
  %v3114 = vpop.permute.xlu0 %3113
  %3117 = vset.pattern.permute.xlu0 0
  %3118 = vperm.xlu0 %3117, %v2640
  %v3119 = vpop.permute.xlu0 %3118
  %3122 = vset.pattern.permute.xlu0 0
  %3123 = vperm.xlu0 %3122, %v2641
  %v3124 = vpop.permute.xlu0 %3123
  %3127 = vset.pattern.permute.xlu0 0
  %3128 = vperm.xlu0 %3127, %v2642
  %v3129 = vpop.permute.xlu0 %3128
  %3132 = vset.pattern.permute.xlu0 0
  %3133 = vperm.xlu0 %3132, %v2643
  %v3134 = vpop.permute.xlu0 %3133
  %3137 = vset.pattern.permute.xlu0 0
  %3138 = vperm.xlu0 %3137, %v2644
  %v3139 = vpop.permute.xlu0 %3138
  %3142 = vset.pattern.permute.xlu0 0
  %3143 = vperm.xlu0 %3142, %v2645
  %v3144 = vpop.permute.xlu0 %3143
  %3147 = vset.pattern.permute.xlu0 0
  %3148 = vperm.xlu0 %3147, %v2646
  %v3149 = vpop.permute.xlu0 %3148
  %3152 = vset.pattern.permute.xlu0 0
  %3153 = vperm.xlu0 %3152, %v2647
  %v3154 = vpop.permute.xlu0 %3153
  %3157 = vset.pattern.permute.xlu0 0
  %3158 = vperm.xlu0 %3157, %v2648
  %v3159 = vpop.permute.xlu0 %3158
  %3162 = vset.pattern.permute.xlu0 0
  %3163 = vperm.xlu0 %3162, %v2649
  %v3164 = vpop.permute.xlu0 %3163
  %3167 = vset.pattern.permute.xlu0 0
  %3168 = vperm.xlu0 %3167, %v2650
  %v3169 = vpop.permute.xlu0 %3168
  %3172 = vset.pattern.permute.xlu0 0
  %3173 = vperm.xlu0 %3172, %v2651
  %v3174 = vpop.permute.xlu0 %3173
  %3177 = vset.pattern.permute.xlu0 0
  %3178 = vperm.xlu0 %3177, %v2652
  %v3179 = vpop.permute.xlu0 %3178
  %3182 = vset.pattern.permute.xlu0 0
  %3183 = vperm.xlu0 %3182, %v2653
  %v3184 = vpop.permute.xlu0 %3183
  %3187 = vset.pattern.permute.xlu0 0
  %3188 = vperm.xlu0 %3187, %v2654
  %v3189 = vpop.permute.xlu0 %3188
  %3192 = vset.pattern.permute.xlu0 0
  %3193 = vperm.xlu0 %3192, %v2655
  %v3194 = vpop.permute.xlu0 %3193
  %3197 = vset.pattern.permute.xlu0 0
  %3198 = vperm.xlu0 %3197, %v2656
  %v3199 = vpop.permute.xlu0 %3198
  %3202 = vset.pattern.permute.xlu0 0
  %3203 = vperm.xlu0 %3202, %v2657
  %v3204 = vpop.permute.xlu0 %3203
  %3207 = vset.pattern.permute.xlu0 0
  %3208 = vperm.xlu0 %3207, %v2658
  %v3209 = vpop.permute.xlu0 %3208
  %3212 = vset.pattern.permute.xlu0 0
  %3213 = vperm.xlu0 %3212, %v2659
  %v3214 = vpop.permute.xlu0 %3213
  %3217 = vset.pattern.permute.xlu0 0
  %3218 = vperm.xlu0 %3217, %v2660
  %v3219 = vpop.permute.xlu0 %3218
  %3222 = vset.pattern.permute.xlu0 0
  %3223 = vperm.xlu0 %3222, %v2661
  %v3224 = vpop.permute.xlu0 %3223
  %3227 = vset.pattern.permute.xlu0 0
  %3228 = vperm.xlu0 %3227, %v2662
  %v3229 = vpop.permute.xlu0 %3228
  %3232 = vset.pattern.permute.xlu0 0
  %3233 = vperm.xlu0 %3232, %v2663
  %v3234 = vpop.permute.xlu0 %3233
  %3237 = vset.pattern.permute.xlu0 0
  %3238 = vperm.xlu0 %3237, %v2664
  %v3239 = vpop.permute.xlu0 %3238
  %3242 = vset.pattern.permute.xlu0 0
  %3243 = vperm.xlu0 %3242, %v2665
  %v3244 = vpop.permute.xlu0 %3243
  %3247 = vset.pattern.permute.xlu0 0
  %3248 = vperm.xlu0 %3247, %v2666
  %v3249 = vpop.permute.xlu0 %3248
  %3252 = vset.pattern.permute.xlu0 0
  %3253 = vperm.xlu0 %3252, %v2667
  %v3254 = vpop.permute.xlu0 %3253
  %3257 = vset.pattern.permute.xlu0 0
  %3258 = vperm.xlu0 %3257, %v2668
  %v3259 = vpop.permute.xlu0 %3258
  %3262 = vset.pattern.permute.xlu0 0
  %3263 = vperm.xlu0 %3262, %v2669
  %v3264 = vpop.permute.xlu0 %3263
  %3267 = vset.pattern.permute.xlu0 0
  %3268 = vperm.xlu0 %3267, %v2670
  %v3269 = vpop.permute.xlu0 %3268
  %v3271 = vadd.f32 %v2431, %v2674
  %v3272 = vadd.f32 %v2432, %v2679
  %v3273 = vadd.f32 %v2433, %v2684
  %v3274 = vadd.f32 %v2434, %v2689
  %v3275 = vadd.f32 %v2435, %v2694
  %v3276 = vadd.f32 %v2436, %v2699
  %v3277 = vadd.f32 %v2437, %v2704
  %v3278 = vadd.f32 %v2438, %v2709
  %v3279 = vadd.f32 %v2439, %v2714
  %v3280 = vadd.f32 %v2440, %v2719
  %v3281 = vadd.f32 %v2441, %v2724
  %v3282 = vadd.f32 %v2442, %v2729
  %v3283 = vadd.f32 %v2443, %v2734
  %v3284 = vadd.f32 %v2444, %v2739
  %v3285 = vadd.f32 %v2445, %v2744
  %v3286 = vadd.f32 %v2446, %v2749
  %v3287 = vadd.f32 %v2447, %v2754
  %v3288 = vadd.f32 %v2448, %v2759
  %v3289 = vadd.f32 %v2449, %v2764
  %v3290 = vadd.f32 %v2450, %v2769
  %v3291 = vadd.f32 %v2451, %v2774
  %v3292 = vadd.f32 %v2452, %v2779
  %v3293 = vadd.f32 %v2453, %v2784
  %v3294 = vadd.f32 %v2454, %v2789
  %v3295 = vadd.f32 %v2455, %v2794
  %v3296 = vadd.f32 %v2456, %v2799
  %v3297 = vadd.f32 %v2457, %v2804
  %v3298 = vadd.f32 %v2458, %v2809
  %v3299 = vadd.f32 %v2459, %v2814
  %v3300 = vadd.f32 %v2460, %v2819
  %v3301 = vadd.f32 %v2461, %v2824
  %v3302 = vadd.f32 %v2462, %v2829
  %v3303 = vadd.f32 %v2463, %v2834
  %v3304 = vadd.f32 %v2464, %v2839
  %v3305 = vadd.f32 %v2465, %v2844
  %v3306 = vadd.f32 %v2466, %v2849
  %v3307 = vadd.f32 %v2467, %v2854
  %v3308 = vadd.f32 %v2468, %v2859
  %v3309 = vadd.f32 %v2469, %v2864
  %v3310 = vadd.f32 %v2470, %v2869
  %v3311 = vadd.f32 %v2471, %v2874
  %v3312 = vadd.f32 %v2472, %v2879
  %v3313 = vadd.f32 %v2473, %v2884
  %v3314 = vadd.f32 %v2474, %v2889
  %v3315 = vadd.f32 %v2475, %v2894
  %v3316 = vadd.f32 %v2476, %v2899
  %v3317 = vadd.f32 %v2477, %v2904
  %v3318 = vadd.f32 %v2478, %v2909
  %v3319 = vadd.f32 %v2479, %v2914
  %v3320 = vadd.f32 %v2480, %v2919
  %v3321 = vadd.f32 %v2481, %v2924
  %v3322 = vadd.f32 %v2482, %v2929
  %v3323 = vadd.f32 %v2483, %v2934
  %v3324 = vadd.f32 %v2484, %v2939
  %v3325 = vadd.f32 %v2485, %v2944
  %v3326 = vadd.f32 %v2486, %v2949
  %v3327 = vadd.f32 %v2487, %v2954
  %v3328 = vadd.f32 %v2488, %v2959
  %v3329 = vadd.f32 %v2489, %v2964
  %v3330 = vadd.f32 %v2490, %v2969
  %v3331 = vadd.f32 %v2491, %v2974
  %v3332 = vadd.f32 %v2492, %v2979
  %v3333 = vadd.f32 %v2493, %v2984
  %v3334 = vadd.f32 %v2494, %v2989
  %v3335 = vadd.f32 %v2495, %v2994
  %v3336 = vadd.f32 %v2496, %v2999
  %v3337 = vadd.f32 %v2497, %v3004
  %v3338 = vadd.f32 %v2498, %v3009
  %v3339 = vadd.f32 %v2499, %v3014
  %v3340 = vadd.f32 %v2500, %v3019
  %v3341 = vadd.f32 %v2501, %v3024
  %v3342 = vadd.f32 %v2502, %v3029
  %v3343 = vadd.f32 %v2503, %v3034
  %v3344 = vadd.f32 %v2504, %v3039
  %v3345 = vadd.f32 %v2505, %v3044
  %v3346 = vadd.f32 %v2506, %v3049
  %v3347 = vadd.f32 %v2507, %v3054
  %v3348 = vadd.f32 %v2508, %v3059
  %v3349 = vadd.f32 %v2509, %v3064
  %v3350 = vadd.f32 %v2510, %v3069
  %v3351 = vadd.f32 %v2511, %v3074
  %v3352 = vadd.f32 %v2512, %v3079
  %v3353 = vadd.f32 %v2513, %v3084
  %v3354 = vadd.f32 %v2514, %v3089
  %v3355 = vadd.f32 %v2515, %v3094
  %v3356 = vadd.f32 %v2516, %v3099
  %v3357 = vadd.f32 %v2517, %v3104
  %v3358 = vadd.f32 %v2518, %v3109
  %v3359 = vadd.f32 %v2519, %v3114
  %v3360 = vadd.f32 %v2520, %v3119
  %v3361 = vadd.f32 %v2521, %v3124
  %v3362 = vadd.f32 %v2522, %v3129
  %v3363 = vadd.f32 %v2523, %v3134
  %v3364 = vadd.f32 %v2524, %v3139
  %v3365 = vadd.f32 %v2525, %v3144
  %v3366 = vadd.f32 %v2526, %v3149
  %v3367 = vadd.f32 %v2527, %v3154
  %v3368 = vadd.f32 %v2528, %v3159
  %v3369 = vadd.f32 %v2529, %v3164
  %v3370 = vadd.f32 %v2530, %v3169
  %v3371 = vadd.f32 %v2531, %v3174
  %v3372 = vadd.f32 %v2532, %v3179
  %v3373 = vadd.f32 %v2533, %v3184
  %v3374 = vadd.f32 %v2534, %v3189
  %v3375 = vadd.f32 %v2535, %v3194
  %v3376 = vadd.f32 %v2536, %v3199
  %v3377 = vadd.f32 %v2537, %v3204
  %v3378 = vadd.f32 %v2538, %v3209
  %v3379 = vadd.f32 %v2539, %v3214
  %v3380 = vadd.f32 %v2540, %v3219
  %v3381 = vadd.f32 %v2541, %v3224
  %v3382 = vadd.f32 %v2542, %v3229
  %v3383 = vadd.f32 %v2543, %v3234
  %v3384 = vadd.f32 %v2544, %v3239
  %v3385 = vadd.f32 %v2545, %v3244
  %v3386 = vadd.f32 %v2546, %v3249
  %v3387 = vadd.f32 %v2547, %v3254
  %v3388 = vadd.f32 %v2548, %v3259
  %v3389 = vadd.f32 %v2549, %v3264
  %v3390 = vadd.f32 %v2550, %v3269
  %v3391 = vmax.f32 %v3271, 0.0
  %v3392 = vmax.f32 %v3272, 0.0
  %v3393 = vmax.f32 %v3273, 0.0
  %v3394 = vmax.f32 %v3274, 0.0
  %v3395 = vmax.f32 %v3275, 0.0
  %v3396 = vmax.f32 %v3276, 0.0
  %v3397 = vmax.f32 %v3277, 0.0
  %v3398 = vmax.f32 %v3278, 0.0
  %v3399 = vmax.f32 %v3279, 0.0
  %v3400 = vmax.f32 %v3280, 0.0
  %v3401 = vmax.f32 %v3281, 0.0
  %v3402 = vmax.f32 %v3282, 0.0
  %v3403 = vmax.f32 %v3283, 0.0
  %v3404 = vmax.f32 %v3284, 0.0
  %v3405 = vmax.f32 %v3285, 0.0
  %v3406 = vmax.f32 %v3286, 0.0
  %v3407 = vmax.f32 %v3287, 0.0
  %v3408 = vmax.f32 %v3288, 0.0
  %v3409 = vmax.f32 %v3289, 0.0
  %v3410 = vmax.f32 %v3290, 0.0
  %v3411 = vmax.f32 %v3291, 0.0
  %v3412 = vmax.f32 %v3292, 0.0
  %v3413 = vmax.f32 %v3293, 0.0
  %v3414 = vmax.f32 %v3294, 0.0
  %v3415 = vmax.f32 %v3295, 0.0
  %v3416 = vmax.f32 %v3296, 0.0
  %v3417 = vmax.f32 %v3297, 0.0
  %v3418 = vmax.f32 %v3298, 0.0
  %v3419 = vmax.f32 %v3299, 0.0
  %v3420 = vmax.f32 %v3300, 0.0
  %v3421 = vmax.f32 %v3301, 0.0
  %v3422 = vmax.f32 %v3302, 0.0
  %v3423 = vmax.f32 %v3303, 0.0
  %v3424 = vmax.f32 %v3304, 0.0
  %v3425 = vmax.f32 %v3305, 0.0
  %v3426 = vmax.f32 %v3306, 0.0
  %v3427 = vmax.f32 %v3307, 0.0
  %v3428 = vmax.f32 %v3308, 0.0
  %v3429 = vmax.f32 %v3309, 0.0
  %v3430 = vmax.f32 %v3310, 0.0
  %v3431 = vmax.f32 %v3311, 0.0
  %v3432 = vmax.f32 %v3312, 0.0
  %v3433 = vmax.f32 %v3313, 0.0
  %v3434 = vmax.f32 %v3314, 0.0
  %v3435 = vmax.f32 %v3315, 0.0
  %v3436 = vmax.f32 %v3316, 0.0
  %v3437 = vmax.f32 %v3317, 0.0
  %v3438 = vmax.f32 %v3318, 0.0
  %v3439 = vmax.f32 %v3319, 0.0
  %v3440 = vmax.f32 %v3320, 0.0
  %v3441 = vmax.f32 %v3321, 0.0
  %v3442 = vmax.f32 %v3322, 0.0
  %v3443 = vmax.f32 %v3323, 0.0
  %v3444 = vmax.f32 %v3324, 0.0
  %v3445 = vmax.f32 %v3325, 0.0
  %v3446 = vmax.f32 %v3326, 0.0
  %v3447 = vmax.f32 %v3327, 0.0
  %v3448 = vmax.f32 %v3328, 0.0
  %v3449 = vmax.f32 %v3329, 0.0
  %v3450 = vmax.f32 %v3330, 0.0
  %v3451 = vmax.f32 %v3331, 0.0
  %v3452 = vmax.f32 %v3332, 0.0
  %v3453 = vmax.f32 %v3333, 0.0
  %v3454 = vmax.f32 %v3334, 0.0
  %v3455 = vmax.f32 %v3335, 0.0
  %v3456 = vmax.f32 %v3336, 0.0
  %v3457 = vmax.f32 %v3337, 0.0
  %v3458 = vmax.f32 %v3338, 0.0
  %v3459 = vmax.f32 %v3339, 0.0
  %v3460 = vmax.f32 %v3340, 0.0
  %v3461 = vmax.f32 %v3341, 0.0
  %v3462 = vmax.f32 %v3342, 0.0
  %v3463 = vmax.f32 %v3343, 0.0
  %v3464 = vmax.f32 %v3344, 0.0
  %v3465 = vmax.f32 %v3345, 0.0
  %v3466 = vmax.f32 %v3346, 0.0
  %v3467 = vmax.f32 %v3347, 0.0
  %v3468 = vmax.f32 %v3348, 0.0
  %v3469 = vmax.f32 %v3349, 0.0
  %v3470 = vmax.f32 %v3350, 0.0
  %v3471 = vmax.f32 %v3351, 0.0
  %v3472 = vmax.f32 %v3352, 0.0
  %v3473 = vmax.f32 %v3353, 0.0
  %v3474 = vmax.f32 %v3354, 0.0
  %v3475 = vmax.f32 %v3355, 0.0
  %v3476 = vmax.f32 %v3356, 0.0
  %v3477 = vmax.f32 %v3357, 0.0
  %v3478 = vmax.f32 %v3358, 0.0
  %v3479 = vmax.f32 %v3359, 0.0
  %v3480 = vmax.f32 %v3360, 0.0
  %v3481 = vmax.f32 %v3361, 0.0
  %v3482 = vmax.f32 %v3362, 0.0
  %v3483 = vmax.f32 %v3363, 0.0
  %v3484 = vmax.f32 %v3364, 0.0
  %v3485 = vmax.f32 %v3365, 0.0
  %v3486 = vmax.f32 %v3366, 0.0
  %v3487 = vmax.f32 %v3367, 0.0
  %v3488 = vmax.f32 %v3368, 0.0
  %v3489 = vmax.f32 %v3369, 0.0
  %v3490 = vmax.f32 %v3370, 0.0
  %v3491 = vmax.f32 %v3371, 0.0
  %v3492 = vmax.f32 %v3372, 0.0
  %v3493 = vmax.f32 %v3373, 0.0
  %v3494 = vmax.f32 %v3374, 0.0
  %v3495 = vmax.f32 %v3375, 0.0
  %v3496 = vmax.f32 %v3376, 0.0
  %v3497 = vmax.f32 %v3377, 0.0
  %v3498 = vmax.f32 %v3378, 0.0
  %v3499 = vmax.f32 %v3379, 0.0
  %v3500 = vmax.f32 %v3380, 0.0
  %v3501 = vmax.f32 %v3381, 0.0
  %v3502 = vmax.f32 %v3382, 0.0
  %v3503 = vmax.f32 %v3383, 0.0
  %v3504 = vmax.f32 %v3384, 0.0
  %v3505 = vmax.f32 %v3385, 0.0
  %v3506 = vmax.f32 %v3386, 0.0
  %v3507 = vmax.f32 %v3387, 0.0
  %v3508 = vmax.f32 %v3388, 0.0
  %v3509 = vmax.f32 %v3389, 0.0
  %v3510 = vmax.f32 %v3390, 0.0
  %v3511 = vpack.c.bf16 %v3392, %v3391
  %v3512 = vpack.c.bf16 %v3394, %v3393
  %v3513 = vpack.c.bf16 %v3396, %v3395
  %v3514 = vpack.c.bf16 %v3398, %v3397
  %v3515 = vpack.c.bf16 %v3400, %v3399
  %v3516 = vpack.c.bf16 %v3402, %v3401
  %v3517 = vpack.c.bf16 %v3404, %v3403
  %v3518 = vpack.c.bf16 %v3406, %v3405
  %v3519 = vpack.c.bf16 %v3408, %v3407
  %v3520 = vpack.c.bf16 %v3410, %v3409
  %v3521 = vpack.c.bf16 %v3412, %v3411
  %v3522 = vpack.c.bf16 %v3414, %v3413
  %v3523 = vpack.c.bf16 %v3416, %v3415
  %v3524 = vpack.c.bf16 %v3418, %v3417
  %v3525 = vpack.c.bf16 %v3420, %v3419
  %v3526 = vpack.c.bf16 %v3422, %v3421
  %v3527 = vpack.c.bf16 %v3424, %v3423
  %v3528 = vpack.c.bf16 %v3426, %v3425
  %v3529 = vpack.c.bf16 %v3428, %v3427
  %v3530 = vpack.c.bf16 %v3430, %v3429
  %v3531 = vpack.c.bf16 %v3432, %v3431
  %v3532 = vpack.c.bf16 %v3434, %v3433
  %v3533 = vpack.c.bf16 %v3436, %v3435
  %v3534 = vpack.c.bf16 %v3438, %v3437
  %v3535 = vpack.c.bf16 %v3440, %v3439
  %v3536 = vpack.c.bf16 %v3442, %v3441
  %v3537 = vpack.c.bf16 %v3444, %v3443
  %v3538 = vpack.c.bf16 %v3446, %v3445
  %v3539 = vpack.c.bf16 %v3448, %v3447
  %v3540 = vpack.c.bf16 %v3450, %v3449
  %v3541 = vpack.c.bf16 %v3452, %v3451
  %v3542 = vpack.c.bf16 %v3454, %v3453
  %v3543 = vpack.c.bf16 %v3456, %v3455
  %v3544 = vpack.c.bf16 %v3458, %v3457
  %v3545 = vpack.c.bf16 %v3460, %v3459
  %v3546 = vpack.c.bf16 %v3462, %v3461
  %v3547 = vpack.c.bf16 %v3464, %v3463
  %v3548 = vpack.c.bf16 %v3466, %v3465
  %v3549 = vpack.c.bf16 %v3468, %v3467
  %v3550 = vpack.c.bf16 %v3470, %v3469
  %v3551 = vpack.c.bf16 %v3472, %v3471
  %v3552 = vpack.c.bf16 %v3474, %v3473
  %v3553 = vpack.c.bf16 %v3476, %v3475
  %v3554 = vpack.c.bf16 %v3478, %v3477
  %v3555 = vpack.c.bf16 %v3480, %v3479
  %v3556 = vpack.c.bf16 %v3482, %v3481
  %v3557 = vpack.c.bf16 %v3484, %v3483
  %v3558 = vpack.c.bf16 %v3486, %v3485
  %v3559 = vpack.c.bf16 %v3488, %v3487
  %v3560 = vpack.c.bf16 %v3490, %v3489
  %v3561 = vpack.c.bf16 %v3492, %v3491
  %v3562 = vpack.c.bf16 %v3494, %v3493
  %v3563 = vpack.c.bf16 %v3496, %v3495
  %v3564 = vpack.c.bf16 %v3498, %v3497
  %v3565 = vpack.c.bf16 %v3500, %v3499
  %v3566 = vpack.c.bf16 %v3502, %v3501
  %v3567 = vpack.c.bf16 %v3504, %v3503
  %v3568 = vpack.c.bf16 %v3506, %v3505
  %v3569 = vpack.c.bf16 %v3508, %v3507
  %v3570 = vpack.c.bf16 %v3510, %v3509
  %v3571 = vld [vmem:[%s3] sm:$0xff]
  %v3572 = vld [vmem:[%s3 + $0x8] sm:$0xff]
  %v3573 = vld [vmem:[%s3 + $0x10] sm:$0xff]
  %v3574 = vld [vmem:[%s3 + $0x18] sm:$0xff]
  %v3575 = vld [vmem:[%s3 + $0x20] sm:$0xff]
  %v3576 = vld [vmem:[%s3 + $0x28] sm:$0xff]
  %v3577 = vld [vmem:[%s3 + $0x30] sm:$0xff]
  %v3578 = vld [vmem:[%s3 + $0x38] sm:$0xff]
  %v3579 = vld [vmem:[%s3 + $0x40] sm:$0xff]
  %v3580 = vld [vmem:[%s3 + $0x48] sm:$0xff]
  %v3581 = vld [vmem:[%s3 + $0x50] sm:$0xff]
  %v3582 = vld [vmem:[%s3 + $0x58] sm:$0xff]
  %v3583 = vld [vmem:[%s3 + $0x60] sm:$0xff]
  %v3584 = vld [vmem:[%s3 + $0x68] sm:$0xff]
  %v3585 = vld [vmem:[%s3 + $0x70] sm:$0xff]
  %v3586 = vld [vmem:[%s3 + $0x78] sm:$0xff]
  %v3587 = vld [vmem:[%s3 + $0x80] sm:$0xff]
  %v3588 = vld [vmem:[%s3 + $0x88] sm:$0xff]
  %v3589 = vld [vmem:[%s3 + $0x90] sm:$0xff]
  %v3590 = vld [vmem:[%s3 + $0x98] sm:$0xff]
  %v3591 = vld [vmem:[%s3 + $0xa0] sm:$0xff]
  %v3592 = vld [vmem:[%s3 + $0xa8] sm:$0xff]
  %v3593 = vld [vmem:[%s3 + $0xb0] sm:$0xff]
  %v3594 = vld [vmem:[%s3 + $0xb8] sm:$0xff]
  %v3595 = vld [vmem:[%s3 + $0xc0] sm:$0xff]
  %v3596 = vld [vmem:[%s3 + $0xc8] sm:$0xff]
  %v3597 = vld [vmem:[%s3 + $0xd0] sm:$0xff]
  %v3598 = vld [vmem:[%s3 + $0xd8] sm:$0xff]
  %v3599 = vld [vmem:[%s3 + $0xe0] sm:$0xff]
  %v3600 = vld [vmem:[%s3 + $0xe8] sm:$0xff]
  %v3601 = vld [vmem:[%s3 + $0xf0] sm:$0xff]
  %v3602 = vld [vmem:[%s3 + $0xf8] sm:$0xff]
  %v3603 = vld [vmem:[%s3 + $0x100] sm:$0xff]
  %v3604 = vld [vmem:[%s3 + $0x108] sm:$0xff]
  %v3605 = vld [vmem:[%s3 + $0x110] sm:$0xff]
  %v3606 = vld [vmem:[%s3 + $0x118] sm:$0xff]
  %v3607 = vld [vmem:[%s3 + $0x120] sm:$0xff]
  %v3608 = vld [vmem:[%s3 + $0x128] sm:$0xff]
  %v3609 = vld [vmem:[%s3 + $0x130] sm:$0xff]
  %v3610 = vld [vmem:[%s3 + $0x138] sm:$0xff]
  %v3611 = vld [vmem:[%s3 + $0x140] sm:$0xff]
  %v3612 = vld [vmem:[%s3 + $0x148] sm:$0xff]
  %v3613 = vld [vmem:[%s3 + $0x150] sm:$0xff]
  %v3614 = vld [vmem:[%s3 + $0x158] sm:$0xff]
  %v3615 = vld [vmem:[%s3 + $0x160] sm:$0xff]
  %v3616 = vld [vmem:[%s3 + $0x168] sm:$0xff]
  %v3617 = vld [vmem:[%s3 + $0x170] sm:$0xff]
  %v3618 = vld [vmem:[%s3 + $0x178] sm:$0xff]
  %v3619 = vld [vmem:[%s3 + $0x180] sm:$0xff]
  %v3620 = vld [vmem:[%s3 + $0x188] sm:$0xff]
  %v3621 = vld [vmem:[%s3 + $0x190] sm:$0xff]
  %v3622 = vld [vmem:[%s3 + $0x198] sm:$0xff]
  %v3623 = vld [vmem:[%s3 + $0x1a0] sm:$0xff]
  %v3624 = vld [vmem:[%s3 + $0x1a8] sm:$0xff]
  %v3625 = vld [vmem:[%s3 + $0x1b0] sm:$0xff]
  %v3626 = vld [vmem:[%s3 + $0x1b8] sm:$0xff]
  %v3627 = vld [vmem:[%s3 + $0x1c0] sm:$0xff]
  %v3628 = vld [vmem:[%s3 + $0x1c8] sm:$0xff]
  %v3629 = vld [vmem:[%s3 + $0x1d0] sm:$0xff]
  %v3630 = vld [vmem:[%s3 + $0x1d8] sm:$0xff]
  %v3631 = vld [vmem:[%s3 + $0x1e0] sm:$0xff]
  %v3632 = vld [vmem:[%s3 + $0x1e8] sm:$0xff]
  %v3633 = vld [vmem:[%s3 + $0x1f0] sm:$0xff]
  %v3634 = vld [vmem:[%s3 + $0x1f8] sm:$0xff]
  %v3635 = vld [vmem:[%s3 + $0x200] sm:$0xff]
  %v3636 = vld [vmem:[%s3 + $0x208] sm:$0xff]
  %v3637 = vld [vmem:[%s3 + $0x210] sm:$0xff]
  %v3638 = vld [vmem:[%s3 + $0x218] sm:$0xff]
  %v3639 = vld [vmem:[%s3 + $0x220] sm:$0xff]
  %v3640 = vld [vmem:[%s3 + $0x228] sm:$0xff]
  %v3641 = vld [vmem:[%s3 + $0x230] sm:$0xff]
  %v3642 = vld [vmem:[%s3 + $0x238] sm:$0xff]
  %v3643 = vld [vmem:[%s3 + $0x240] sm:$0xff]
  %v3644 = vld [vmem:[%s3 + $0x248] sm:$0xff]
  %v3645 = vld [vmem:[%s3 + $0x250] sm:$0xff]
  %v3646 = vld [vmem:[%s3 + $0x258] sm:$0xff]
  %v3647 = vld [vmem:[%s3 + $0x260] sm:$0xff]
  %v3648 = vld [vmem:[%s3 + $0x268] sm:$0xff]
  %v3649 = vld [vmem:[%s3 + $0x270] sm:$0xff]
  %v3650 = vld [vmem:[%s3 + $0x278] sm:$0xff]
  %v3651 = vld [vmem:[%s3 + $0x280] sm:$0xff]
  %v3652 = vld [vmem:[%s3 + $0x288] sm:$0xff]
  %v3653 = vld [vmem:[%s3 + $0x290] sm:$0xff]
  %v3654 = vld [vmem:[%s3 + $0x298] sm:$0xff]
  %v3655 = vld [vmem:[%s3 + $0x2a0] sm:$0xff]
  %v3656 = vld [vmem:[%s3 + $0x2a8] sm:$0xff]
  %v3657 = vld [vmem:[%s3 + $0x2b0] sm:$0xff]
  %v3658 = vld [vmem:[%s3 + $0x2b8] sm:$0xff]
  %v3659 = vld [vmem:[%s3 + $0x2c0] sm:$0xff]
  %v3660 = vld [vmem:[%s3 + $0x2c8] sm:$0xff]
  %v3661 = vld [vmem:[%s3 + $0x2d0] sm:$0xff]
  %v3662 = vld [vmem:[%s3 + $0x2d8] sm:$0xff]
  %v3663 = vld [vmem:[%s3 + $0x2e0] sm:$0xff]
  %v3664 = vld [vmem:[%s3 + $0x2e8] sm:$0xff]
  %v3665 = vld [vmem:[%s3 + $0x2f0] sm:$0xff]
  %v3666 = vld [vmem:[%s3 + $0x2f8] sm:$0xff]
  %v3667 = vld [vmem:[%s3 + $0x300] sm:$0xff]
  %v3668 = vld [vmem:[%s3 + $0x308] sm:$0xff]
  %v3669 = vld [vmem:[%s3 + $0x310] sm:$0xff]
  %v3670 = vld [vmem:[%s3 + $0x318] sm:$0xff]
  %v3671 = vld [vmem:[%s3 + $0x320] sm:$0xff]
  %v3672 = vld [vmem:[%s3 + $0x328] sm:$0xff]
  %v3673 = vld [vmem:[%s3 + $0x330] sm:$0xff]
  %v3674 = vld [vmem:[%s3 + $0x338] sm:$0xff]
  %v3675 = vld [vmem:[%s3 + $0x340] sm:$0xff]
  %v3676 = vld [vmem:[%s3 + $0x348] sm:$0xff]
  %v3677 = vld [vmem:[%s3 + $0x350] sm:$0xff]
  %v3678 = vld [vmem:[%s3 + $0x358] sm:$0xff]
  %v3679 = vld [vmem:[%s3 + $0x360] sm:$0xff]
  %v3680 = vld [vmem:[%s3 + $0x368] sm:$0xff]
  %v3681 = vld [vmem:[%s3 + $0x370] sm:$0xff]
  %v3682 = vld [vmem:[%s3 + $0x378] sm:$0xff]
  %v3683 = vld [vmem:[%s3 + $0x380] sm:$0xff]
  %v3684 = vld [vmem:[%s3 + $0x388] sm:$0xff]
  %v3685 = vld [vmem:[%s3 + $0x390] sm:$0xff]
  %v3686 = vld [vmem:[%s3 + $0x398] sm:$0xff]
  %v3687 = vld [vmem:[%s3 + $0x3a0] sm:$0xff]
  %v3688 = vld [vmem:[%s3 + $0x3a8] sm:$0xff]
  %v3689 = vld [vmem:[%s3 + $0x3b0] sm:$0xff]
  %v3690 = vld [vmem:[%s3 + $0x3b8] sm:$0xff]
  %v3691 = vld [vmem:[%s3 + $0x3c0] sm:$0xff]
  %v3692 = vld [vmem:[%s3 + $0x3c8] sm:$0xff]
  %v3693 = vld [vmem:[%s3 + $0x3d0] sm:$0xff]
  %v3694 = vld [vmem:[%s3 + $0x3d8] sm:$0xff]
  %v3695 = vld [vmem:[%s3 + $0x3e0] sm:$0xff]
  %v3696 = vld [vmem:[%s3 + $0x3e8] sm:$0xff]
  %v3697 = vld [vmem:[%s3 + $0x3f0] sm:$0xff]
  %v3698 = vld [vmem:[%s3 + $0x3f8] sm:$0xff]
  %v3699 = vpack.c.bf16 %v3579, %v3571
  %v3700 = vpack.c.bf16 %v3580, %v3572
  %v3701 = vpack.c.bf16 %v3581, %v3573
  %v3702 = vpack.c.bf16 %v3582, %v3574
  %v3703 = vpack.c.bf16 %v3583, %v3575
  %v3704 = vpack.c.bf16 %v3584, %v3576
  %v3705 = vpack.c.bf16 %v3585, %v3577
  %v3706 = vpack.c.bf16 %v3586, %v3578
  %v3707 = vpack.c.bf16 %v3595, %v3587
  %v3708 = vpack.c.bf16 %v3596, %v3588
  %v3709 = vpack.c.bf16 %v3597, %v3589
  %v3710 = vpack.c.bf16 %v3598, %v3590
  %v3711 = vpack.c.bf16 %v3599, %v3591
  %v3712 = vpack.c.bf16 %v3600, %v3592
  %v3713 = vpack.c.bf16 %v3601, %v3593
  %v3714 = vpack.c.bf16 %v3602, %v3594
  %v3715 = vpack.c.bf16 %v3611, %v3603
  %v3716 = vpack.c.bf16 %v3612, %v3604
  %v3717 = vpack.c.bf16 %v3613, %v3605
  %v3718 = vpack.c.bf16 %v3614, %v3606
  %v3719 = vpack.c.bf16 %v3615, %v3607
  %v3720 = vpack.c.bf16 %v3616, %v3608
  %v3721 = vpack.c.bf16 %v3617, %v3609
  %v3722 = vpack.c.bf16 %v3618, %v3610
  %v3723 = vpack.c.bf16 %v3627, %v3619
  %v3724 = vpack.c.bf16 %v3628, %v3620
  %v3725 = vpack.c.bf16 %v3629, %v3621
  %v3726 = vpack.c.bf16 %v3630, %v3622
  %v3727 = vpack.c.bf16 %v3631, %v3623
  %v3728 = vpack.c.bf16 %v3632, %v3624
  %v3729 = vpack.c.bf16 %v3633, %v3625
  %v3730 = vpack.c.bf16 %v3634, %v3626
  %v3731 = vpack.c.bf16 %v3643, %v3635
  %v3732 = vpack.c.bf16 %v3644, %v3636
  %v3733 = vpack.c.bf16 %v3645, %v3637
  %v3734 = vpack.c.bf16 %v3646, %v3638
  %v3735 = vpack.c.bf16 %v3647, %v3639
  %v3736 = vpack.c.bf16 %v3648, %v3640
  %v3737 = vpack.c.bf16 %v3649, %v3641
  %v3738 = vpack.c.bf16 %v3650, %v3642
  %v3739 = vpack.c.bf16 %v3659, %v3651
  %v3740 = vpack.c.bf16 %v3660, %v3652
  %v3741 = vpack.c.bf16 %v3661, %v3653
  %v3742 = vpack.c.bf16 %v3662, %v3654
  %v3743 = vpack.c.bf16 %v3663, %v3655
  %v3744 = vpack.c.bf16 %v3664, %v3656
  %v3745 = vpack.c.bf16 %v3665, %v3657
  %v3746 = vpack.c.bf16 %v3666, %v3658
  %v3747 = vpack.c.bf16 %v3675, %v3667
  %v3748 = vpack.c.bf16 %v3676, %v3668
  %v3749 = vpack.c.bf16 %v3677, %v3669
  %v3750 = vpack.c.bf16 %v3678, %v3670
  %v3751 = vpack.c.bf16 %v3679, %v3671
  %v3752 = vpack.c.bf16 %v3680, %v3672
  %v3753 = vpack.c.bf16 %v3681, %v3673
  %v3754 = vpack.c.bf16 %v3682, %v3674
  %v3755 = vpack.c.bf16 %v3691, %v3683
  %v3756 = vpack.c.bf16 %v3692, %v3684
  %v3757 = vpack.c.bf16 %v3693, %v3685
  %v3758 = vpack.c.bf16 %v3694, %v3686
  %v3759 = vpack.c.bf16 %v3695, %v3687
  %v3760 = vpack.c.bf16 %v3696, %v3688
  %v3761 = vpack.c.bf16 %v3697, %v3689
  %v3762 = vpack.c.bf16 %v3698, %v3690
  %vm3763 = vcmask 523264
  %v3765 = vsel %vm3763, %v3706, 0
  %v3768 = vsel %vm3763, %v3714, 0
  %v3771 = vsel %vm3763, %v3722, 0
  %v3774 = vsel %vm3763, %v3730, 0
  %v3777 = vsel %vm3763, %v3738, 0
  %v3780 = vsel %vm3763, %v3746, 0
  %v3783 = vsel %vm3763, %v3754, 0
  %v3786 = vsel %vm3763, %v3762, 0
  %3788 = vmatprep.subr.bf16.mxu0 0
  %3789 = vmatpush1.bf16.msra.mxu0 %v3511
  %3790 = vmatprep.subr.bf16.mxu0 0
  %3791 = vmatpush1.bf16.msra.mxu0 %v3512
  %3792 = vmatprep.subr.bf16.mxu0 0
  %3793 = vmatpush1.bf16.msra.mxu0 %v3513
  %3794 = vmatprep.subr.bf16.mxu0 0
  %3795 = vmatpush1.bf16.msra.mxu0 %v3514
  %3796 = vmatprep.subr.bf16.mxu0 0
  %3797 = vmatpush1.bf16.msra.mxu0 %v3515
  %3798 = vmatprep.subr.bf16.mxu0 0
  %3799 = vmatpush1.bf16.msra.mxu0 %v3516
  %3800 = vmatprep.subr.bf16.mxu0 0
  %3801 = vmatpush1.bf16.msra.mxu0 %v3517
  %3802 = vmatprep.subr.bf16.mxu0 0
  %3803 = vmatpush1.bf16.msra.mxu0 %v3518
  %3804 = vmatprep.subr.bf16.mxu0 0
  %3805 = vmatpush1.bf16.msra.mxu0 %v3519
  %3806 = vmatprep.subr.bf16.mxu0 0
  %3807 = vmatpush1.bf16.msra.mxu0 %v3520
  %3808 = vmatprep.subr.bf16.mxu0 0
  %3809 = vmatpush1.bf16.msra.mxu0 %v3521
  %3810 = vmatprep.subr.bf16.mxu0 0
  %3811 = vmatpush1.bf16.msra.mxu0 %v3522
  %3812 = vmatprep.subr.bf16.mxu0 0
  %3813 = vmatpush1.bf16.msra.mxu0 %v3523
  %3814 = vmatprep.subr.bf16.mxu0 0
  %3815 = vmatpush1.bf16.msra.mxu0 %v3524
  %3816 = vmatprep.subr.bf16.mxu0 0
  %3817 = vmatpush1.bf16.msra.mxu0 %v3525
  %3818 = vmatprep.subr.bf16.mxu0 0
  %3819 = vmatpush1.bf16.msra.mxu0 %v3526
  %3820 = vmatprep.mubr.bf16.mxu0 %v3700
  %3821 = vmatmul.mubr.bf16.gmra.mrb[0].mxu0 %v3699
  %v3822 = vpop.f32.mrb[0].mxu0
  %v3823 = vadd.f32 0.0, %v3822
  %v3824 = vpop.f32.mrb[0].mxu0
  %v3825 = vpop.f32.mrb[0].mxu0
  %v3826 = vadd.f32 0.0, %v3825
  %v3827 = vpop.f32.mrb[0].mxu0
  %3828 = vmatprep.mubr.bf16.mxu0 %v3708
  %3829 = vmatmul.mubr.bf16.gmra.mrb[0].mxu0 %v3707
  %v3830 = vpop.f32.mrb[0].mxu0
  %v3831 = vadd.f32 0.0, %v3830
  %v3832 = vpop.f32.mrb[0].mxu0
  %v3833 = vpop.f32.mrb[0].mxu0
  %v3834 = vadd.f32 0.0, %v3833
  %v3835 = vpop.f32.mrb[0].mxu0
  %3836 = vmatprep.mubr.bf16.mxu0 %v3716
  %3837 = vmatmul.mubr.bf16.gmra.mrb[0].mxu0 %v3715
  %v3838 = vpop.f32.mrb[0].mxu0
  %v3839 = vadd.f32 0.0, %v3838
  %v3840 = vpop.f32.mrb[0].mxu0
  %v3841 = vpop.f32.mrb[0].mxu0
  %v3842 = vadd.f32 0.0, %v3841
  %v3843 = vpop.f32.mrb[0].mxu0
  %3844 = vmatprep.mubr.bf16.mxu0 %v3724
  %3845 = vmatmul.mubr.bf16.gmra.mrb[0].mxu0 %v3723
  %v3846 = vpop.f32.mrb[0].mxu0
  %v3847 = vadd.f32 0.0, %v3846
  %v3848 = vpop.f32.mrb[0].mxu0
  %v3849 = vpop.f32.mrb[0].mxu0
  %v3850 = vadd.f32 0.0, %v3849
  %v3851 = vpop.f32.mrb[0].mxu0
  %3852 = vmatprep.mubr.bf16.mxu0 %v3732
  %3853 = vmatmul.mubr.bf16.gmra.mrb[0].mxu0 %v3731
  %v3854 = vpop.f32.mrb[0].mxu0
  %v3855 = vadd.f32 0.0, %v3854
  %v3856 = vpop.f32.mrb[0].mxu0
  %v3857 = vpop.f32.mrb[0].mxu0
  %v3858 = vadd.f32 0.0, %v3857
  %v3859 = vpop.f32.mrb[0].mxu0
  %3860 = vmatprep.mubr.bf16.mxu0 %v3740
  %3861 = vmatmul.mubr.bf16.gmra.mrb[0].mxu0 %v3739
  %v3862 = vpop.f32.mrb[0].mxu0
  %v3863 = vadd.f32 0.0, %v3862
  %v3864 = vpop.f32.mrb[0].mxu0
  %v3865 = vpop.f32.mrb[0].mxu0
  %v3866 = vadd.f32 0.0, %v3865
  %v3867 = vpop.f32.mrb[0].mxu0
  %3868 = vmatprep.mubr.bf16.mxu0 %v3748
  %3869 = vmatmul.mubr.bf16.gmra.mrb[0].mxu0 %v3747
  %v3870 = vpop.f32.mrb[0].mxu0
  %v3871 = vadd.f32 0.0, %v3870
  %v3872 = vpop.f32.mrb[0].mxu0
  %v3873 = vpop.f32.mrb[0].mxu0
  %v3874 = vadd.f32 0.0, %v3873
  %v3875 = vpop.f32.mrb[0].mxu0
  %3876 = vmatprep.mubr.bf16.mxu0 %v3756
  %3877 = vmatmul.mubr.bf16.gmra.mrb[0].mxu0 %v3755
  %v3878 = vpop.f32.mrb[0].mxu0
  %v3879 = vadd.f32 0.0, %v3878
  %v3880 = vpop.f32.mrb[0].mxu0
  %v3881 = vpop.f32.mrb[0].mxu0
  %v3882 = vadd.f32 0.0, %v3881
  %v3883 = vpop.f32.mrb[0].mxu0
  %3884 = vdwg.mxu0
  %3885 = vmatprep.subr.bf16.mxu0 0
  %3886 = vmatpush1.bf16.msra.mxu0 %v3527
  %3887 = vmatprep.subr.bf16.mxu0 0
  %3888 = vmatpush1.bf16.msra.mxu0 %v3528
  %3889 = vmatprep.subr.bf16.mxu0 0
  %3890 = vmatpush1.bf16.msra.mxu0 %v3529
  %3891 = vmatprep.subr.bf16.mxu0 0
  %3892 = vmatpush1.bf16.msra.mxu0 %v3530
  %3893 = vmatprep.subr.bf16.mxu0 0
  %3894 = vmatpush1.bf16.msra.mxu0 %v3531
  %3895 = vmatprep.subr.bf16.mxu0 0
  %3896 = vmatpush1.bf16.msra.mxu0 %v3532
  %3897 = vmatprep.subr.bf16.mxu0 0
  %3898 = vmatpush1.bf16.msra.mxu0 %v3533
  %3899 = vmatprep.subr.bf16.mxu0 0
  %3900 = vmatpush1.bf16.msra.mxu0 %v3534
  %3901 = vmatprep.subr.bf16.mxu0 0
  %3902 = vmatpush1.bf16.msra.mxu0 %v3535
  %3903 = vmatprep.subr.bf16.mxu0 0
  %3904 = vmatpush1.bf16.msra.mxu0 %v3536
  %3905 = vmatprep.subr.bf16.mxu0 0
  %3906 = vmatpush1.bf16.msra.mxu0 %v3537
  %3907 = vmatprep.subr.bf16.mxu0 0
  %3908 = vmatpush1.bf16.msra.mxu0 %v3538
  %3909 = vmatprep.subr.bf16.mxu0 0
  %3910 = vmatpush1.bf16.msra.mxu0 %v3539
  %3911 = vmatprep.subr.bf16.mxu0 0
  %3912 = vmatpush1.bf16.msra.mxu0 %v3540
  %3913 = vmatprep.subr.bf16.mxu0 0
  %3914 = vmatpush1.bf16.msra.mxu0 %v3541
  %3915 = vmatprep.subr.bf16.mxu0 0
  %3916 = vmatpush1.bf16.msra.mxu0 %v3542
  %3917 = vmatprep.mubr.bf16.mxu0 %v3702
  %3918 = vmatmul.mubr.bf16.gmra.mrb[0].mxu0 %v3701
  %v3919 = vpop.f32.mrb[0].mxu0
  %v3920 = vadd.f32 %v3823, %v3919
  %v3921 = vpop.f32.mrb[0].mxu0
  %v3922 = vpop.f32.mrb[0].mxu0
  %v3923 = vadd.f32 %v3826, %v3922
  %v3924 = vpop.f32.mrb[0].mxu0
  %3925 = vmatprep.mubr.bf16.mxu0 %v3710
  %3926 = vmatmul.mubr.bf16.gmra.mrb[0].mxu0 %v3709
  %v3927 = vpop.f32.mrb[0].mxu0
  %v3928 = vadd.f32 %v3831, %v3927
  %v3929 = vpop.f32.mrb[0].mxu0
  %v3930 = vpop.f32.mrb[0].mxu0
  %v3931 = vadd.f32 %v3834, %v3930
  %v3932 = vpop.f32.mrb[0].mxu0
  %3933 = vmatprep.mubr.bf16.mxu0 %v3718
  %3934 = vmatmul.mubr.bf16.gmra.mrb[0].mxu0 %v3717
  %v3935 = vpop.f32.mrb[0].mxu0
  %v3936 = vadd.f32 %v3839, %v3935
  %v3937 = vpop.f32.mrb[0].mxu0
  %v3938 = vpop.f32.mrb[0].mxu0
  %v3939 = vadd.f32 %v3842, %v3938
  %v3940 = vpop.f32.mrb[0].mxu0
  %3941 = vmatprep.mubr.bf16.mxu0 %v3726
  %3942 = vmatmul.mubr.bf16.gmra.mrb[0].mxu0 %v3725
  %v3943 = vpop.f32.mrb[0].mxu0
  %v3944 = vadd.f32 %v3847, %v3943
  %v3945 = vpop.f32.mrb[0].mxu0
  %v3946 = vpop.f32.mrb[0].mxu0
  %v3947 = vadd.f32 %v3850, %v3946
  %v3948 = vpop.f32.mrb[0].mxu0
  %3949 = vmatprep.mubr.bf16.mxu0 %v3734
  %3950 = vmatmul.mubr.bf16.gmra.mrb[0].mxu0 %v3733
  %v3951 = vpop.f32.mrb[0].mxu0
  %v3952 = vadd.f32 %v3855, %v3951
  %v3953 = vpop.f32.mrb[0].mxu0
  %v3954 = vpop.f32.mrb[0].mxu0
  %v3955 = vadd.f32 %v3858, %v3954
  %v3956 = vpop.f32.mrb[0].mxu0
  %3957 = vmatprep.mubr.bf16.mxu0 %v3742
  %3958 = vmatmul.mubr.bf16.gmra.mrb[0].mxu0 %v3741
  %v3959 = vpop.f32.mrb[0].mxu0
  %v3960 = vadd.f32 %v3863, %v3959
  %v3961 = vpop.f32.mrb[0].mxu0
  %v3962 = vpop.f32.mrb[0].mxu0
  %v3963 = vadd.f32 %v3866, %v3962
  %v3964 = vpop.f32.mrb[0].mxu0
  %3965 = vmatprep.mubr.bf16.mxu0 %v3750
  %3966 = vmatmul.mubr.bf16.gmra.mrb[0].mxu0 %v3749
  %v3967 = vpop.f32.mrb[0].mxu0
  %v3968 = vadd.f32 %v3871, %v3967
  %v3969 = vpop.f32.mrb[0].mxu0
  %v3970 = vpop.f32.mrb[0].mxu0
  %v3971 = vadd.f32 %v3874, %v3970
  %v3972 = vpop.f32.mrb[0].mxu0
  %3973 = vmatprep.mubr.bf16.mxu0 %v3758
  %3974 = vmatmul.mubr.bf16.gmra.mrb[0].mxu0 %v3757
  %v3975 = vpop.f32.mrb[0].mxu0
  %v3976 = vadd.f32 %v3879, %v3975
  %v3977 = vpop.f32.mrb[0].mxu0
  %v3978 = vpop.f32.mrb[0].mxu0
  %v3979 = vadd.f32 %v3882, %v3978
  %v3980 = vpop.f32.mrb[0].mxu0
  %3981 = vdwg.mxu0
  %3982 = vmatprep.subr.bf16.mxu0 0
  %3983 = vmatpush1.bf16.msra.mxu0 %v3543
  %3984 = vmatprep.subr.bf16.mxu0 0
  %3985 = vmatpush1.bf16.msra.mxu0 %v3544
  %3986 = vmatprep.subr.bf16.mxu0 0
  %3987 = vmatpush1.bf16.msra.mxu0 %v3545
  %3988 = vmatprep.subr.bf16.mxu0 0
  %3989 = vmatpush1.bf16.msra.mxu0 %v3546
  %3990 = vmatprep.subr.bf16.mxu0 0
  %3991 = vmatpush1.bf16.msra.mxu0 %v3547
  %3992 = vmatprep.subr.bf16.mxu0 0
  %3993 = vmatpush1.bf16.msra.mxu0 %v3548
  %3994 = vmatprep.subr.bf16.mxu0 0
  %3995 = vmatpush1.bf16.msra.mxu0 %v3549
  %3996 = vmatprep.subr.bf16.mxu0 0
  %3997 = vmatpush1.bf16.msra.mxu0 %v3550
  %3998 = vmatprep.subr.bf16.mxu0 0
  %3999 = vmatpush1.bf16.msra.mxu0 %v3551
  %4000 = vmatprep.subr.bf16.mxu0 0
  %4001 = vmatpush1.bf16.msra.mxu0 %v3552
  %4002 = vmatprep.subr.bf16.mxu0 0
  %4003 = vmatpush1.bf16.msra.mxu0 %v3553
  %4004 = vmatprep.subr.bf16.mxu0 0
  %4005 = vmatpush1.bf16.msra.mxu0 %v3554
  %4006 = vmatprep.subr.bf16.mxu0 0
  %4007 = vmatpush1.bf16.msra.mxu0 %v3555
  %4008 = vmatprep.subr.bf16.mxu0 0
  %4009 = vmatpush1.bf16.msra.mxu0 %v3556
  %4010 = vmatprep.subr.bf16.mxu0 0
  %4011 = vmatpush1.bf16.msra.mxu0 %v3557
  %4012 = vmatprep.subr.bf16.mxu0 0
  %4013 = vmatpush1.bf16.msra.mxu0 %v3558
  %4014 = vmatprep.mubr.bf16.mxu0 %v3704
  %4015 = vmatmul.mubr.bf16.gmra.mrb[0].mxu0 %v3703
  %v4016 = vpop.f32.mrb[0].mxu0
  %v4017 = vadd.f32 %v3920, %v4016
  %v4018 = vpop.f32.mrb[0].mxu0
  %v4019 = vpop.f32.mrb[0].mxu0
  %v4020 = vadd.f32 %v3923, %v4019
  %v4021 = vpop.f32.mrb[0].mxu0
  %4022 = vmatprep.mubr.bf16.mxu0 %v3712
  %4023 = vmatmul.mubr.bf16.gmra.mrb[0].mxu0 %v3711
  %v4024 = vpop.f32.mrb[0].mxu0
  %v4025 = vadd.f32 %v3928, %v4024
  %v4026 = vpop.f32.mrb[0].mxu0
  %v4027 = vpop.f32.mrb[0].mxu0
  %v4028 = vadd.f32 %v3931, %v4027
  %v4029 = vpop.f32.mrb[0].mxu0
  %4030 = vmatprep.mubr.bf16.mxu0 %v3720
  %4031 = vmatmul.mubr.bf16.gmra.mrb[0].mxu0 %v3719
  %v4032 = vpop.f32.mrb[0].mxu0
  %v4033 = vadd.f32 %v3936, %v4032
  %v4034 = vpop.f32.mrb[0].mxu0
  %v4035 = vpop.f32.mrb[0].mxu0
  %v4036 = vadd.f32 %v3939, %v4035
  %v4037 = vpop.f32.mrb[0].mxu0
  %4038 = vmatprep.mubr.bf16.mxu0 %v3728
  %4039 = vmatmul.mubr.bf16.gmra.mrb[0].mxu0 %v3727
  %v4040 = vpop.f32.mrb[0].mxu0
  %v4041 = vadd.f32 %v3944, %v4040
  %v4042 = vpop.f32.mrb[0].mxu0
  %v4043 = vpop.f32.mrb[0].mxu0
  %v4044 = vadd.f32 %v3947, %v4043
  %v4045 = vpop.f32.mrb[0].mxu0
  %4046 = vmatprep.mubr.bf16.mxu0 %v3736
  %4047 = vmatmul.mubr.bf16.gmra.mrb[0].mxu0 %v3735
  %v4048 = vpop.f32.mrb[0].mxu0
  %v4049 = vadd.f32 %v3952, %v4048
  %v4050 = vpop.f32.mrb[0].mxu0
  %v4051 = vpop.f32.mrb[0].mxu0
  %v4052 = vadd.f32 %v3955, %v4051
  %v4053 = vpop.f32.mrb[0].mxu0
  %4054 = vmatprep.mubr.bf16.mxu0 %v3744
  %4055 = vmatmul.mubr.bf16.gmra.mrb[0].mxu0 %v3743
  %v4056 = vpop.f32.mrb[0].mxu0
  %v4057 = vadd.f32 %v3960, %v4056
  %v4058 = vpop.f32.mrb[0].mxu0
  %v4059 = vpop.f32.mrb[0].mxu0
  %v4060 = vadd.f32 %v3963, %v4059
  %v4061 = vpop.f32.mrb[0].mxu0
  %4062 = vmatprep.mubr.bf16.mxu0 %v3752
  %4063 = vmatmul.mubr.bf16.gmra.mrb[0].mxu0 %v3751
  %v4064 = vpop.f32.mrb[0].mxu0
  %v4065 = vadd.f32 %v3968, %v4064
  %v4066 = vpop.f32.mrb[0].mxu0
  %v4067 = vpop.f32.mrb[0].mxu0
  %v4068 = vadd.f32 %v3971, %v4067
  %v4069 = vpop.f32.mrb[0].mxu0
  %4070 = vmatprep.mubr.bf16.mxu0 %v3760
  %4071 = vmatmul.mubr.bf16.gmra.mrb[0].mxu0 %v3759
  %v4072 = vpop.f32.mrb[0].mxu0
  %v4073 = vadd.f32 %v3976, %v4072
  %v4074 = vpop.f32.mrb[0].mxu0
  %v4075 = vpop.f32.mrb[0].mxu0
  %v4076 = vadd.f32 %v3979, %v4075
  %v4077 = vpop.f32.mrb[0].mxu0
  %4078 = vdwg.mxu0
  %4079 = vmatprep.subr.bf16.mxu0 0
  %4080 = vmatpush1.bf16.msra.mxu0 %v3559
  %4081 = vmatprep.subr.bf16.mxu0 0
  %4082 = vmatpush1.bf16.msra.mxu0 %v3560
  %4083 = vmatprep.subr.bf16.mxu0 0
  %4084 = vmatpush1.bf16.msra.mxu0 %v3561
  %4085 = vmatprep.subr.bf16.mxu0 0
  %4086 = vmatpush1.bf16.msra.mxu0 %v3562
  %4087 = vmatprep.subr.bf16.mxu0 0
  %4088 = vmatpush1.bf16.msra.mxu0 %v3563
  %4089 = vmatprep.subr.bf16.mxu0 0
  %4090 = vmatpush1.bf16.msra.mxu0 %v3564
  %4091 = vmatprep.subr.bf16.mxu0 0
  %4092 = vmatpush1.bf16.msra.mxu0 %v3565
  %4093 = vmatprep.subr.bf16.mxu0 0
  %4094 = vmatpush1.bf16.msra.mxu0 %v3566
  %4095 = vmatprep.subr.bf16.mxu0 0
  %4096 = vmatpush1.bf16.msra.mxu0 %v3567
  %4097 = vmatprep.subr.bf16.mxu0 0
  %4098 = vmatpush1.bf16.msra.mxu0 %v3568
  %4099 = vmatprep.subr.bf16.mxu0 0
  %4100 = vmatpush1.bf16.msra.mxu0 %v3569
  %4101 = vmatprep.subr.bf16.mxu0 0
  %4102 = vmatpush1.bf16.msra.mxu0 %v3570
  %4103 = vmatprep.subr.bf16.mxu0 0
  %4104 = vmatpush1.bf16.msra.mxu0 0
  %4105 = vmatprep.subr.bf16.mxu0 0
  %4106 = vmatpush1.bf16.msra.mxu0 0
  %4107 = vmatprep.subr.bf16.mxu0 0
  %4108 = vmatpush1.bf16.msra.mxu0 0
  %4109 = vmatprep.subr.bf16.mxu0 0
  %4110 = vmatpush1.bf16.msra.mxu0 0
  %4111 = vmatprep.mubr.bf16.mxu0 %v3765
  %4112 = vmatmul.mubr.bf16.gmra.mrb[0].mxu0 %v3705
  %v4113 = vpop.f32.mrb[0].mxu0
  %v4114 = vadd.f32 %v4017, %v4113
  %v4115 = vpop.f32.mrb[0].mxu0
  %v4116 = vpop.f32.mrb[0].mxu0
  %v4117 = vadd.f32 %v4020, %v4116
  %v4118 = vpop.f32.mrb[0].mxu0
  %4119 = vmatprep.mubr.bf16.mxu0 %v3768
  %4120 = vmatmul.mubr.bf16.gmra.mrb[0].mxu0 %v3713
  %v4121 = vpop.f32.mrb[0].mxu0
  %v4122 = vadd.f32 %v4025, %v4121
  %v4123 = vpop.f32.mrb[0].mxu0
  %v4124 = vpop.f32.mrb[0].mxu0
  %v4125 = vadd.f32 %v4028, %v4124
  %v4126 = vpop.f32.mrb[0].mxu0
  %4127 = vmatprep.mubr.bf16.mxu0 %v3771
  %4128 = vmatmul.mubr.bf16.gmra.mrb[0].mxu0 %v3721
  %v4129 = vpop.f32.mrb[0].mxu0
  %v4130 = vadd.f32 %v4033, %v4129
  %v4131 = vpop.f32.mrb[0].mxu0
  %v4132 = vpop.f32.mrb[0].mxu0
  %v4133 = vadd.f32 %v4036, %v4132
  %v4134 = vpop.f32.mrb[0].mxu0
  %4135 = vmatprep.mubr.bf16.mxu0 %v3774
  %4136 = vmatmul.mubr.bf16.gmra.mrb[0].mxu0 %v3729
  %v4137 = vpop.f32.mrb[0].mxu0
  %v4138 = vadd.f32 %v4041, %v4137
  %v4139 = vpop.f32.mrb[0].mxu0
  %v4140 = vpop.f32.mrb[0].mxu0
  %v4141 = vadd.f32 %v4044, %v4140
  %v4142 = vpop.f32.mrb[0].mxu0
  %4143 = vmatprep.mubr.bf16.mxu0 %v3777
  %4144 = vmatmul.mubr.bf16.gmra.mrb[0].mxu0 %v3737
  %v4145 = vpop.f32.mrb[0].mxu0
  %v4146 = vadd.f32 %v4049, %v4145
  %v4147 = vpop.f32.mrb[0].mxu0
  %v4148 = vpop.f32.mrb[0].mxu0
  %v4149 = vadd.f32 %v4052, %v4148
  %v4150 = vpop.f32.mrb[0].mxu0
  %4151 = vmatprep.mubr.bf16.mxu0 %v3780
  %4152 = vmatmul.mubr.bf16.gmra.mrb[0].mxu0 %v3745
  %v4153 = vpop.f32.mrb[0].mxu0
  %v4154 = vadd.f32 %v4057, %v4153
  %v4155 = vpop.f32.mrb[0].mxu0
  %v4156 = vpop.f32.mrb[0].mxu0
  %v4157 = vadd.f32 %v4060, %v4156
  %v4158 = vpop.f32.mrb[0].mxu0
  %4159 = vmatprep.mubr.bf16.mxu0 %v3783
  %4160 = vmatmul.mubr.bf16.gmra.mrb[0].mxu0 %v3753
  %v4161 = vpop.f32.mrb[0].mxu0
  %v4162 = vadd.f32 %v4065, %v4161
  %v4163 = vpop.f32.mrb[0].mxu0
  %v4164 = vpop.f32.mrb[0].mxu0
  %v4165 = vadd.f32 %v4068, %v4164
  %v4166 = vpop.f32.mrb[0].mxu0
  %4167 = vmatprep.mubr.bf16.mxu0 %v3786
  %4168 = vmatmul.mubr.bf16.gmra.mrb[0].mxu0 %v3761
  %v4169 = vpop.f32.mrb[0].mxu0
  %v4170 = vadd.f32 %v4073, %v4169
  %v4171 = vpop.f32.mrb[0].mxu0
  %v4172 = vpop.f32.mrb[0].mxu0
  %v4173 = vadd.f32 %v4076, %v4172
  %v4174 = vpop.f32.mrb[0].mxu0
  %4175 = vdwg.mxu0
  %v4176 = vsel %vm150, %v4114, 0.0
  %4177 = vadd.xlane.f32.xlu0 %v4176
  %v4178 = vpop.xlane.xlu0 %4177
  %v4179 = vsel %vm150, %v4117, 0.0
  %4180 = vadd.xlane.f32.xlu0 %v4179
  %v4181 = vpop.xlane.xlu0 %4180
  %v4182 = vsel %vm150, %v4122, 0.0
  %4183 = vadd.xlane.f32.xlu0 %v4182
  %v4184 = vpop.xlane.xlu0 %4183
  %v4185 = vsel %vm150, %v4125, 0.0
  %4186 = vadd.xlane.f32.xlu0 %v4185
  %v4187 = vpop.xlane.xlu0 %4186
  %v4188 = vsel %vm150, %v4130, 0.0
  %4189 = vadd.xlane.f32.xlu0 %v4188
  %v4190 = vpop.xlane.xlu0 %4189
  %v4191 = vsel %vm150, %v4133, 0.0
  %4192 = vadd.xlane.f32.xlu0 %v4191
  %v4193 = vpop.xlane.xlu0 %4192
  %v4194 = vsel %vm150, %v4138, 0.0
  %4195 = vadd.xlane.f32.xlu0 %v4194
  %v4196 = vpop.xlane.xlu0 %4195
  %v4197 = vsel %vm150, %v4141, 0.0
  %4198 = vadd.xlane.f32.xlu0 %v4197
  %v4199 = vpop.xlane.xlu0 %4198
  %v4200 = vsel %vm150, %v4146, 0.0
  %4201 = vadd.xlane.f32.xlu0 %v4200
  %v4202 = vpop.xlane.xlu0 %4201
  %v4203 = vsel %vm150, %v4149, 0.0
  %4204 = vadd.xlane.f32.xlu0 %v4203
  %v4205 = vpop.xlane.xlu0 %4204
  %v4206 = vsel %vm150, %v4154, 0.0
  %4207 = vadd.xlane.f32.xlu0 %v4206
  %v4208 = vpop.xlane.xlu0 %4207
  %v4209 = vsel %vm150, %v4157, 0.0
  %4210 = vadd.xlane.f32.xlu0 %v4209
  %v4211 = vpop.xlane.xlu0 %4210
  %v4212 = vsel %vm150, %v4162, 0.0
  %4213 = vadd.xlane.f32.xlu0 %v4212
  %v4214 = vpop.xlane.xlu0 %4213
  %v4215 = vsel %vm150, %v4165, 0.0
  %4216 = vadd.xlane.f32.xlu0 %v4215
  %v4217 = vpop.xlane.xlu0 %4216
  %v4218 = vsel %vm150, %v4170, 0.0
  %4219 = vadd.xlane.f32.xlu0 %v4218
  %v4220 = vpop.xlane.xlu0 %4219
  %v4221 = vsel %vm150, %v4173, 0.0
  %4222 = vadd.xlane.f32.xlu0 %v4221
  %v4223 = vpop.xlane.xlu0 %4222
  %v4224 = vmul.f32 %v4178, 0.020408163
  %v4225 = vmul.f32 %v4181, 0.020408163
  %v4226 = vmul.f32 %v4184, 0.020408163
  %v4227 = vmul.f32 %v4187, 0.020408163
  %v4228 = vmul.f32 %v4190, 0.020408163
  %v4229 = vmul.f32 %v4193, 0.020408163
  %v4230 = vmul.f32 %v4196, 0.020408163
  %v4231 = vmul.f32 %v4199, 0.020408163
  %v4232 = vmul.f32 %v4202, 0.020408163
  %v4233 = vmul.f32 %v4205, 0.020408163
  %v4234 = vmul.f32 %v4208, 0.020408163
  %v4235 = vmul.f32 %v4211, 0.020408163
  %v4236 = vmul.f32 %v4214, 0.020408163
  %v4237 = vmul.f32 %v4217, 0.020408163
  %v4238 = vmul.f32 %v4220, 0.020408163
  %v4239 = vmul.f32 %v4223, 0.020408163
  %v4240 = vsub.f32 %v4114, %v4224
  %v4241 = vsub.f32 %v4117, %v4225
  %v4242 = vsub.f32 %v4122, %v4226
  %v4243 = vsub.f32 %v4125, %v4227
  %v4244 = vsub.f32 %v4130, %v4228
  %v4245 = vsub.f32 %v4133, %v4229
  %v4246 = vsub.f32 %v4138, %v4230
  %v4247 = vsub.f32 %v4141, %v4231
  %v4248 = vsub.f32 %v4146, %v4232
  %v4249 = vsub.f32 %v4149, %v4233
  %v4250 = vsub.f32 %v4154, %v4234
  %v4251 = vsub.f32 %v4157, %v4235
  %v4252 = vsub.f32 %v4162, %v4236
  %v4253 = vsub.f32 %v4165, %v4237
  %v4254 = vsub.f32 %v4170, %v4238
  %v4255 = vsub.f32 %v4173, %v4239
  %v4256 = vmul.f32 %v4240, %v4240
  %v4257 = vmul.f32 %v4241, %v4241
  %v4258 = vmul.f32 %v4242, %v4242
  %v4259 = vmul.f32 %v4243, %v4243
  %v4260 = vmul.f32 %v4244, %v4244
  %v4261 = vmul.f32 %v4245, %v4245
  %v4262 = vmul.f32 %v4246, %v4246
  %v4263 = vmul.f32 %v4247, %v4247
  %v4264 = vmul.f32 %v4248, %v4248
  %v4265 = vmul.f32 %v4249, %v4249
  %v4266 = vmul.f32 %v4250, %v4250
  %v4267 = vmul.f32 %v4251, %v4251
  %v4268 = vmul.f32 %v4252, %v4252
  %v4269 = vmul.f32 %v4253, %v4253
  %v4270 = vmul.f32 %v4254, %v4254
  %v4271 = vmul.f32 %v4255, %v4255
  %v4272 = vsel %vm150, %v4256, 0.0
  %4273 = vadd.xlane.f32.xlu0 %v4272
  %v4274 = vpop.xlane.xlu0 %4273
  %v4275 = vsel %vm150, %v4257, 0.0
  %4276 = vadd.xlane.f32.xlu0 %v4275
  %v4277 = vpop.xlane.xlu0 %4276
  %v4278 = vsel %vm150, %v4258, 0.0
  %4279 = vadd.xlane.f32.xlu0 %v4278
  %v4280 = vpop.xlane.xlu0 %4279
  %v4281 = vsel %vm150, %v4259, 0.0
  %4282 = vadd.xlane.f32.xlu0 %v4281
  %v4283 = vpop.xlane.xlu0 %4282
  %v4284 = vsel %vm150, %v4260, 0.0
  %4285 = vadd.xlane.f32.xlu0 %v4284
  %v4286 = vpop.xlane.xlu0 %4285
  %v4287 = vsel %vm150, %v4261, 0.0
  %4288 = vadd.xlane.f32.xlu0 %v4287
  %v4289 = vpop.xlane.xlu0 %4288
  %v4290 = vsel %vm150, %v4262, 0.0
  %4291 = vadd.xlane.f32.xlu0 %v4290
  %v4292 = vpop.xlane.xlu0 %4291
  %v4293 = vsel %vm150, %v4263, 0.0
  %4294 = vadd.xlane.f32.xlu0 %v4293
  %v4295 = vpop.xlane.xlu0 %4294
  %v4296 = vsel %vm150, %v4264, 0.0
  %4297 = vadd.xlane.f32.xlu0 %v4296
  %v4298 = vpop.xlane.xlu0 %4297
  %v4299 = vsel %vm150, %v4265, 0.0
  %4300 = vadd.xlane.f32.xlu0 %v4299
  %v4301 = vpop.xlane.xlu0 %4300
  %v4302 = vsel %vm150, %v4266, 0.0
  %4303 = vadd.xlane.f32.xlu0 %v4302
  %v4304 = vpop.xlane.xlu0 %4303
  %v4305 = vsel %vm150, %v4267, 0.0
  %4306 = vadd.xlane.f32.xlu0 %v4305
  %v4307 = vpop.xlane.xlu0 %4306
  %v4308 = vsel %vm150, %v4268, 0.0
  %4309 = vadd.xlane.f32.xlu0 %v4308
  %v4310 = vpop.xlane.xlu0 %4309
  %v4311 = vsel %vm150, %v4269, 0.0
  %4312 = vadd.xlane.f32.xlu0 %v4311
  %v4313 = vpop.xlane.xlu0 %4312
  %v4314 = vsel %vm150, %v4270, 0.0
  %4315 = vadd.xlane.f32.xlu0 %v4314
  %v4316 = vpop.xlane.xlu0 %4315
  %v4317 = vsel %vm150, %v4271, 0.0
  %4318 = vadd.xlane.f32.xlu0 %v4317
  %v4319 = vpop.xlane.xlu0 %4318
  %v4320 = vmul.f32 %v4274, 0.020408163
  %v4321 = vmul.f32 %v4277, 0.020408163
  %v4322 = vmul.f32 %v4280, 0.020408163
  %v4323 = vmul.f32 %v4283, 0.020408163
  %v4324 = vmul.f32 %v4286, 0.020408163
  %v4325 = vmul.f32 %v4289, 0.020408163
  %v4326 = vmul.f32 %v4292, 0.020408163
  %v4327 = vmul.f32 %v4295, 0.020408163
  %v4328 = vmul.f32 %v4298, 0.020408163
  %v4329 = vmul.f32 %v4301, 0.020408163
  %v4330 = vmul.f32 %v4304, 0.020408163
  %v4331 = vmul.f32 %v4307, 0.020408163
  %v4332 = vmul.f32 %v4310, 0.020408163
  %v4333 = vmul.f32 %v4313, 0.020408163
  %v4334 = vmul.f32 %v4316, 0.020408163
  %v4335 = vmul.f32 %v4319, 0.020408163
  %v4336 = vld [vmem:[%s4] sm:$0xff]
  %v4337 = vld [vmem:[%s4 + $0x8] sm:$0xff]
  %v4338 = vld [vmem:[%s4 + $0x10] sm:$0xff]
  %v4339 = vld [vmem:[%s4 + $0x18] sm:$0xff]
  %v4340 = vld [vmem:[%s4 + $0x20] sm:$0xff]
  %v4341 = vld [vmem:[%s4 + $0x28] sm:$0xff]
  %v4342 = vld [vmem:[%s4 + $0x30] sm:$0xff]
  %v4343 = vld [vmem:[%s4 + $0x38] sm:$0xff]
  %v4344 = vld [vmem:[%s4 + $0x40] sm:$0xff]
  %v4345 = vld [vmem:[%s4 + $0x48] sm:$0xff]
  %v4346 = vld [vmem:[%s4 + $0x50] sm:$0xff]
  %v4347 = vld [vmem:[%s4 + $0x58] sm:$0xff]
  %v4348 = vld [vmem:[%s4 + $0x60] sm:$0xff]
  %v4349 = vld [vmem:[%s4 + $0x68] sm:$0xff]
  %v4350 = vld [vmem:[%s4 + $0x70] sm:$0xff]
  %v4351 = vld [vmem:[%s4 + $0x78] sm:$0xff]
  %v4352 = vadd.f32 %v4320, 1e-05
  %v4353 = vadd.f32 %v4321, 1e-05
  %v4354 = vadd.f32 %v4322, 1e-05
  %v4355 = vadd.f32 %v4323, 1e-05
  %v4356 = vadd.f32 %v4324, 1e-05
  %v4357 = vadd.f32 %v4325, 1e-05
  %v4358 = vadd.f32 %v4326, 1e-05
  %v4359 = vadd.f32 %v4327, 1e-05
  %v4360 = vadd.f32 %v4328, 1e-05
  %v4361 = vadd.f32 %v4329, 1e-05
  %v4362 = vadd.f32 %v4330, 1e-05
  %v4363 = vadd.f32 %v4331, 1e-05
  %v4364 = vadd.f32 %v4332, 1e-05
  %v4365 = vadd.f32 %v4333, 1e-05
  %v4366 = vadd.f32 %v4334, 1e-05
  %v4367 = vadd.f32 %v4335, 1e-05
  %v4368 = vrsqrt.pop %v4352
  %v4369 = vrsqrt.pop %v4353
  %v4370 = vrsqrt.pop %v4354
  %v4371 = vrsqrt.pop %v4355
  %v4372 = vrsqrt.pop %v4356
  %v4373 = vrsqrt.pop %v4357
  %v4374 = vrsqrt.pop %v4358
  %v4375 = vrsqrt.pop %v4359
  %v4376 = vrsqrt.pop %v4360
  %v4377 = vrsqrt.pop %v4361
  %v4378 = vrsqrt.pop %v4362
  %v4379 = vrsqrt.pop %v4363
  %v4380 = vrsqrt.pop %v4364
  %v4381 = vrsqrt.pop %v4365
  %v4382 = vrsqrt.pop %v4366
  %v4383 = vrsqrt.pop %v4367
  %v4384 = vmul.f32 %v4336, %v4368
  %v4385 = vmul.f32 %v4337, %v4369
  %v4386 = vmul.f32 %v4338, %v4370
  %v4387 = vmul.f32 %v4339, %v4371
  %v4388 = vmul.f32 %v4340, %v4372
  %v4389 = vmul.f32 %v4341, %v4373
  %v4390 = vmul.f32 %v4342, %v4374
  %v4391 = vmul.f32 %v4343, %v4375
  %v4392 = vmul.f32 %v4344, %v4376
  %v4393 = vmul.f32 %v4345, %v4377
  %v4394 = vmul.f32 %v4346, %v4378
  %v4395 = vmul.f32 %v4347, %v4379
  %v4396 = vmul.f32 %v4348, %v4380
  %v4397 = vmul.f32 %v4349, %v4381
  %v4398 = vmul.f32 %v4350, %v4382
  %v4399 = vmul.f32 %v4351, %v4383
  %4401 = vset.pattern.permute.xlu0 0
  %4402 = vperm.xlu0 %4401, %v4384
  %v4403 = vpop.permute.xlu0 %4402
  %4406 = vset.pattern.permute.xlu0 0
  %4407 = vperm.xlu0 %4406, %v4385
  %v4408 = vpop.permute.xlu0 %4407
  %4411 = vset.pattern.permute.xlu0 0
  %4412 = vperm.xlu0 %4411, %v4386
  %v4413 = vpop.permute.xlu0 %4412
  %4416 = vset.pattern.permute.xlu0 0
  %4417 = vperm.xlu0 %4416, %v4387
  %v4418 = vpop.permute.xlu0 %4417
  %4421 = vset.pattern.permute.xlu0 0
  %4422 = vperm.xlu0 %4421, %v4388
  %v4423 = vpop.permute.xlu0 %4422
  %4426 = vset.pattern.permute.xlu0 0
  %4427 = vperm.xlu0 %4426, %v4389
  %v4428 = vpop.permute.xlu0 %4427
  %4431 = vset.pattern.permute.xlu0 0
  %4432 = vperm.xlu0 %4431, %v4390
  %v4433 = vpop.permute.xlu0 %4432
  %4436 = vset.pattern.permute.xlu0 0
  %4437 = vperm.xlu0 %4436, %v4391
  %v4438 = vpop.permute.xlu0 %4437
  %4441 = vset.pattern.permute.xlu0 0
  %4442 = vperm.xlu0 %4441, %v4392
  %v4443 = vpop.permute.xlu0 %4442
  %4446 = vset.pattern.permute.xlu0 0
  %4447 = vperm.xlu0 %4446, %v4393
  %v4448 = vpop.permute.xlu0 %4447
  %4451 = vset.pattern.permute.xlu0 0
  %4452 = vperm.xlu0 %4451, %v4394
  %v4453 = vpop.permute.xlu0 %4452
  %4456 = vset.pattern.permute.xlu0 0
  %4457 = vperm.xlu0 %4456, %v4395
  %v4458 = vpop.permute.xlu0 %4457
  %4461 = vset.pattern.permute.xlu0 0
  %4462 = vperm.xlu0 %4461, %v4396
  %v4463 = vpop.permute.xlu0 %4462
  %4466 = vset.pattern.permute.xlu0 0
  %4467 = vperm.xlu0 %4466, %v4397
  %v4468 = vpop.permute.xlu0 %4467
  %4471 = vset.pattern.permute.xlu0 0
  %4472 = vperm.xlu0 %4471, %v4398
  %v4473 = vpop.permute.xlu0 %4472
  %4476 = vset.pattern.permute.xlu0 0
  %4477 = vperm.xlu0 %4476, %v4399
  %v4478 = vpop.permute.xlu0 %4477
  %v4480 = vmul.f32 %v4240, %v4403
  %v4481 = vmul.f32 %v4241, %v4408
  %v4482 = vmul.f32 %v4242, %v4413
  %v4483 = vmul.f32 %v4243, %v4418
  %v4484 = vmul.f32 %v4244, %v4423
  %v4485 = vmul.f32 %v4245, %v4428
  %v4486 = vmul.f32 %v4246, %v4433
  %v4487 = vmul.f32 %v4247, %v4438
  %v4488 = vmul.f32 %v4248, %v4443
  %v4489 = vmul.f32 %v4249, %v4448
  %v4490 = vmul.f32 %v4250, %v4453
  %v4491 = vmul.f32 %v4251, %v4458
  %v4492 = vmul.f32 %v4252, %v4463
  %v4493 = vmul.f32 %v4253, %v4468
  %v4494 = vmul.f32 %v4254, %v4473
  %v4495 = vmul.f32 %v4255, %v4478
  %v4496 = vld [vmem:[%s5] sm:$0xff]
  %v4497 = vld [vmem:[%s5 + $0x8] sm:$0xff]
  %v4498 = vld [vmem:[%s5 + $0x10] sm:$0xff]
  %v4499 = vld [vmem:[%s5 + $0x18] sm:$0xff]
  %v4500 = vld [vmem:[%s5 + $0x20] sm:$0xff]
  %v4501 = vld [vmem:[%s5 + $0x28] sm:$0xff]
  %v4502 = vld [vmem:[%s5 + $0x30] sm:$0xff]
  %v4503 = vld [vmem:[%s5 + $0x38] sm:$0xff]
  %v4504 = vld [vmem:[%s5 + $0x40] sm:$0xff]
  %v4505 = vld [vmem:[%s5 + $0x48] sm:$0xff]
  %v4506 = vld [vmem:[%s5 + $0x50] sm:$0xff]
  %v4507 = vld [vmem:[%s5 + $0x58] sm:$0xff]
  %v4508 = vld [vmem:[%s5 + $0x60] sm:$0xff]
  %v4509 = vld [vmem:[%s5 + $0x68] sm:$0xff]
  %v4510 = vld [vmem:[%s5 + $0x70] sm:$0xff]
  %v4511 = vld [vmem:[%s5 + $0x78] sm:$0xff]
  %4513 = vset.pattern.permute.xlu0 0
  %4514 = vperm.xlu0 %4513, %v4496
  %v4515 = vpop.permute.xlu0 %4514
  %4518 = vset.pattern.permute.xlu0 0
  %4519 = vperm.xlu0 %4518, %v4497
  %v4520 = vpop.permute.xlu0 %4519
  %4523 = vset.pattern.permute.xlu0 0
  %4524 = vperm.xlu0 %4523, %v4498
  %v4525 = vpop.permute.xlu0 %4524
  %4528 = vset.pattern.permute.xlu0 0
  %4529 = vperm.xlu0 %4528, %v4499
  %v4530 = vpop.permute.xlu0 %4529
  %4533 = vset.pattern.permute.xlu0 0
  %4534 = vperm.xlu0 %4533, %v4500
  %v4535 = vpop.permute.xlu0 %4534
  %4538 = vset.pattern.permute.xlu0 0
  %4539 = vperm.xlu0 %4538, %v4501
  %v4540 = vpop.permute.xlu0 %4539
  %4543 = vset.pattern.permute.xlu0 0
  %4544 = vperm.xlu0 %4543, %v4502
  %v4545 = vpop.permute.xlu0 %4544
  %4548 = vset.pattern.permute.xlu0 0
  %4549 = vperm.xlu0 %4548, %v4503
  %v4550 = vpop.permute.xlu0 %4549
  %4553 = vset.pattern.permute.xlu0 0
  %4554 = vperm.xlu0 %4553, %v4504
  %v4555 = vpop.permute.xlu0 %4554
  %4558 = vset.pattern.permute.xlu0 0
  %4559 = vperm.xlu0 %4558, %v4505
  %v4560 = vpop.permute.xlu0 %4559
  %4563 = vset.pattern.permute.xlu0 0
  %4564 = vperm.xlu0 %4563, %v4506
  %v4565 = vpop.permute.xlu0 %4564
  %4568 = vset.pattern.permute.xlu0 0
  %4569 = vperm.xlu0 %4568, %v4507
  %v4570 = vpop.permute.xlu0 %4569
  %4573 = vset.pattern.permute.xlu0 0
  %4574 = vperm.xlu0 %4573, %v4508
  %v4575 = vpop.permute.xlu0 %4574
  %4578 = vset.pattern.permute.xlu0 0
  %4579 = vperm.xlu0 %4578, %v4509
  %v4580 = vpop.permute.xlu0 %4579
  %4583 = vset.pattern.permute.xlu0 0
  %4584 = vperm.xlu0 %4583, %v4510
  %v4585 = vpop.permute.xlu0 %4584
  %4588 = vset.pattern.permute.xlu0 0
  %4589 = vperm.xlu0 %4588, %v4511
  %v4590 = vpop.permute.xlu0 %4589
  %v4592 = vadd.f32 %v4480, %v4515
  %v4593 = vadd.f32 %v4481, %v4520
  %v4594 = vadd.f32 %v4482, %v4525
  %v4595 = vadd.f32 %v4483, %v4530
  %v4596 = vadd.f32 %v4484, %v4535
  %v4597 = vadd.f32 %v4485, %v4540
  %v4598 = vadd.f32 %v4486, %v4545
  %v4599 = vadd.f32 %v4487, %v4550
  %v4600 = vadd.f32 %v4488, %v4555
  %v4601 = vadd.f32 %v4489, %v4560
  %v4602 = vadd.f32 %v4490, %v4565
  %v4603 = vadd.f32 %v4491, %v4570
  %v4604 = vadd.f32 %v4492, %v4575
  %v4605 = vadd.f32 %v4493, %v4580
  %v4606 = vadd.f32 %v4494, %v4585
  %v4607 = vadd.f32 %v4495, %v4590
  %v4608 = vmax.f32 %v4592, 0.0
  %v4609 = vmax.f32 %v4593, 0.0
  %v4610 = vmax.f32 %v4594, 0.0
  %v4611 = vmax.f32 %v4595, 0.0
  %v4612 = vmax.f32 %v4596, 0.0
  %v4613 = vmax.f32 %v4597, 0.0
  %v4614 = vmax.f32 %v4598, 0.0
  %v4615 = vmax.f32 %v4599, 0.0
  %v4616 = vmax.f32 %v4600, 0.0
  %v4617 = vmax.f32 %v4601, 0.0
  %v4618 = vmax.f32 %v4602, 0.0
  %v4619 = vmax.f32 %v4603, 0.0
  %v4620 = vmax.f32 %v4604, 0.0
  %v4621 = vmax.f32 %v4605, 0.0
  %v4622 = vmax.f32 %v4606, 0.0
  %v4623 = vmax.f32 %v4607, 0.0
  %v4624 = vpack.c.bf16 %v4609, %v4608
  %v4625 = vpack.c.bf16 %v4611, %v4610
  %v4626 = vpack.c.bf16 %v4613, %v4612
  %v4627 = vpack.c.bf16 %v4615, %v4614
  %v4628 = vpack.c.bf16 %v4617, %v4616
  %v4629 = vpack.c.bf16 %v4619, %v4618
  %v4630 = vpack.c.bf16 %v4621, %v4620
  %v4631 = vpack.c.bf16 %v4623, %v4622
  %4640 = vrot.lane.b32.xlu0 %v4624, 8
  %v4641 = vpop.permute.xlu0 %4640
  %4642 = vrot.lane.b32.xlu0 %v4625, 8
  %v4643 = vpop.permute.xlu0 %4642
  %4644 = vrot.lane.b32.xlu0 %v4626, 8
  %v4645 = vpop.permute.xlu0 %4644
  %4646 = vrot.lane.b32.xlu0 %v4627, 8
  %v4647 = vpop.permute.xlu0 %4646
  %4648 = vrot.lane.b32.xlu0 %v4628, 8
  %v4649 = vpop.permute.xlu0 %4648
  %4650 = vrot.lane.b32.xlu0 %v4629, 8
  %v4651 = vpop.permute.xlu0 %4650
  %4652 = vrot.lane.b32.xlu0 %v4630, 8
  %v4653 = vpop.permute.xlu0 %4652
  %4654 = vrot.lane.b32.xlu0 %v4631, 8
  %v4655 = vpop.permute.xlu0 %4654
  %vm4656 = vcmask 64512
  %v4659 = vsel %vm4656, 0, %v4641
  %v4661 = vsel %vm4656, 0, %v4643
  %v4663 = vsel %vm4656, 0, %v4645
  %v4665 = vsel %vm4656, 0, %v4647
  %v4667 = vsel %vm4656, 0, %v4649
  %v4669 = vsel %vm4656, 0, %v4651
  %v4671 = vsel %vm4656, 0, %v4653
  %v4673 = vsel %vm4656, 0, %v4655
  %vm4674 = vcmask 465920
  %v4675 = vsel %vm4674, %v4659, 0
  %v4677 = vsel %vm4674, %v4661, 0
  %v4679 = vsel %vm4674, %v4663, 0
  %v4681 = vsel %vm4674, %v4665, 0
  %v4683 = vsel %vm4674, %v4667, 0
  %v4685 = vsel %vm4674, %v4669, 0
  %v4687 = vsel %vm4674, %v4671, 0
  %v4689 = vsel %vm4674, %v4673, 0
  %v4691 = vld [vmem:[%s7] sm:$0xf]
  %v4692 = vld [vmem:[%s7 + $0x4] sm:$0x1]
  %v4694 = vpack.i.b16 %v4691, %v4691
  %v4696 = vlaneseq
  %v4697 = vshrl.u32 %v4696, 7
  %v4698 = vsub.s32 0, %v4697
  %v4699 = vrot.slane %v4694, %v4698
  %v4700 = vmul.bf16 %v4675, %v4699
  %v4701 = vmul.bf16 %v4677, %v4699
  %v4702 = vmul.bf16 %v4679, %v4699
  %v4703 = vmul.bf16 %v4681, %v4699
  %v4704 = vmul.bf16 %v4683, %v4699
  %v4705 = vmul.bf16 %v4685, %v4699
  %v4706 = vmul.bf16 %v4687, %v4699
  %v4707 = vmul.bf16 %v4689, %v4699
  %v4708 = vshrl.u32 %v4691, 16
  %v4709 = vpack.i.b16 %v4708, %v4708
  %v4711 = vlaneseq
  %v4712 = vshrl.u32 %v4711, 7
  %v4713 = vsub.s32 0, %v4712
  %v4714 = vrot.slane %v4709, %v4713
  %4716 = vrot.lane.b32.xlu0 %v4714, 1
  %v4717 = vpop.permute.xlu0 %4716
  %v4719 = vmul.bf16 %v4675, %v4717
  %v4720 = vmul.bf16 %v4677, %v4717
  %v4721 = vmul.bf16 %v4679, %v4717
  %v4722 = vmul.bf16 %v4681, %v4717
  %v4723 = vmul.bf16 %v4683, %v4717
  %v4724 = vmul.bf16 %v4685, %v4717
  %v4725 = vmul.bf16 %v4687, %v4717
  %v4726 = vmul.bf16 %v4689, %v4717
  %v4727 = vlaneseq
  %v4728 = vshrl.u32 %v4727, 7
  %v4729 = vsub.s32 1, %v4728
  %v4730 = vrot.slane %v4694, %v4729
  %4732 = vrot.lane.b32.xlu0 %v4730, 2
  %v4733 = vpop.permute.xlu0 %4732
  %v4735 = vmul.bf16 %v4675, %v4733
  %v4736 = vmul.bf16 %v4677, %v4733
  %v4737 = vmul.bf16 %v4679, %v4733
  %v4738 = vmul.bf16 %v4681, %v4733
  %v4739 = vmul.bf16 %v4683, %v4733
  %v4740 = vmul.bf16 %v4685, %v4733
  %v4741 = vmul.bf16 %v4687, %v4733
  %v4742 = vmul.bf16 %v4689, %v4733
  %v4743 = vlaneseq
  %v4744 = vshrl.u32 %v4743, 7
  %v4745 = vsub.s32 1, %v4744
  %v4746 = vrot.slane %v4709, %v4745
  %4748 = vrot.lane.b32.xlu0 %v4746, 7
  %v4749 = vpop.permute.xlu0 %4748
  %v4751 = vmul.bf16 %v4675, %v4749
  %v4752 = vmul.bf16 %v4677, %v4749
  %v4753 = vmul.bf16 %v4679, %v4749
  %v4754 = vmul.bf16 %v4681, %v4749
  %v4755 = vmul.bf16 %v4683, %v4749
  %v4756 = vmul.bf16 %v4685, %v4749
  %v4757 = vmul.bf16 %v4687, %v4749
  %v4758 = vmul.bf16 %v4689, %v4749
  %v4759 = vlaneseq
  %v4760 = vshrl.u32 %v4759, 7
  %v4761 = vsub.s32 2, %v4760
  %v4762 = vrot.slane %v4709, %v4761
  %4764 = vrot.lane.b32.xlu0 %v4762, 9
  %v4765 = vpop.permute.xlu0 %4764
  %v4767 = vmul.bf16 %v4675, %v4765
  %v4768 = vmul.bf16 %v4677, %v4765
  %v4769 = vmul.bf16 %v4679, %v4765
  %v4770 = vmul.bf16 %v4681, %v4765
  %v4771 = vmul.bf16 %v4683, %v4765
  %v4772 = vmul.bf16 %v4685, %v4765
  %v4773 = vmul.bf16 %v4687, %v4765
  %v4774 = vmul.bf16 %v4689, %v4765
  %v4775 = vlaneseq
  %v4776 = vshrl.u32 %v4775, 7
  %v4777 = vsub.s32 3, %v4776
  %v4778 = vrot.slane %v4694, %v4777
  %4780 = vrot.lane.b32.xlu0 %v4778, 14
  %v4781 = vpop.permute.xlu0 %4780
  %v4783 = vmul.bf16 %v4675, %v4781
  %v4784 = vmul.bf16 %v4677, %v4781
  %v4785 = vmul.bf16 %v4679, %v4781
  %v4786 = vmul.bf16 %v4681, %v4781
  %v4787 = vmul.bf16 %v4683, %v4781
  %v4788 = vmul.bf16 %v4685, %v4781
  %v4789 = vmul.bf16 %v4687, %v4781
  %v4790 = vmul.bf16 %v4689, %v4781
  %v4791 = vlaneseq
  %v4792 = vshrl.u32 %v4791, 7
  %v4793 = vsub.s32 3, %v4792
  %v4794 = vrot.slane %v4709, %v4793
  %4796 = vrot.lane.b32.xlu0 %v4794, 15
  %v4797 = vpop.permute.xlu0 %4796
  %v4799 = vmul.bf16 %v4675, %v4797
  %v4800 = vmul.bf16 %v4677, %v4797
  %v4801 = vmul.bf16 %v4679, %v4797
  %v4802 = vmul.bf16 %v4681, %v4797
  %v4803 = vmul.bf16 %v4683, %v4797
  %v4804 = vmul.bf16 %v4685, %v4797
  %v4805 = vmul.bf16 %v4687, %v4797
  %v4806 = vmul.bf16 %v4689, %v4797
  %v4808 = vpack.i.b16 %v4692, %v4692
  %v4810 = vlaneseq
  %v4811 = vshrl.u32 %v4810, 7
  %v4812 = vsub.s32 0, %v4811
  %v4813 = vrot.slane %v4808, %v4812
  %4815 = vrot.lane.b32.xlu0 %v4813, 16
  %v4816 = vpop.permute.xlu0 %4815
  %v4818 = vmul.bf16 %v4675, %v4816
  %v4819 = vmul.bf16 %v4677, %v4816
  %v4820 = vmul.bf16 %v4679, %v4816
  %v4821 = vmul.bf16 %v4681, %v4816
  %v4822 = vmul.bf16 %v4683, %v4816
  %v4823 = vmul.bf16 %v4685, %v4816
  %v4824 = vmul.bf16 %v4687, %v4816
  %v4825 = vmul.bf16 %v4689, %v4816
  %4834 = vrot.lane.b32.xlu0 %v4719, 127
  %v4835 = vpop.permute.xlu0 %4834
  %4836 = vrot.lane.b32.xlu0 %v4720, 127
  %v4837 = vpop.permute.xlu0 %4836
  %4838 = vrot.lane.b32.xlu0 %v4721, 127
  %v4839 = vpop.permute.xlu0 %4838
  %4840 = vrot.lane.b32.xlu0 %v4722, 127
  %v4841 = vpop.permute.xlu0 %4840
  %4842 = vrot.lane.b32.xlu0 %v4723, 127
  %v4843 = vpop.permute.xlu0 %4842
  %4844 = vrot.lane.b32.xlu0 %v4724, 127
  %v4845 = vpop.permute.xlu0 %4844
  %4846 = vrot.lane.b32.xlu0 %v4725, 127
  %v4847 = vpop.permute.xlu0 %4846
  %4848 = vrot.lane.b32.xlu0 %v4726, 127
  %v4849 = vpop.permute.xlu0 %4848
  %4866 = vrot.lane.b32.xlu0 %v4735, 126
  %v4867 = vpop.permute.xlu0 %4866
  %4868 = vrot.lane.b32.xlu0 %v4736, 126
  %v4869 = vpop.permute.xlu0 %4868
  %4870 = vrot.lane.b32.xlu0 %v4737, 126
  %v4871 = vpop.permute.xlu0 %4870
  %4872 = vrot.lane.b32.xlu0 %v4738, 126
  %v4873 = vpop.permute.xlu0 %4872
  %4874 = vrot.lane.b32.xlu0 %v4739, 126
  %v4875 = vpop.permute.xlu0 %4874
  %4876 = vrot.lane.b32.xlu0 %v4740, 126
  %v4877 = vpop.permute.xlu0 %4876
  %4878 = vrot.lane.b32.xlu0 %v4741, 126
  %v4879 = vpop.permute.xlu0 %4878
  %4880 = vrot.lane.b32.xlu0 %v4742, 126
  %v4881 = vpop.permute.xlu0 %4880
  %4898 = vrot.lane.b32.xlu0 %v4751, 121
  %v4899 = vpop.permute.xlu0 %4898
  %4900 = vrot.lane.b32.xlu0 %v4752, 121
  %v4901 = vpop.permute.xlu0 %4900
  %4902 = vrot.lane.b32.xlu0 %v4753, 121
  %v4903 = vpop.permute.xlu0 %4902
  %4904 = vrot.lane.b32.xlu0 %v4754, 121
  %v4905 = vpop.permute.xlu0 %4904
  %4906 = vrot.lane.b32.xlu0 %v4755, 121
  %v4907 = vpop.permute.xlu0 %4906
  %4908 = vrot.lane.b32.xlu0 %v4756, 121
  %v4909 = vpop.permute.xlu0 %4908
  %4910 = vrot.lane.b32.xlu0 %v4757, 121
  %v4911 = vpop.permute.xlu0 %4910
  %4912 = vrot.lane.b32.xlu0 %v4758, 121
  %v4913 = vpop.permute.xlu0 %4912
  %4930 = vrot.lane.b32.xlu0 %v4675, 120
  %v4931 = vpop.permute.xlu0 %4930
  %4932 = vrot.lane.b32.xlu0 %v4677, 120
  %v4933 = vpop.permute.xlu0 %4932
  %4934 = vrot.lane.b32.xlu0 %v4679, 120
  %v4935 = vpop.permute.xlu0 %4934
  %4936 = vrot.lane.b32.xlu0 %v4681, 120
  %v4937 = vpop.permute.xlu0 %4936
  %4938 = vrot.lane.b32.xlu0 %v4683, 120
  %v4939 = vpop.permute.xlu0 %4938
  %4940 = vrot.lane.b32.xlu0 %v4685, 120
  %v4941 = vpop.permute.xlu0 %4940
  %4942 = vrot.lane.b32.xlu0 %v4687, 120
  %v4943 = vpop.permute.xlu0 %4942
  %4944 = vrot.lane.b32.xlu0 %v4689, 120
  %v4945 = vpop.permute.xlu0 %4944
  %4962 = vrot.lane.b32.xlu0 %v4767, 119
  %v4963 = vpop.permute.xlu0 %4962
  %4964 = vrot.lane.b32.xlu0 %v4768, 119
  %v4965 = vpop.permute.xlu0 %4964
  %4966 = vrot.lane.b32.xlu0 %v4769, 119
  %v4967 = vpop.permute.xlu0 %4966
  %4968 = vrot.lane.b32.xlu0 %v4770, 119
  %v4969 = vpop.permute.xlu0 %4968
  %4970 = vrot.lane.b32.xlu0 %v4771, 119
  %v4971 = vpop.permute.xlu0 %4970
  %4972 = vrot.lane.b32.xlu0 %v4772, 119
  %v4973 = vpop.permute.xlu0 %4972
  %4974 = vrot.lane.b32.xlu0 %v4773, 119
  %v4975 = vpop.permute.xlu0 %4974
  %4976 = vrot.lane.b32.xlu0 %v4774, 119
  %v4977 = vpop.permute.xlu0 %4976
  %4994 = vrot.lane.b32.xlu0 %v4783, 114
  %v4995 = vpop.permute.xlu0 %4994
  %4996 = vrot.lane.b32.xlu0 %v4784, 114
  %v4997 = vpop.permute.xlu0 %4996
  %4998 = vrot.lane.b32.xlu0 %v4785, 114
  %v4999 = vpop.permute.xlu0 %4998
  %5000 = vrot.lane.b32.xlu0 %v4786, 114
  %v5001 = vpop.permute.xlu0 %5000
  %5002 = vrot.lane.b32.xlu0 %v4787, 114
  %v5003 = vpop.permute.xlu0 %5002
  %5004 = vrot.lane.b32.xlu0 %v4788, 114
  %v5005 = vpop.permute.xlu0 %5004
  %5006 = vrot.lane.b32.xlu0 %v4789, 114
  %v5007 = vpop.permute.xlu0 %5006
  %5008 = vrot.lane.b32.xlu0 %v4790, 114
  %v5009 = vpop.permute.xlu0 %5008
  %5026 = vrot.lane.b32.xlu0 %v4799, 113
  %v5027 = vpop.permute.xlu0 %5026
  %5028 = vrot.lane.b32.xlu0 %v4800, 113
  %v5029 = vpop.permute.xlu0 %5028
  %5030 = vrot.lane.b32.xlu0 %v4801, 113
  %v5031 = vpop.permute.xlu0 %5030
  %5032 = vrot.lane.b32.xlu0 %v4802, 113
  %v5033 = vpop.permute.xlu0 %5032
  %5034 = vrot.lane.b32.xlu0 %v4803, 113
  %v5035 = vpop.permute.xlu0 %5034
  %5036 = vrot.lane.b32.xlu0 %v4804, 113
  %v5037 = vpop.permute.xlu0 %5036
  %5038 = vrot.lane.b32.xlu0 %v4805, 113
  %v5039 = vpop.permute.xlu0 %5038
  %5040 = vrot.lane.b32.xlu0 %v4806, 113
  %v5041 = vpop.permute.xlu0 %5040
  %5058 = vrot.lane.b32.xlu0 %v4818, 112
  %v5059 = vpop.permute.xlu0 %5058
  %5060 = vrot.lane.b32.xlu0 %v4819, 112
  %v5061 = vpop.permute.xlu0 %5060
  %5062 = vrot.lane.b32.xlu0 %v4820, 112
  %v5063 = vpop.permute.xlu0 %5062
  %5064 = vrot.lane.b32.xlu0 %v4821, 112
  %v5065 = vpop.permute.xlu0 %5064
  %5066 = vrot.lane.b32.xlu0 %v4822, 112
  %v5067 = vpop.permute.xlu0 %5066
  %5068 = vrot.lane.b32.xlu0 %v4823, 112
  %v5069 = vpop.permute.xlu0 %5068
  %5070 = vrot.lane.b32.xlu0 %v4824, 112
  %v5071 = vpop.permute.xlu0 %5070
  %5072 = vrot.lane.b32.xlu0 %v4825, 112
  %v5073 = vpop.permute.xlu0 %5072
  %v5082 = vld [vmem:[%s6] sm:$0xff]
  %v5083 = vld [vmem:[%s6 + $0x8] sm:$0xff]
  %v5084 = vld [vmem:[%s6 + $0x10] sm:$0xff]
  %v5085 = vld [vmem:[%s6 + $0x18] sm:$0xff]
  %v5086 = vld [vmem:[%s6 + $0x20] sm:$0xf]
  %v5087 = vld [vmem:[%s6 + $0x24] sm:$0xff]
  %v5088 = vld [vmem:[%s6 + $0x2c] sm:$0xff]
  %v5089 = vld [vmem:[%s6 + $0x34] sm:$0xff]
  %v5090 = vld [vmem:[%s6 + $0x3c] sm:$0xff]
  %v5091 = vld [vmem:[%s6 + $0x44] sm:$0xf]
  %v5092 = vld [vmem:[%s6 + $0x48] sm:$0xff]
  %v5093 = vld [vmem:[%s6 + $0x50] sm:$0xff]
  %v5094 = vld [vmem:[%s6 + $0x58] sm:$0xff]
  %v5095 = vld [vmem:[%s6 + $0x60] sm:$0xff]
  %v5096 = vld [vmem:[%s6 + $0x68] sm:$0xf]
  %v5097 = vld [vmem:[%s6 + $0x6c] sm:$0xff]
  %v5098 = vld [vmem:[%s6 + $0x74] sm:$0xff]
  %v5099 = vld [vmem:[%s6 + $0x7c] sm:$0xff]
  %v5100 = vld [vmem:[%s6 + $0x84] sm:$0xff]
  %v5101 = vld [vmem:[%s6 + $0x8c] sm:$0xf]
  %v5122 = vunpack.c.l.b16 %v5082
  %v5123 = vunpack.c.h.b16 %v5082
  %v5124 = vunpack.c.l.b16 %v5083
  %v5125 = vunpack.c.h.b16 %v5083
  %v5126 = vunpack.c.l.b16 %v5084
  %v5127 = vunpack.c.h.b16 %v5084
  %v5128 = vunpack.c.l.b16 %v5085
  %v5129 = vunpack.c.h.b16 %v5085
  %v5130 = vunpack.c.l.b16 %v5086
  %v5131 = vunpack.c.l.b16 %v5087
  %v5132 = vunpack.c.h.b16 %v5087
  %v5133 = vunpack.c.l.b16 %v5088
  %v5134 = vunpack.c.h.b16 %v5088
  %v5135 = vunpack.c.l.b16 %v5089
  %v5136 = vunpack.c.h.b16 %v5089
  %v5137 = vunpack.c.l.b16 %v5090
  %v5138 = vunpack.c.h.b16 %v5090
  %v5139 = vunpack.c.l.b16 %v5091
  %v5140 = vunpack.c.l.b16 %v5092
  %v5141 = vunpack.c.h.b16 %v5092
  %v5142 = vunpack.c.l.b16 %v5093
  %v5143 = vunpack.c.h.b16 %v5093
  %v5144 = vunpack.c.l.b16 %v5094
  %v5145 = vunpack.c.h.b16 %v5094
  %v5146 = vunpack.c.l.b16 %v5095
  %v5147 = vunpack.c.h.b16 %v5095
  %v5148 = vunpack.c.l.b16 %v5096
  %v5149 = vunpack.c.l.b16 %v5097
  %v5150 = vunpack.c.h.b16 %v5097
  %v5151 = vunpack.c.l.b16 %v5098
  %v5152 = vunpack.c.h.b16 %v5098
  %v5153 = vunpack.c.l.b16 %v5099
  %v5154 = vunpack.c.h.b16 %v5099
  %v5155 = vunpack.c.l.b16 %v5100
  %v5156 = vunpack.c.h.b16 %v5100
  %v5157 = vunpack.c.l.b16 %v5101
  %v5158 = vpack.c.b16 %v5131, %v5122
  %v5159 = vpack.c.b16 %v5132, %v5123
  %v5160 = vpack.c.b16 %v5133, %v5124
  %v5161 = vpack.c.b16 %v5134, %v5125
  %v5162 = vpack.c.b16 %v5135, %v5126
  %v5163 = vpack.c.b16 %v5136, %v5127
  %v5164 = vpack.c.b16 %v5137, %v5128
  %v5165 = vpack.c.b16 %v5138, %v5129
  %v5166 = vpack.c.b16 %v5139, %v5130
  %v5167 = vpack.c.b16 %v5149, %v5140
  %v5168 = vpack.c.b16 %v5150, %v5141
  %v5169 = vpack.c.b16 %v5151, %v5142
  %v5170 = vpack.c.b16 %v5152, %v5143
  %v5171 = vpack.c.b16 %v5153, %v5144
  %v5172 = vpack.c.b16 %v5154, %v5145
  %v5173 = vpack.c.b16 %v5155, %v5146
  %v5174 = vpack.c.b16 %v5156, %v5147
  %v5175 = vpack.c.b16 %v5157, %v5148
  %5194 = vmatprep.subr.bf16.mxu0 0
  %5195 = vmatpush1.bf16.msra.mxu0 %v4700
  %5196 = vmatprep.subr.bf16.mxu0 0
  %5197 = vmatpush1.bf16.msra.mxu0 %v4701
  %5198 = vmatprep.subr.bf16.mxu0 0
  %5199 = vmatpush1.bf16.msra.mxu0 %v4702
  %5200 = vmatprep.subr.bf16.mxu0 0
  %5201 = vmatpush1.bf16.msra.mxu0 %v4703
  %5202 = vmatprep.subr.bf16.mxu0 0
  %5203 = vmatpush1.bf16.msra.mxu0 %v4704
  %5204 = vmatprep.subr.bf16.mxu0 0
  %5205 = vmatpush1.bf16.msra.mxu0 %v4705
  %5206 = vmatprep.subr.bf16.mxu0 0
  %5207 = vmatpush1.bf16.msra.mxu0 %v4706
  %5208 = vmatprep.subr.bf16.mxu0 0
  %5209 = vmatpush1.bf16.msra.mxu0 %v4707
  %5210 = vmatprep.subr.bf16.mxu0 0
  %5211 = vmatpush1.bf16.msra.mxu0 %v4835
  %5212 = vmatprep.subr.bf16.mxu0 0
  %5213 = vmatpush1.bf16.msra.mxu0 %v4837
  %5214 = vmatprep.subr.bf16.mxu0 0
  %5215 = vmatpush1.bf16.msra.mxu0 %v4839
  %5216 = vmatprep.subr.bf16.mxu0 0
  %5217 = vmatpush1.bf16.msra.mxu0 %v4841
  %5218 = vmatprep.subr.bf16.mxu0 0
  %5219 = vmatpush1.bf16.msra.mxu0 %v4843
  %5220 = vmatprep.subr.bf16.mxu0 0
  %5221 = vmatpush1.bf16.msra.mxu0 %v4845
  %5222 = vmatprep.subr.bf16.mxu0 0
  %5223 = vmatpush1.bf16.msra.mxu0 %v4847
  %5224 = vmatprep.subr.bf16.mxu0 0
  %5225 = vmatpush1.bf16.msra.mxu0 %v4849
  %5226 = vmatprep.mubr.bf16.mxu0 %v5159
  %5227 = vmatmul.mubr.bf16.gmra.mrb[0].mxu0 %v5158
  %v5228 = vpop.f32.mrb[0].mxu0
  %v5229 = vadd.f32 0.0, %v5228
  %v5230 = vpop.f32.mrb[0].mxu0
  %v5231 = vpop.f32.mrb[0].mxu0
  %v5232 = vadd.f32 0.0, %v5231
  %v5233 = vpop.f32.mrb[0].mxu0
  %5234 = vmatprep.mubr.bf16.mxu0 %v5168
  %5235 = vmatmul.mubr.bf16.gmra.mrb[0].mxu0 %v5167
  %v5236 = vpop.f32.mrb[0].mxu0
  %v5237 = vadd.f32 0.0, %v5236
  %v5238 = vpop.f32.mrb[0].mxu0
  %v5239 = vpop.f32.mrb[0].mxu0
  %v5240 = vadd.f32 0.0, %v5239
  %v5241 = vpop.f32.mrb[0].mxu0
  %5242 = vdwg.mxu0
  %5243 = vmatprep.subr.bf16.mxu0 0
  %5244 = vmatpush1.bf16.msra.mxu0 %v4867
  %5245 = vmatprep.subr.bf16.mxu0 0
  %5246 = vmatpush1.bf16.msra.mxu0 %v4869
  %5247 = vmatprep.subr.bf16.mxu0 0
  %5248 = vmatpush1.bf16.msra.mxu0 %v4871
  %5249 = vmatprep.subr.bf16.mxu0 0
  %5250 = vmatpush1.bf16.msra.mxu0 %v4873
  %5251 = vmatprep.subr.bf16.mxu0 0
  %5252 = vmatpush1.bf16.msra.mxu0 %v4875
  %5253 = vmatprep.subr.bf16.mxu0 0
  %5254 = vmatpush1.bf16.msra.mxu0 %v4877
  %5255 = vmatprep.subr.bf16.mxu0 0
  %5256 = vmatpush1.bf16.msra.mxu0 %v4879
  %5257 = vmatprep.subr.bf16.mxu0 0
  %5258 = vmatpush1.bf16.msra.mxu0 %v4881
  %5259 = vmatprep.subr.bf16.mxu0 0
  %5260 = vmatpush1.bf16.msra.mxu0 %v4899
  %5261 = vmatprep.subr.bf16.mxu0 0
  %5262 = vmatpush1.bf16.msra.mxu0 %v4901
  %5263 = vmatprep.subr.bf16.mxu0 0
  %5264 = vmatpush1.bf16.msra.mxu0 %v4903
  %5265 = vmatprep.subr.bf16.mxu0 0
  %5266 = vmatpush1.bf16.msra.mxu0 %v4905
  %5267 = vmatprep.subr.bf16.mxu0 0
  %5268 = vmatpush1.bf16.msra.mxu0 %v4907
  %5269 = vmatprep.subr.bf16.mxu0 0
  %5270 = vmatpush1.bf16.msra.mxu0 %v4909
  %5271 = vmatprep.subr.bf16.mxu0 0
  %5272 = vmatpush1.bf16.msra.mxu0 %v4911
  %5273 = vmatprep.subr.bf16.mxu0 0
  %5274 = vmatpush1.bf16.msra.mxu0 %v4913
  %5275 = vmatprep.mubr.bf16.mxu0 %v5161
  %5276 = vmatmul.mubr.bf16.gmra.mrb[0].mxu0 %v5160
  %v5277 = vpop.f32.mrb[0].mxu0
  %v5278 = vadd.f32 %v5229, %v5277
  %v5279 = vpop.f32.mrb[0].mxu0
  %v5280 = vpop.f32.mrb[0].mxu0
  %v5281 = vadd.f32 %v5232, %v5280
  %v5282 = vpop.f32.mrb[0].mxu0
  %5283 = vmatprep.mubr.bf16.mxu0 %v5170
  %5284 = vmatmul.mubr.bf16.gmra.mrb[0].mxu0 %v5169
  %v5285 = vpop.f32.mrb[0].mxu0
  %v5286 = vadd.f32 %v5237, %v5285
  %v5287 = vpop.f32.mrb[0].mxu0
  %v5288 = vpop.f32.mrb[0].mxu0
  %v5289 = vadd.f32 %v5240, %v5288
  %v5290 = vpop.f32.mrb[0].mxu0
  %5291 = vdwg.mxu0
  %5292 = vmatprep.subr.bf16.mxu0 0
  %5293 = vmatpush1.bf16.msra.mxu0 %v4931
  %5294 = vmatprep.subr.bf16.mxu0 0
  %5295 = vmatpush1.bf16.msra.mxu0 %v4933
  %5296 = vmatprep.subr.bf16.mxu0 0
  %5297 = vmatpush1.bf16.msra.mxu0 %v4935
  %5298 = vmatprep.subr.bf16.mxu0 0
  %5299 = vmatpush1.bf16.msra.mxu0 %v4937
  %5300 = vmatprep.subr.bf16.mxu0 0
  %5301 = vmatpush1.bf16.msra.mxu0 %v4939
  %5302 = vmatprep.subr.bf16.mxu0 0
  %5303 = vmatpush1.bf16.msra.mxu0 %v4941
  %5304 = vmatprep.subr.bf16.mxu0 0
  %5305 = vmatpush1.bf16.msra.mxu0 %v4943
  %5306 = vmatprep.subr.bf16.mxu0 0
  %5307 = vmatpush1.bf16.msra.mxu0 %v4945
  %5308 = vmatprep.subr.bf16.mxu0 0
  %5309 = vmatpush1.bf16.msra.mxu0 %v4963
  %5310 = vmatprep.subr.bf16.mxu0 0
  %5311 = vmatpush1.bf16.msra.mxu0 %v4965
  %5312 = vmatprep.subr.bf16.mxu0 0
  %5313 = vmatpush1.bf16.msra.mxu0 %v4967
  %5314 = vmatprep.subr.bf16.mxu0 0
  %5315 = vmatpush1.bf16.msra.mxu0 %v4969
  %5316 = vmatprep.subr.bf16.mxu0 0
  %5317 = vmatpush1.bf16.msra.mxu0 %v4971
  %5318 = vmatprep.subr.bf16.mxu0 0
  %5319 = vmatpush1.bf16.msra.mxu0 %v4973
  %5320 = vmatprep.subr.bf16.mxu0 0
  %5321 = vmatpush1.bf16.msra.mxu0 %v4975
  %5322 = vmatprep.subr.bf16.mxu0 0
  %5323 = vmatpush1.bf16.msra.mxu0 %v4977
  %5324 = vmatprep.mubr.bf16.mxu0 %v5163
  %5325 = vmatmul.mubr.bf16.gmra.mrb[0].mxu0 %v5162
  %v5326 = vpop.f32.mrb[0].mxu0
  %v5327 = vadd.f32 %v5278, %v5326
  %v5328 = vpop.f32.mrb[0].mxu0
  %v5329 = vpop.f32.mrb[0].mxu0
  %v5330 = vadd.f32 %v5281, %v5329
  %v5331 = vpop.f32.mrb[0].mxu0
  %5332 = vmatprep.mubr.bf16.mxu0 %v5172
  %5333 = vmatmul.mubr.bf16.gmra.mrb[0].mxu0 %v5171
  %v5334 = vpop.f32.mrb[0].mxu0
  %v5335 = vadd.f32 %v5286, %v5334
  %v5336 = vpop.f32.mrb[0].mxu0
  %v5337 = vpop.f32.mrb[0].mxu0
  %v5338 = vadd.f32 %v5289, %v5337
  %v5339 = vpop.f32.mrb[0].mxu0
  %5340 = vdwg.mxu0
  %5341 = vmatprep.subr.bf16.mxu0 0
  %5342 = vmatpush1.bf16.msra.mxu0 %v4995
  %5343 = vmatprep.subr.bf16.mxu0 0
  %5344 = vmatpush1.bf16.msra.mxu0 %v4997
  %5345 = vmatprep.subr.bf16.mxu0 0
  %5346 = vmatpush1.bf16.msra.mxu0 %v4999
  %5347 = vmatprep.subr.bf16.mxu0 0
  %5348 = vmatpush1.bf16.msra.mxu0 %v5001
  %5349 = vmatprep.subr.bf16.mxu0 0
  %5350 = vmatpush1.bf16.msra.mxu0 %v5003
  %5351 = vmatprep.subr.bf16.mxu0 0
  %5352 = vmatpush1.bf16.msra.mxu0 %v5005
  %5353 = vmatprep.subr.bf16.mxu0 0
  %5354 = vmatpush1.bf16.msra.mxu0 %v5007
  %5355 = vmatprep.subr.bf16.mxu0 0
  %5356 = vmatpush1.bf16.msra.mxu0 %v5009
  %5357 = vmatprep.subr.bf16.mxu0 0
  %5358 = vmatpush1.bf16.msra.mxu0 %v5027
  %5359 = vmatprep.subr.bf16.mxu0 0
  %5360 = vmatpush1.bf16.msra.mxu0 %v5029
  %5361 = vmatprep.subr.bf16.mxu0 0
  %5362 = vmatpush1.bf16.msra.mxu0 %v5031
  %5363 = vmatprep.subr.bf16.mxu0 0
  %5364 = vmatpush1.bf16.msra.mxu0 %v5033
  %5365 = vmatprep.subr.bf16.mxu0 0
  %5366 = vmatpush1.bf16.msra.mxu0 %v5035
  %5367 = vmatprep.subr.bf16.mxu0 0
  %5368 = vmatpush1.bf16.msra.mxu0 %v5037
  %5369 = vmatprep.subr.bf16.mxu0 0
  %5370 = vmatpush1.bf16.msra.mxu0 %v5039
  %5371 = vmatprep.subr.bf16.mxu0 0
  %5372 = vmatpush1.bf16.msra.mxu0 %v5041
  %5373 = vmatprep.mubr.bf16.mxu0 %v5165
  %5374 = vmatmul.mubr.bf16.gmra.mrb[0].mxu0 %v5164
  %v5375 = vpop.f32.mrb[0].mxu0
  %v5376 = vadd.f32 %v5327, %v5375
  %v5377 = vpop.f32.mrb[0].mxu0
  %v5378 = vpop.f32.mrb[0].mxu0
  %v5379 = vadd.f32 %v5330, %v5378
  %v5380 = vpop.f32.mrb[0].mxu0
  %5381 = vmatprep.mubr.bf16.mxu0 %v5174
  %5382 = vmatmul.mubr.bf16.gmra.mrb[0].mxu0 %v5173
  %v5383 = vpop.f32.mrb[0].mxu0
  %v5384 = vadd.f32 %v5335, %v5383
  %v5385 = vpop.f32.mrb[0].mxu0
  %v5386 = vpop.f32.mrb[0].mxu0
  %v5387 = vadd.f32 %v5338, %v5386
  %v5388 = vpop.f32.mrb[0].mxu0
  %5389 = vdwg.mxu0
  %5390 = vmatprep.subr.bf16.mxu0 0
  %5391 = vmatpush1.bf16.msra.mxu0 %v5059
  %5392 = vmatprep.subr.bf16.mxu0 0
  %5393 = vmatpush1.bf16.msra.mxu0 %v5061
  %5394 = vmatprep.subr.bf16.mxu0 0
  %5395 = vmatpush1.bf16.msra.mxu0 %v5063
  %5396 = vmatprep.subr.bf16.mxu0 0
  %5397 = vmatpush1.bf16.msra.mxu0 %v5065
  %5398 = vmatprep.subr.bf16.mxu0 0
  %5399 = vmatpush1.bf16.msra.mxu0 %v5067
  %5400 = vmatprep.subr.bf16.mxu0 0
  %5401 = vmatpush1.bf16.msra.mxu0 %v5069
  %5402 = vmatprep.subr.bf16.mxu0 0
  %5403 = vmatpush1.bf16.msra.mxu0 %v5071
  %5404 = vmatprep.subr.bf16.mxu0 0
  %5405 = vmatpush1.bf16.msra.mxu0 %v5073
  %5406 = vmatprep.subr.bf16.mxu0 0
  %5407 = vmatpush1.bf16.msra.mxu0 0
  %5408 = vmatprep.subr.bf16.mxu0 0
  %5409 = vmatpush1.bf16.msra.mxu0 0
  %5410 = vmatprep.subr.bf16.mxu0 0
  %5411 = vmatpush1.bf16.msra.mxu0 0
  %5412 = vmatprep.subr.bf16.mxu0 0
  %5413 = vmatpush1.bf16.msra.mxu0 0
  %5414 = vmatprep.subr.bf16.mxu0 0
  %5415 = vmatpush1.bf16.msra.mxu0 0
  %5416 = vmatprep.subr.bf16.mxu0 0
  %5417 = vmatpush1.bf16.msra.mxu0 0
  %5418 = vmatprep.subr.bf16.mxu0 0
  %5419 = vmatpush1.bf16.msra.mxu0 0
  %5420 = vmatprep.subr.bf16.mxu0 0
  %5421 = vmatpush1.bf16.msra.mxu0 0
  %5422 = vmatprep.mubr.bf16.mxu0 0
  %5423 = vmatmul.mubr.bf16.gmra.mrb[0].mxu0 %v5166
  %v5424 = vpop.f32.mrb[0].mxu0
  %v5425 = vadd.f32 %v5376, %v5424
  %v5426 = vpop.f32.mrb[0].mxu0
  %v5427 = vpop.f32.mrb[0].mxu0
  %v5428 = vadd.f32 %v5379, %v5427
  %v5429 = vpop.f32.mrb[0].mxu0
  %5430 = vmatprep.mubr.bf16.mxu0 0
  %5431 = vmatmul.mubr.bf16.gmra.mrb[0].mxu0 %v5175
  %v5432 = vpop.f32.mrb[0].mxu0
  %v5433 = vadd.f32 %v5384, %v5432
  %v5434 = vpop.f32.mrb[0].mxu0
  %v5435 = vpop.f32.mrb[0].mxu0
  %v5436 = vadd.f32 %v5387, %v5435
  %v5437 = vpop.f32.mrb[0].mxu0
  %5438 = vdwg.mxu0
  %5439 = vst.msk [vmem:[%s8] sm:$0xff] %vm150, %v5425
  %5440 = vst.msk [vmem:[%s8 + $0x8] sm:$0xff] %vm150, %v5428
  %5441 = vst.msk [vmem:[%s8 + $0x10] sm:$0xff] %vm150, %v5433
  %5442 = vst.msk [vmem:[%s8 + $0x18] sm:$0xff] %vm150, %v5436
  // Predicated region
  $region34: #{fused_bn_relu_conv_bn_relu_conv.1} parent=0 // pred_check
    _
  $region35: #{fused_bn_relu_conv_bn_relu_conv.1} parent=0 // pred_check_branch
    %5444 = sbr.rel (0) target = $region37
  $region36: #{fused_bn_relu_conv_bn_relu_conv.1} parent=0 // pred_region
    _
  $region37: #{fused_bn_relu_conv_bn_relu_conv.1} parent=0 // pred_fallthru
    _
  // Predicated region
  $region38: #{fused_bn_relu_conv_bn_relu_conv.1} parent=0 // pred_check
    _
  $region39: #{fused_bn_relu_conv_bn_relu_conv.1} parent=0 // pred_check_branch
    %5446 = sbr.rel (0) target = $region41
  $region40: #{fused_bn_relu_conv_bn_relu_conv.1} parent=0 // pred_region
    _
  $region41: #{fused_bn_relu_conv_bn_relu_conv.1} parent=0 // pred_fallthru
    _

</llo_original>
